<compile_context>
chip_gen: v7x
topology: tpu7x:2x2x1
jax: 0.10.0
libtpu: 0.0.40
codegen_flags: <defaults>
</compile_context>

<pallas_src>
import functools
import math

import jax
import jax.numpy as jnp
from jax.experimental import pallas as pl
from jax.experimental.pallas import tpu as pltpu

# ---------------- model config (small, TPU-tile friendly) -------------------
VOCAB = 100
MAX_POS = 128
HIDDEN = 128          # stands in for 768 of bert-base
N_HEADS = 4
HEAD_DIM = HIDDEN // N_HEADS
INTER = 512           # FFN intermediate size
INTER_CHUNK = 256     # FFN chunk width (bounds live f32 working set)
N_LAYERS = 2
LN_EPS = 1e-12


# ---------------------------- helpers ----------------------------------------
def _ln(x, g, b):
    """f32 LayerNorm over the last axis; g/b are (1, H)."""
    mu = jnp.mean(x, axis=-1, keepdims=True)
    var = jnp.mean((x - mu) ** 2, axis=-1, keepdims=True)
    return (x - mu) * jax.lax.rsqrt(var + LN_EPS) * g + b


# ---------------------------- fused Pallas kernel ----------------------------
def _bert_kernel(h_emb_ref, mask_ref, embg_ref, embb_ref,
                 wqkv_ref, bqkv_ref, wo_ref, bo_ref, ln1g_ref, ln1b_ref,
                 w1_ref, b1_ref, w2_ref, b2_ref, ln2g_ref, ln2b_ref,
                 wp_ref, bp_ref, wc_ref, bc_ref,
                 out_ref, h_scratch,
                 *, n_heads, head_dim, n_layers, inter, inter_chunk):
    """One (batch element b, encoder layer l) grid step.

    h_scratch (S, H) f32 carries the activation across the inner L axis.
    """
    l = pl.program_id(1)
    H = n_heads * head_dim

    # ---- l == 0: embedding LayerNorm seeds the layer-resident activation ----
    @pl.when(l == 0)
    def _():
        h_scratch[...] = _ln(h_emb_ref[0], embg_ref[...], embb_ref[...])

    h = h_scratch[...]                 # (S, H) f32, resident across layers
    mask = mask_ref[0]                 # (1, S) additive key mask

    # ---- fused QKV projection (1/sqrt(d) already folded into W_q, b_q) ------
    qkv = jnp.dot(h.astype(jnp.bfloat16), wqkv_ref[0],
                  preferred_element_type=jnp.float32) + bqkv_ref[0]

    # ---- per-head attention; contexts concatenated for ONE K=H O-proj -------
    ctxs = []
    for hd in range(n_heads):
        lo, hi = hd * head_dim, (hd + 1) * head_dim
        q = qkv[:, lo:hi].astype(jnp.bfloat16)
        k = qkv[:, H + lo:H + hi].astype(jnp.bfloat16)
        v = qkv[:, 2 * H + lo:2 * H + hi].astype(jnp.bfloat16)
        s = jax.lax.dot_general(q, k, (((1,), (1,)), ((), ())),
                                preferred_element_type=jnp.float32) + mask
        s = s - jnp.max(s, axis=-1, keepdims=True)
        p = jnp.exp(s)
        p = p * pl.reciprocal(jnp.sum(p, axis=-1, keepdims=True), approx=True)
        ctxs.append(jnp.dot(p.astype(jnp.bfloat16), v,
                            preferred_element_type=jnp.float32))
    ctx = jnp.concatenate(ctxs, axis=-1).astype(jnp.bfloat16)       # (S, H)
    attn_out = jnp.dot(ctx, wo_ref[0],
                       preferred_element_type=jnp.float32) + bo_ref[0]

    # ---- residual + LN1 (fused) ---------------------------------------------
    h1 = _ln(h + attn_out, ln1g_ref[0], ln1b_ref[0])
    h1_bf = h1.astype(jnp.bfloat16)

    # ---- FFN chunked over INTER (bf16 matmuls, f32 epilogue) -----------------
    # TODO(synk): HF BERT uses exact erf GELU; tanh approximation used here.
    ffn = None
    for c in range(inter // inter_chunk):
        co = c * inter_chunk
        ic = (jnp.dot(h1_bf, w1_ref[0, :, co:co + inter_chunk],
                      preferred_element_type=jnp.float32)
              + b1_ref[0, :, co:co + inter_chunk])
        ic = jax.nn.gelu(ic, approximate=True).astype(jnp.bfloat16)
        part = jnp.dot(ic, w2_ref[0, co:co + inter_chunk, :],
                       preferred_element_type=jnp.float32)
        ffn = part if ffn is None else ffn + part
    ffn = ffn + b2_ref[0]

    # ---- residual + LN2 (fused) -> stays resident in VMEM scratch ------------
    h2 = _ln(h1 + ffn, ln2g_ref[0], ln2b_ref[0])
    h_scratch[...] = h2

    # ---- last layer: pooler tanh + eval-dropout(identity) + classifier ------
    @pl.when(l == n_layers - 1)
    def _():
        cls = h2[0:1, :]                                       # [CLS] row (1, H)
        pooled = jnp.tanh(
            jnp.dot(cls.astype(jnp.bfloat16), wp_ref[...],
                    preferred_element_type=jnp.float32) + bp_ref[...])
        # Dropout(p=0.3) in inference/eval mode is the identity.
        # TODO(synk): training-mode dropout would need pltpu.prng_random_bits.
        logit = jnp.sum(pooled * wc_ref[...], axis=-1, keepdims=True) + bc_ref[...]
        out_ref[0] = jax.nn.sigmoid(logit)


def bert_forward_fused(params, h_emb, add_mask):
    B, S, H = h_emb.shape

    def per_batch(shape):
        return pl.BlockSpec(shape, lambda b, l: (b, 0, 0))

    def per_layer(shape):
        return pl.BlockSpec(shape, lambda b, l: (l, 0, 0))

    def shared(shape):
        return pl.BlockSpec(shape, lambda b, l: (0, 0))

    out = pl.pallas_call(
        functools.partial(_bert_kernel, n_heads=N_HEADS, head_dim=HEAD_DIM,
                          n_layers=N_LAYERS, inter=INTER,
                          inter_chunk=INTER_CHUNK),
        out_shape=jax.ShapeDtypeStruct((B, 1, 1), jnp.float32),
        grid=(B, N_LAYERS),
        in_specs=[
            per_batch((1, S, H)),                          # embeddings
            per_batch((1, 1, S)),                          # additive mask
            shared((1, H)), shared((1, H)),                # emb LN g, b
            per_layer((1, H, 3 * H)), per_layer((1, 1, 3 * H)),   # Wqkv, bqkv
            per_layer((1, H, H)), per_layer((1, 1, H)),           # Wo, bo
            per_layer((1, 1, H)), per_layer((1, 1, H)),           # ln1 g, b
            per_layer((1, H, INTER)), per_layer((1, 1, INTER)),   # W1, b1
            per_layer((1, INTER, H)), per_layer((1, 1, H)),       # W2, b2
            per_layer((1, 1, H)), per_layer((1, 1, H)),           # ln2 g, b
            shared((H, H)), shared((1, H)),                # pooler Wp, bp
            shared((1, H)), shared((1, 1)),                # classifier Wc row, bc
        ],
        out_specs=pl.BlockSpec((1, 1, 1), lambda b, l: (b, 0, 0)),
        scratch_shapes=[pltpu.VMEM((S, H), jnp.float32)],
        compiler_params=pltpu.CompilerParams(
            dimension_semantics=("parallel", "arbitrary")),
    )(h_emb, add_mask,
      params["emb_ln_g"], params["emb_ln_b"],
      params["Wqkv"], params["bqkv"], params["Wo"], params["bo"],
      params["ln1_g"], params["ln1_b"],
      params["W1"], params["b1"], params["W2"], params["b2"],
      params["ln2_g"], params["ln2_b"],
      params["Wp"], params["bp"], params["Wc_row"], params["bc"])
    return out.reshape(B, 1)


# --------------------------- parameter init ----------------------------------
def init_params(key):
    keys = iter(jax.random.split(key, 8 + 4 * N_LAYERS))

    def w(shape):
        return jax.random.normal(next(keys), shape, jnp.float32) * 0.02

    zeros = lambda s: jnp.zeros(s, jnp.float32)
    ones = lambda s: jnp.ones(s, jnp.float32)
    scale = 1.0 / math.sqrt(HEAD_DIM)

    wqkv, bqkv, wo, bo = [], [], [], []
    ln1g, ln1b, w1, b1, w2, b2, ln2g, ln2b = [], [], [], [], [], [], [], []
    for _ in range(N_LAYERS):
        wq = w((HIDDEN, 3 * HIDDEN))
        bq = zeros((1, 3 * HIDDEN))
        # Fold the 1/sqrt(head_dim) attention scale into the Q projection.
        wq = jnp.concatenate([wq[:, :HIDDEN] * scale, wq[:, HIDDEN:]], axis=1)
        bq = jnp.concatenate([bq[:, :HIDDEN] * scale, bq[:, HIDDEN:]], axis=1)
        wqkv.append(wq.astype(jnp.bfloat16)); bqkv.append(bq)
        wo.append(w((HIDDEN, HIDDEN)).astype(jnp.bfloat16)); bo.append(zeros((1, HIDDEN)))
        ln1g.append(ones((1, HIDDEN))); ln1b.append(zeros((1, HIDDEN)))
        w1.append(w((HIDDEN, INTER)).astype(jnp.bfloat16)); b1.append(zeros((1, INTER)))
        w2.append(w((INTER, HIDDEN)).astype(jnp.bfloat16)); b2.append(zeros((1, HIDDEN)))
        ln2g.append(ones((1, HIDDEN))); ln2b.append(zeros((1, HIDDEN)))

    stack = lambda xs: jnp.stack(xs, axis=0)
    return {
        "word_emb": w((VOCAB, HIDDEN)),
        "pos_emb": w((MAX_POS, HIDDEN)),
        "type_emb": w((2, HIDDEN)),
        "emb_ln_g": ones((1, HIDDEN)), "emb_ln_b": zeros((1, HIDDEN)),
        "Wqkv": stack(wqkv), "bqkv": stack(bqkv),
        "Wo": stack(wo), "bo": stack(bo),
        "ln1_g": stack(ln1g), "ln1_b": stack(ln1b),
        "W1": stack(w1), "b1": stack(b1),
        "W2": stack(w2), "b2": stack(b2),
        "ln2_g": stack(ln2g), "ln2_b": stack(ln2b),
        "Wp": w((HIDDEN, HIDDEN)).astype(jnp.bfloat16), "bp": zeros((1, HIDDEN)),
        "Wc_row": w((1, HIDDEN)), "bc": zeros((1, 1)),   # Linear(H,1) as a row
    }


# ----------------------------- forward pass ----------------------------------
def bert_classifier_forward(params, input_ids, attention_mask):
    B, S = input_ids.shape

    # Embeddings (gathers are glue, done in plain JAX); token_type_ids = 0.
    h_emb = (params["word_emb"][input_ids]
             + params["pos_emb"][None, :S, :]
             + params["type_emb"][0][None, None, :])

    # Additive attention mask: 0 where attend, -1e9 where masked.
    add_mask = (1.0 - attention_mask.astype(jnp.float32)
                ).reshape(B, 1, S) * -1e9

    # Entire encoder + pooler + classifier in ONE fused pallas_call.
    return bert_forward_fused(params, h_emb, add_mask)       # (B, 1) probs


# --------------------------------- main ---------------------------------------
if __name__ == "__main__":
    key = jax.random.PRNGKey(0)
    pkey, ikey = jax.random.split(key)
    params = init_params(pkey)

    B, S = 2, 128
    input_ids = jax.random.randint(ikey, (B, S), 0, VOCAB, dtype=jnp.int32)
    pos = jnp.arange(S)
    attention_mask = jnp.stack(
        [jnp.ones((S,), jnp.int32), (pos < 96).astype(jnp.int32)], axis=0)

    fwd = jax.jit(bert_classifier_forward)
    out = jax.block_until_ready(fwd(params, input_ids, attention_mask))
    assert out.shape == (B, 1) and out.dtype == jnp.float32
    assert bool(jnp.all((out >= 0.0) & (out <= 1.0)))
    print("KERNEL_OK")
</pallas_src>

<mosaic_0001>
module attributes {stable_mosaic.version = 11 : i64} {
  func.func @_bert_kernel(%arg0: i32, %arg1: i32, %arg2: memref<1x128x128xf32, #tpu.memory_space<vmem>>, %arg3: memref<1x1x128xf32, #tpu.memory_space<vmem>>, %arg4: memref<1x128xf32, #tpu.memory_space<vmem>>, %arg5: memref<1x128xf32, #tpu.memory_space<vmem>>, %arg6: memref<1x128x384xbf16, #tpu.memory_space<vmem>>, %arg7: memref<1x1x384xf32, #tpu.memory_space<vmem>>, %arg8: memref<1x128x128xbf16, #tpu.memory_space<vmem>>, %arg9: memref<1x1x128xf32, #tpu.memory_space<vmem>>, %arg10: memref<1x1x128xf32, #tpu.memory_space<vmem>>, %arg11: memref<1x1x128xf32, #tpu.memory_space<vmem>>, %arg12: memref<1x128x512xbf16, #tpu.memory_space<vmem>>, %arg13: memref<1x1x512xf32, #tpu.memory_space<vmem>>, %arg14: memref<1x512x128xbf16, #tpu.memory_space<vmem>>, %arg15: memref<1x1x128xf32, #tpu.memory_space<vmem>>, %arg16: memref<1x1x128xf32, #tpu.memory_space<vmem>>, %arg17: memref<1x1x128xf32, #tpu.memory_space<vmem>>, %arg18: memref<128x128xbf16, #tpu.memory_space<vmem>>, %arg19: memref<1x128xf32, #tpu.memory_space<vmem>>, %arg20: memref<1x128xf32, #tpu.memory_space<vmem>>, %arg21: memref<1x1xf32, #tpu.memory_space<vmem>>, %arg22: memref<1x1x1xf32, #tpu.memory_space<vmem>>, %arg23: memref<128x128xf32, #tpu.memory_space<vmem>>) attributes {dimension_semantics = [#tpu.dimension_semantics<parallel>, #tpu.dimension_semantics<arbitrary>], iteration_bounds = array<i64: 2, 2>, scalar_prefetch = 0 : i64, scratch_operands = 1 : i64, tpu.core_type = #tpu.core_type<tc>, window_params = [{transform_indices = @transform_0, window_bounds = array<i64: 1, 128, 128>}, {transform_indices = @transform_1, window_bounds = array<i64: 1, 1, 128>}, {pipeline_mode = #tpu.pipeline_mode<synchronous>, transform_indices = @transform_2, window_bounds = array<i64: 1, 128>}, {pipeline_mode = #tpu.pipeline_mode<synchronous>, transform_indices = @transform_3, window_bounds = array<i64: 1, 128>}, {transform_indices = @transform_4, window_bounds = array<i64: 1, 128, 384>}, {transform_indices = @transform_5, window_bounds = array<i64: 1, 1, 384>}, {transform_indices = @transform_6, window_bounds = array<i64: 1, 128, 128>}, {transform_indices = @transform_7, window_bounds = array<i64: 1, 1, 128>}, {transform_indices = @transform_8, window_bounds = array<i64: 1, 1, 128>}, {transform_indices = @transform_9, window_bounds = array<i64: 1, 1, 128>}, {transform_indices = @transform_10, window_bounds = array<i64: 1, 128, 512>}, {transform_indices = @transform_11, window_bounds = array<i64: 1, 1, 512>}, {transform_indices = @transform_12, window_bounds = array<i64: 1, 512, 128>}, {transform_indices = @transform_13, window_bounds = array<i64: 1, 1, 128>}, {transform_indices = @transform_14, window_bounds = array<i64: 1, 1, 128>}, {transform_indices = @transform_15, window_bounds = array<i64: 1, 1, 128>}, {pipeline_mode = #tpu.pipeline_mode<synchronous>, transform_indices = @transform_16, window_bounds = array<i64: 128, 128>}, {pipeline_mode = #tpu.pipeline_mode<synchronous>, transform_indices = @transform_17, window_bounds = array<i64: 1, 128>}, {pipeline_mode = #tpu.pipeline_mode<synchronous>, transform_indices = @transform_18, window_bounds = array<i64: 1, 128>}, {pipeline_mode = #tpu.pipeline_mode<synchronous>, transform_indices = @transform_19, window_bounds = array<i64: 1, 1>}, {transform_indices = @transform_20, window_bounds = array<i64: 1, 1, 1>}]} {
    %c0_i32 = arith.constant 0 : i32
    %0 = arith.cmpi eq, %arg1, %c0_i32 : i32
    %1 = arith.extui %0 : i1 to i32
    %c0_i32_0 = arith.constant 0 : i32
    %2 = arith.cmpi ne, %1, %c0_i32_0 : i32
    scf.if %2 {
      %c0_91 = arith.constant 0 : index
      %c0_92 = arith.constant 0 : index
      %c0_93 = arith.constant 0 : index
      %219 = vector.load %arg2[%c0_91, %c0_92, %c0_93] : memref<1x128x128xf32, #tpu.memory_space<vmem>>, vector<1x128x128xf32>
      %220 = vector.shape_cast %219 : vector<1x128x128xf32> to vector<128x128xf32>
      %c0_94 = arith.constant 0 : index
      %c0_95 = arith.constant 0 : index
      %221 = vector.load %arg4[%c0_94, %c0_95] : memref<1x128xf32, #tpu.memory_space<vmem>>, vector<1x128xf32>
      %c0_96 = arith.constant 0 : index
      %c0_97 = arith.constant 0 : index
      %222 = vector.load %arg5[%c0_96, %c0_97] : memref<1x128xf32, #tpu.memory_space<vmem>>, vector<1x128xf32>
      %cst_98 = arith.constant dense<0.000000e+00> : vector<128xf32>
      %223 = vector.multi_reduction <add>, %220, %cst_98 [1] : vector<128x128xf32> to vector<128xf32>
      %224 = vector.shape_cast %223 : vector<128xf32> to vector<128x1xf32>
      %cst_99 = arith.constant 1.280000e+02 : f32
      %225 = vector.broadcast %cst_99 : f32 to vector<128x1xf32>
      %226 = arith.divf %224, %225 : vector<128x1xf32>
      %227 = vector.broadcast %226 : vector<128x1xf32> to vector<128x128xf32>
      %228 = arith.subf %220, %227 : vector<128x128xf32>
      %229 = arith.mulf %228, %228 : vector<128x128xf32>
      %cst_100 = arith.constant dense<0.000000e+00> : vector<128xf32>
      %230 = vector.multi_reduction <add>, %229, %cst_100 [1] : vector<128x128xf32> to vector<128xf32>
      %231 = vector.shape_cast %230 : vector<128xf32> to vector<128x1xf32>
      %cst_101 = arith.constant 1.280000e+02 : f32
      %232 = vector.broadcast %cst_101 : f32 to vector<128x1xf32>
      %233 = arith.divf %231, %232 : vector<128x1xf32>
      %234 = vector.broadcast %226 : vector<128x1xf32> to vector<128x128xf32>
      %235 = arith.subf %220, %234 : vector<128x128xf32>
      %cst_102 = arith.constant 9.99999996E-13 : f32
      %236 = vector.broadcast %cst_102 : f32 to vector<128x1xf32>
      %237 = arith.addf %233, %236 : vector<128x1xf32>
      %238 = math.rsqrt %237 : vector<128x1xf32>
      %239 = vector.broadcast %238 : vector<128x1xf32> to vector<128x128xf32>
      %240 = arith.mulf %235, %239 : vector<128x128xf32>
      %241 = vector.broadcast %221 : vector<1x128xf32> to vector<128x128xf32>
      %242 = arith.mulf %240, %241 : vector<128x128xf32>
      %243 = vector.broadcast %222 : vector<1x128xf32> to vector<128x128xf32>
      %244 = arith.addf %242, %243 : vector<128x128xf32>
      %c0_103 = arith.constant 0 : index
      %c0_104 = arith.constant 0 : index
      %245 = vector.load %arg23[%c0_103, %c0_104] : memref<128x128xf32, #tpu.memory_space<vmem>>, vector<128x128xf32>
      tpu.vector_store %arg23[%c0_103, %c0_104], %244 {strides = array<i32>} : memref<128x128xf32, #tpu.memory_space<vmem>>, vector<128x128xf32>,
    } else {
    }
    %c0 = arith.constant 0 : index
    %c0_1 = arith.constant 0 : index
    %3 = vector.load %arg23[%c0, %c0_1] : memref<128x128xf32, #tpu.memory_space<vmem>>, vector<128x128xf32>
    %c0_2 = arith.constant 0 : index
    %c0_3 = arith.constant 0 : index
    %c0_4 = arith.constant 0 : index
    %4 = vector.load %arg3[%c0_2, %c0_3, %c0_4] : memref<1x1x128xf32, #tpu.memory_space<vmem>>, vector<1x1x128xf32>
    %5 = vector.shape_cast %4 : vector<1x1x128xf32> to vector<1x128xf32>
    %6 = arith.truncf %3 : vector<128x128xf32> to vector<128x128xbf16>
    %c0_5 = arith.constant 0 : index
    %c0_6 = arith.constant 0 : index
    %c0_7 = arith.constant 0 : index
    %7 = vector.load %arg6[%c0_5, %c0_6, %c0_7] : memref<1x128x384xbf16, #tpu.memory_space<vmem>>, vector<1x128x384xbf16>
    %8 = vector.shape_cast %7 : vector<1x128x384xbf16> to vector<128x384xbf16>
    %cst = arith.constant dense<0.000000e+00> : vector<128x384xf32>
    %9 = tpu.matmul %6, %8, %cst {dimension_numbers = #tpu.dot_dimension_numbers<[1], [0], [0], [1], [0, 0, 1, 1], [], []>} : vector<128x128xbf16>, vector<128x384xbf16>, vector<128x384xf32> -> vector<128x384xf32>
    %c0_8 = arith.constant 0 : index
    %c0_9 = arith.constant 0 : index
    %c0_10 = arith.constant 0 : index
    %10 = vector.load %arg7[%c0_8, %c0_9, %c0_10] : memref<1x1x384xf32, #tpu.memory_space<vmem>>, vector<1x1x384xf32>
    %11 = vector.shape_cast %10 : vector<1x1x384xf32> to vector<1x384xf32>
    %12 = vector.broadcast %11 : vector<1x384xf32> to vector<128x384xf32>
    %13 = arith.addf %9, %12 : vector<128x384xf32>
    %14 = vector.extract_strided_slice %13 {offsets = [0, 0], sizes = [128, 32], strides = [1, 1]} : vector<128x384xf32> to vector<128x32xf32>
    %15 = arith.truncf %14 : vector<128x32xf32> to vector<128x32xbf16>
    %16 = vector.extract_strided_slice %13 {offsets = [0, 128], sizes = [128, 32], strides = [1, 1]} : vector<128x384xf32> to vector<128x32xf32>
    %17 = arith.truncf %16 : vector<128x32xf32> to vector<128x32xbf16>
    %18 = vector.extract_strided_slice %13 {offsets = [0, 256], sizes = [128, 32], strides = [1, 1]} : vector<128x384xf32> to vector<128x32xf32>
    %19 = arith.truncf %18 : vector<128x32xf32> to vector<128x32xbf16>
    %cst_11 = arith.constant dense<0.000000e+00> : vector<128x128xf32>
    %20 = tpu.matmul %15, %17, %cst_11 {dimension_numbers = #tpu.dot_dimension_numbers<[1], [1], [0], [0], [0, 0, 1, 0], [], []>} : vector<128x32xbf16>, vector<128x32xbf16>, vector<128x128xf32> -> vector<128x128xf32>
    %21 = vector.broadcast %5 : vector<1x128xf32> to vector<128x128xf32>
    %22 = arith.addf %20, %21 : vector<128x128xf32>
    %cst_12 = arith.constant dense<0xFF800000> : vector<128xf32>
    %23 = vector.multi_reduction <maximumf>, %22, %cst_12 [1] : vector<128x128xf32> to vector<128xf32>
    %24 = vector.shape_cast %23 : vector<128xf32> to vector<128x1xf32>
    %25 = vector.broadcast %24 : vector<128x1xf32> to vector<128x128xf32>
    %26 = arith.subf %22, %25 : vector<128x128xf32>
    %27 = math.exp %26 : vector<128x128xf32>
    %cst_13 = arith.constant dense<0.000000e+00> : vector<128xf32>
    %28 = vector.multi_reduction <add>, %27, %cst_13 [1] : vector<128x128xf32> to vector<128xf32>
    %29 = vector.shape_cast %28 : vector<128xf32> to vector<128x1xf32>
    %30 = tpu.reciprocal %29 {approx = true} : vector<128x1xf32> -> vector<128x1xf32>
    %31 = vector.broadcast %30 : vector<128x1xf32> to vector<128x128xf32>
    %32 = arith.mulf %27, %31 : vector<128x128xf32>
    %33 = arith.truncf %32 : vector<128x128xf32> to vector<128x128xbf16>
    %cst_14 = arith.constant dense<0.000000e+00> : vector<128x32xf32>
    %34 = tpu.matmul %33, %19, %cst_14 {dimension_numbers = #tpu.dot_dimension_numbers<[1], [0], [0], [1], [0, 0, 1, 1], [], []>} : vector<128x128xbf16>, vector<128x32xbf16>, vector<128x32xf32> -> vector<128x32xf32>
    %35 = vector.extract_strided_slice %13 {offsets = [0, 32], sizes = [128, 32], strides = [1, 1]} : vector<128x384xf32> to vector<128x32xf32>
    %36 = arith.truncf %35 : vector<128x32xf32> to vector<128x32xbf16>
    %37 = vector.extract_strided_slice %13 {offsets = [0, 160], sizes = [128, 32], strides = [1, 1]} : vector<128x384xf32> to vector<128x32xf32>
    %38 = arith.truncf %37 : vector<128x32xf32> to vector<128x32xbf16>
    %39 = vector.extract_strided_slice %13 {offsets = [0, 288], sizes = [128, 32], strides = [1, 1]} : vector<128x384xf32> to vector<128x32xf32>
    %40 = arith.truncf %39 : vector<128x32xf32> to vector<128x32xbf16>
    %cst_15 = arith.constant dense<0.000000e+00> : vector<128x128xf32>
    %41 = tpu.matmul %36, %38, %cst_15 {dimension_numbers = #tpu.dot_dimension_numbers<[1], [1], [0], [0], [0, 0, 1, 0], [], []>} : vector<128x32xbf16>, vector<128x32xbf16>, vector<128x128xf32> -> vector<128x128xf32>
    %42 = vector.broadcast %5 : vector<1x128xf32> to vector<128x128xf32>
    %43 = arith.addf %41, %42 : vector<128x128xf32>
    %cst_16 = arith.constant dense<0xFF800000> : vector<128xf32>
    %44 = vector.multi_reduction <maximumf>, %43, %cst_16 [1] : vector<128x128xf32> to vector<128xf32>
    %45 = vector.shape_cast %44 : vector<128xf32> to vector<128x1xf32>
    %46 = vector.broadcast %45 : vector<128x1xf32> to vector<128x128xf32>
    %47 = arith.subf %43, %46 : vector<128x128xf32>
    %48 = math.exp %47 : vector<128x128xf32>
    %cst_17 = arith.constant dense<0.000000e+00> : vector<128xf32>
    %49 = vector.multi_reduction <add>, %48, %cst_17 [1] : vector<128x128xf32> to vector<128xf32>
    %50 = vector.shape_cast %49 : vector<128xf32> to vector<128x1xf32>
    %51 = tpu.reciprocal %50 {approx = true} : vector<128x1xf32> -> vector<128x1xf32>
    %52 = vector.broadcast %51 : vector<128x1xf32> to vector<128x128xf32>
    %53 = arith.mulf %48, %52 : vector<128x128xf32>
    %54 = arith.truncf %53 : vector<128x128xf32> to vector<128x128xbf16>
    %cst_18 = arith.constant dense<0.000000e+00> : vector<128x32xf32>
    %55 = tpu.matmul %54, %40, %cst_18 {dimension_numbers = #tpu.dot_dimension_numbers<[1], [0], [0], [1], [0, 0, 1, 1], [], []>} : vector<128x128xbf16>, vector<128x32xbf16>, vector<128x32xf32> -> vector<128x32xf32>
    %56 = vector.extract_strided_slice %13 {offsets = [0, 64], sizes = [128, 32], strides = [1, 1]} : vector<128x384xf32> to vector<128x32xf32>
    %57 = arith.truncf %56 : vector<128x32xf32> to vector<128x32xbf16>
    %58 = vector.extract_strided_slice %13 {offsets = [0, 192], sizes = [128, 32], strides = [1, 1]} : vector<128x384xf32> to vector<128x32xf32>
    %59 = arith.truncf %58 : vector<128x32xf32> to vector<128x32xbf16>
    %60 = vector.extract_strided_slice %13 {offsets = [0, 320], sizes = [128, 32], strides = [1, 1]} : vector<128x384xf32> to vector<128x32xf32>
    %61 = arith.truncf %60 : vector<128x32xf32> to vector<128x32xbf16>
    %cst_19 = arith.constant dense<0.000000e+00> : vector<128x128xf32>
    %62 = tpu.matmul %57, %59, %cst_19 {dimension_numbers = #tpu.dot_dimension_numbers<[1], [1], [0], [0], [0, 0, 1, 0], [], []>} : vector<128x32xbf16>, vector<128x32xbf16>, vector<128x128xf32> -> vector<128x128xf32>
    %63 = vector.broadcast %5 : vector<1x128xf32> to vector<128x128xf32>
    %64 = arith.addf %62, %63 : vector<128x128xf32>
    %cst_20 = arith.constant dense<0xFF800000> : vector<128xf32>
    %65 = vector.multi_reduction <maximumf>, %64, %cst_20 [1] : vector<128x128xf32> to vector<128xf32>
    %66 = vector.shape_cast %65 : vector<128xf32> to vector<128x1xf32>
    %67 = vector.broadcast %66 : vector<128x1xf32> to vector<128x128xf32>
    %68 = arith.subf %64, %67 : vector<128x128xf32>
    %69 = math.exp %68 : vector<128x128xf32>
    %cst_21 = arith.constant dense<0.000000e+00> : vector<128xf32>
    %70 = vector.multi_reduction <add>, %69, %cst_21 [1] : vector<128x128xf32> to vector<128xf32>
    %71 = vector.shape_cast %70 : vector<128xf32> to vector<128x1xf32>
    %72 = tpu.reciprocal %71 {approx = true} : vector<128x1xf32> -> vector<128x1xf32>
    %73 = vector.broadcast %72 : vector<128x1xf32> to vector<128x128xf32>
    %74 = arith.mulf %69, %73 : vector<128x128xf32>
    %75 = arith.truncf %74 : vector<128x128xf32> to vector<128x128xbf16>
    %cst_22 = arith.constant dense<0.000000e+00> : vector<128x32xf32>
    %76 = tpu.matmul %75, %61, %cst_22 {dimension_numbers = #tpu.dot_dimension_numbers<[1], [0], [0], [1], [0, 0, 1, 1], [], []>} : vector<128x128xbf16>, vector<128x32xbf16>, vector<128x32xf32> -> vector<128x32xf32>
    %77 = vector.extract_strided_slice %13 {offsets = [0, 96], sizes = [128, 32], strides = [1, 1]} : vector<128x384xf32> to vector<128x32xf32>
    %78 = arith.truncf %77 : vector<128x32xf32> to vector<128x32xbf16>
    %79 = vector.extract_strided_slice %13 {offsets = [0, 224], sizes = [128, 32], strides = [1, 1]} : vector<128x384xf32> to vector<128x32xf32>
    %80 = arith.truncf %79 : vector<128x32xf32> to vector<128x32xbf16>
    %81 = vector.extract_strided_slice %13 {offsets = [0, 352], sizes = [128, 32], strides = [1, 1]} : vector<128x384xf32> to vector<128x32xf32>
    %82 = arith.truncf %81 : vector<128x32xf32> to vector<128x32xbf16>
    %cst_23 = arith.constant dense<0.000000e+00> : vector<128x128xf32>
    %83 = tpu.matmul %78, %80, %cst_23 {dimension_numbers = #tpu.dot_dimension_numbers<[1], [1], [0], [0], [0, 0, 1, 0], [], []>} : vector<128x32xbf16>, vector<128x32xbf16>, vector<128x128xf32> -> vector<128x128xf32>
    %84 = vector.broadcast %5 : vector<1x128xf32> to vector<128x128xf32>
    %85 = arith.addf %83, %84 : vector<128x128xf32>
    %cst_24 = arith.constant dense<0xFF800000> : vector<128xf32>
    %86 = vector.multi_reduction <maximumf>, %85, %cst_24 [1] : vector<128x128xf32> to vector<128xf32>
    %87 = vector.shape_cast %86 : vector<128xf32> to vector<128x1xf32>
    %88 = vector.broadcast %87 : vector<128x1xf32> to vector<128x128xf32>
    %89 = arith.subf %85, %88 : vector<128x128xf32>
    %90 = math.exp %89 : vector<128x128xf32>
    %cst_25 = arith.constant dense<0.000000e+00> : vector<128xf32>
    %91 = vector.multi_reduction <add>, %90, %cst_25 [1] : vector<128x128xf32> to vector<128xf32>
    %92 = vector.shape_cast %91 : vector<128xf32> to vector<128x1xf32>
    %93 = tpu.reciprocal %92 {approx = true} : vector<128x1xf32> -> vector<128x1xf32>
    %94 = vector.broadcast %93 : vector<128x1xf32> to vector<128x128xf32>
    %95 = arith.mulf %90, %94 : vector<128x128xf32>
    %96 = arith.truncf %95 : vector<128x128xf32> to vector<128x128xbf16>
    %cst_26 = arith.constant dense<0.000000e+00> : vector<128x32xf32>
    %97 = tpu.matmul %96, %82, %cst_26 {dimension_numbers = #tpu.dot_dimension_numbers<[1], [0], [0], [1], [0, 0, 1, 1], [], []>} : vector<128x128xbf16>, vector<128x32xbf16>, vector<128x32xf32> -> vector<128x32xf32>
    %98 = tpu.concatenate %34, %55, %76, %97 in 1 : vector<128x32xf32>, vector<128x32xf32>, vector<128x32xf32>, vector<128x32xf32> -> vector<128x128xf32>
    %99 = arith.truncf %98 : vector<128x128xf32> to vector<128x128xbf16>
    %c0_27 = arith.constant 0 : index
    %c0_28 = arith.constant 0 : index
    %c0_29 = arith.constant 0 : index
    %100 = vector.load %arg8[%c0_27, %c0_28, %c0_29] : memref<1x128x128xbf16, #tpu.memory_space<vmem>>, vector<1x128x128xbf16>
    %101 = vector.shape_cast %100 : vector<1x128x128xbf16> to vector<128x128xbf16>
    %cst_30 = arith.constant dense<0.000000e+00> : vector<128x128xf32>
    %102 = tpu.matmul %99, %101, %cst_30 {dimension_numbers = #tpu.dot_dimension_numbers<[1], [0], [0], [1], [0, 0, 1, 1], [], []>} : vector<128x128xbf16>, vector<128x128xbf16>, vector<128x128xf32> -> vector<128x128xf32>
    %c0_31 = arith.constant 0 : index
    %c0_32 = arith.constant 0 : index
    %c0_33 = arith.constant 0 : index
    %103 = vector.load %arg9[%c0_31, %c0_32, %c0_33] : memref<1x1x128xf32, #tpu.memory_space<vmem>>, vector<1x1x128xf32>
    %104 = vector.shape_cast %103 : vector<1x1x128xf32> to vector<1x128xf32>
    %105 = vector.broadcast %104 : vector<1x128xf32> to vector<128x128xf32>
    %106 = arith.addf %102, %105 : vector<128x128xf32>
    %107 = arith.addf %3, %106 : vector<128x128xf32>
    %c0_34 = arith.constant 0 : index
    %c0_35 = arith.constant 0 : index
    %c0_36 = arith.constant 0 : index
    %108 = vector.load %arg10[%c0_34, %c0_35, %c0_36] : memref<1x1x128xf32, #tpu.memory_space<vmem>>, vector<1x1x128xf32>
    %109 = vector.shape_cast %108 : vector<1x1x128xf32> to vector<1x128xf32>
    %c0_37 = arith.constant 0 : index
    %c0_38 = arith.constant 0 : index
    %c0_39 = arith.constant 0 : index
    %110 = vector.load %arg11[%c0_37, %c0_38, %c0_39] : memref<1x1x128xf32, #tpu.memory_space<vmem>>, vector<1x1x128xf32>
    %111 = vector.shape_cast %110 : vector<1x1x128xf32> to vector<1x128xf32>
    %cst_40 = arith.constant dense<0.000000e+00> : vector<128xf32>
    %112 = vector.multi_reduction <add>, %107, %cst_40 [1] : vector<128x128xf32> to vector<128xf32>
    %113 = vector.shape_cast %112 : vector<128xf32> to vector<128x1xf32>
    %cst_41 = arith.constant 1.280000e+02 : f32
    %114 = vector.broadcast %cst_41 : f32 to vector<128x1xf32>
    %115 = arith.divf %113, %114 : vector<128x1xf32>
    %116 = vector.broadcast %115 : vector<128x1xf32> to vector<128x128xf32>
    %117 = arith.subf %107, %116 : vector<128x128xf32>
    %118 = arith.mulf %117, %117 : vector<128x128xf32>
    %cst_42 = arith.constant dense<0.000000e+00> : vector<128xf32>
    %119 = vector.multi_reduction <add>, %118, %cst_42 [1] : vector<128x128xf32> to vector<128xf32>
    %120 = vector.shape_cast %119 : vector<128xf32> to vector<128x1xf32>
    %cst_43 = arith.constant 1.280000e+02 : f32
    %121 = vector.broadcast %cst_43 : f32 to vector<128x1xf32>
    %122 = arith.divf %120, %121 : vector<128x1xf32>
    %123 = vector.broadcast %115 : vector<128x1xf32> to vector<128x128xf32>
    %124 = arith.subf %107, %123 : vector<128x128xf32>
    %cst_44 = arith.constant 9.99999996E-13 : f32
    %125 = vector.broadcast %cst_44 : f32 to vector<128x1xf32>
    %126 = arith.addf %122, %125 : vector<128x1xf32>
    %127 = math.rsqrt %126 : vector<128x1xf32>
    %128 = vector.broadcast %127 : vector<128x1xf32> to vector<128x128xf32>
    %129 = arith.mulf %124, %128 : vector<128x128xf32>
    %130 = vector.broadcast %109 : vector<1x128xf32> to vector<128x128xf32>
    %131 = arith.mulf %129, %130 : vector<128x128xf32>
    %132 = vector.broadcast %111 : vector<1x128xf32> to vector<128x128xf32>
    %133 = arith.addf %131, %132 : vector<128x128xf32>
    %134 = arith.truncf %133 : vector<128x128xf32> to vector<128x128xbf16>
    %c0_45 = arith.constant 0 : index
    %c0_46 = arith.constant 0 : index
    %c0_47 = arith.constant 0 : index
    %135 = vector.load %arg12[%c0_45, %c0_46, %c0_47] : memref<1x128x512xbf16, #tpu.memory_space<vmem>>, vector<1x128x256xbf16>
    %136 = vector.shape_cast %135 : vector<1x128x256xbf16> to vector<128x256xbf16>
    %cst_48 = arith.constant dense<0.000000e+00> : vector<128x256xf32>
    %137 = tpu.matmul %134, %136, %cst_48 {dimension_numbers = #tpu.dot_dimension_numbers<[1], [0], [0], [1], [0, 0, 1, 1], [], []>} : vector<128x128xbf16>, vector<128x256xbf16>, vector<128x256xf32> -> vector<128x256xf32>
    %c0_49 = arith.constant 0 : index
    %c0_50 = arith.constant 0 : index
    %c0_51 = arith.constant 0 : index
    %138 = vector.load %arg13[%c0_49, %c0_50, %c0_51] : memref<1x1x512xf32, #tpu.memory_space<vmem>>, vector<1x1x256xf32>
    %139 = vector.shape_cast %138 : vector<1x1x256xf32> to vector<1x256xf32>
    %140 = vector.broadcast %139 : vector<1x256xf32> to vector<128x256xf32>
    %141 = arith.addf %137, %140 : vector<128x256xf32>
    %142 = arith.mulf %141, %141 : vector<128x256xf32>
    %143 = arith.mulf %141, %142 : vector<128x256xf32>
    %cst_52 = arith.constant 4.471500e-02 : f32
    %144 = vector.broadcast %cst_52 : f32 to vector<128x256xf32>
    %145 = arith.mulf %144, %143 : vector<128x256xf32>
    %146 = arith.addf %141, %145 : vector<128x256xf32>
    %cst_53 = arith.constant 0.797884583 : f32
    %147 = vector.broadcast %cst_53 : f32 to vector<128x256xf32>
    %148 = arith.mulf %147, %146 : vector<128x256xf32>
    %149 = math.tanh %148 : vector<128x256xf32>
    %cst_54 = arith.constant 1.000000e+00 : f32
    %150 = vector.broadcast %cst_54 : f32 to vector<128x256xf32>
    %151 = arith.addf %150, %149 : vector<128x256xf32>
    %cst_55 = arith.constant 5.000000e-01 : f32
    %152 = vector.broadcast %cst_55 : f32 to vector<128x256xf32>
    %153 = arith.mulf %152, %151 : vector<128x256xf32>
    %154 = arith.mulf %141, %153 : vector<128x256xf32>
    %155 = arith.truncf %154 : vector<128x256xf32> to vector<128x256xbf16>
    %c0_56 = arith.constant 0 : index
    %c0_57 = arith.constant 0 : index
    %c0_58 = arith.constant 0 : index
    %156 = vector.load %arg14[%c0_56, %c0_57, %c0_58] : memref<1x512x128xbf16, #tpu.memory_space<vmem>>, vector<1x256x128xbf16>
    %157 = vector.shape_cast %156 : vector<1x256x128xbf16> to vector<256x128xbf16>
    %cst_59 = arith.constant dense<0.000000e+00> : vector<128x128xf32>
    %158 = tpu.matmul %155, %157, %cst_59 {dimension_numbers = #tpu.dot_dimension_numbers<[1], [0], [0], [1], [0, 0, 1, 1], [], []>} : vector<128x256xbf16>, vector<256x128xbf16>, vector<128x128xf32> -> vector<128x128xf32>
    %c0_60 = arith.constant 0 : index
    %c0_61 = arith.constant 0 : index
    %c256 = arith.constant 256 : index
    %159 = vector.load %arg12[%c0_60, %c0_61, %c256] : memref<1x128x512xbf16, #tpu.memory_space<vmem>>, vector<1x128x256xbf16>
    %160 = vector.shape_cast %159 : vector<1x128x256xbf16> to vector<128x256xbf16>
    %cst_62 = arith.constant dense<0.000000e+00> : vector<128x256xf32>
    %161 = tpu.matmul %134, %160, %cst_62 {dimension_numbers = #tpu.dot_dimension_numbers<[1], [0], [0], [1], [0, 0, 1, 1], [], []>} : vector<128x128xbf16>, vector<128x256xbf16>, vector<128x256xf32> -> vector<128x256xf32>
    %c0_63 = arith.constant 0 : index
    %c0_64 = arith.constant 0 : index
    %c256_65 = arith.constant 256 : index
    %162 = vector.load %arg13[%c0_63, %c0_64, %c256_65] : memref<1x1x512xf32, #tpu.memory_space<vmem>>, vector<1x1x256xf32>
    %163 = vector.shape_cast %162 : vector<1x1x256xf32> to vector<1x256xf32>
    %164 = vector.broadcast %163 : vector<1x256xf32> to vector<128x256xf32>
    %165 = arith.addf %161, %164 : vector<128x256xf32>
    %166 = arith.mulf %165, %165 : vector<128x256xf32>
    %167 = arith.mulf %165, %166 : vector<128x256xf32>
    %cst_66 = arith.constant 4.471500e-02 : f32
    %168 = vector.broadcast %cst_66 : f32 to vector<128x256xf32>
    %169 = arith.mulf %168, %167 : vector<128x256xf32>
    %170 = arith.addf %165, %169 : vector<128x256xf32>
    %cst_67 = arith.constant 0.797884583 : f32
    %171 = vector.broadcast %cst_67 : f32 to vector<128x256xf32>
    %172 = arith.mulf %171, %170 : vector<128x256xf32>
    %173 = math.tanh %172 : vector<128x256xf32>
    %cst_68 = arith.constant 1.000000e+00 : f32
    %174 = vector.broadcast %cst_68 : f32 to vector<128x256xf32>
    %175 = arith.addf %174, %173 : vector<128x256xf32>
    %cst_69 = arith.constant 5.000000e-01 : f32
    %176 = vector.broadcast %cst_69 : f32 to vector<128x256xf32>
    %177 = arith.mulf %176, %175 : vector<128x256xf32>
    %178 = arith.mulf %165, %177 : vector<128x256xf32>
    %179 = arith.truncf %178 : vector<128x256xf32> to vector<128x256xbf16>
    %c0_70 = arith.constant 0 : index
    %c256_71 = arith.constant 256 : index
    %c0_72 = arith.constant 0 : index
    %180 = vector.load %arg14[%c0_70, %c256_71, %c0_72] : memref<1x512x128xbf16, #tpu.memory_space<vmem>>, vector<1x256x128xbf16>
    %181 = vector.shape_cast %180 : vector<1x256x128xbf16> to vector<256x128xbf16>
    %cst_73 = arith.constant dense<0.000000e+00> : vector<128x128xf32>
    %182 = tpu.matmul %179, %181, %cst_73 {dimension_numbers = #tpu.dot_dimension_numbers<[1], [0], [0], [1], [0, 0, 1, 1], [], []>} : vector<128x256xbf16>, vector<256x128xbf16>, vector<128x128xf32> -> vector<128x128xf32>
    %183 = arith.addf %158, %182 : vector<128x128xf32>
    %c0_74 = arith.constant 0 : index
    %c0_75 = arith.constant 0 : index
    %c0_76 = arith.constant 0 : index
    %184 = vector.load %arg15[%c0_74, %c0_75, %c0_76] : memref<1x1x128xf32, #tpu.memory_space<vmem>>, vector<1x1x128xf32>
    %185 = vector.shape_cast %184 : vector<1x1x128xf32> to vector<1x128xf32>
    %186 = vector.broadcast %185 : vector<1x128xf32> to vector<128x128xf32>
    %187 = arith.addf %183, %186 : vector<128x128xf32>
    %188 = arith.addf %133, %187 : vector<128x128xf32>
    %c0_77 = arith.constant 0 : index
    %c0_78 = arith.constant 0 : index
    %c0_79 = arith.constant 0 : index
    %189 = vector.load %arg16[%c0_77, %c0_78, %c0_79] : memref<1x1x128xf32, #tpu.memory_space<vmem>>, vector<1x1x128xf32>
    %190 = vector.shape_cast %189 : vector<1x1x128xf32> to vector<1x128xf32>
    %c0_80 = arith.constant 0 : index
    %c0_81 = arith.constant 0 : index
    %c0_82 = arith.constant 0 : index
    %191 = vector.load %arg17[%c0_80, %c0_81, %c0_82] : memref<1x1x128xf32, #tpu.memory_space<vmem>>, vector<1x1x128xf32>
    %192 = vector.shape_cast %191 : vector<1x1x128xf32> to vector<1x128xf32>
    %cst_83 = arith.constant dense<0.000000e+00> : vector<128xf32>
    %193 = vector.multi_reduction <add>, %188, %cst_83 [1] : vector<128x128xf32> to vector<128xf32>
    %194 = vector.shape_cast %193 : vector<128xf32> to vector<128x1xf32>
    %cst_84 = arith.constant 1.280000e+02 : f32
    %195 = vector.broadcast %cst_84 : f32 to vector<128x1xf32>
    %196 = arith.divf %194, %195 : vector<128x1xf32>
    %197 = vector.broadcast %196 : vector<128x1xf32> to vector<128x128xf32>
    %198 = arith.subf %188, %197 : vector<128x128xf32>
    %199 = arith.mulf %198, %198 : vector<128x128xf32>
    %cst_85 = arith.constant dense<0.000000e+00> : vector<128xf32>
    %200 = vector.multi_reduction <add>, %199, %cst_85 [1] : vector<128x128xf32> to vector<128xf32>
    %201 = vector.shape_cast %200 : vector<128xf32> to vector<128x1xf32>
    %cst_86 = arith.constant 1.280000e+02 : f32
    %202 = vector.broadcast %cst_86 : f32 to vector<128x1xf32>
    %203 = arith.divf %201, %202 : vector<128x1xf32>
    %204 = vector.broadcast %196 : vector<128x1xf32> to vector<128x128xf32>
    %205 = arith.subf %188, %204 : vector<128x128xf32>
    %cst_87 = arith.constant 9.99999996E-13 : f32
    %206 = vector.broadcast %cst_87 : f32 to vector<128x1xf32>
    %207 = arith.addf %203, %206 : vector<128x1xf32>
    %208 = math.rsqrt %207 : vector<128x1xf32>
    %209 = vector.broadcast %208 : vector<128x1xf32> to vector<128x128xf32>
    %210 = arith.mulf %205, %209 : vector<128x128xf32>
    %211 = vector.broadcast %190 : vector<1x128xf32> to vector<128x128xf32>
    %212 = arith.mulf %210, %211 : vector<128x128xf32>
    %213 = vector.broadcast %192 : vector<1x128xf32> to vector<128x128xf32>
    %214 = arith.addf %212, %213 : vector<128x128xf32>
    %c0_88 = arith.constant 0 : index
    %c0_89 = arith.constant 0 : index
    %215 = vector.load %arg23[%c0_88, %c0_89] : memref<128x128xf32, #tpu.memory_space<vmem>>, vector<128x128xf32>
    tpu.vector_store %arg23[%c0_88, %c0_89], %214 {strides = array<i32>} : memref<128x128xf32, #tpu.memory_space<vmem>>, vector<128x128xf32>,
    %c1_i32 = arith.constant 1 : i32
    %216 = arith.cmpi eq, %arg1, %c1_i32 : i32
    %217 = arith.extui %216 : i1 to i32
    %c0_i32_90 = arith.constant 0 : i32
    %218 = arith.cmpi ne, %217, %c0_i32_90 : i32
    scf.if %218 {
      %219 = vector.extract_strided_slice %214 {offsets = [0, 0], sizes = [1, 128], strides = [1, 1]} : vector<128x128xf32> to vector<1x128xf32>
      %220 = arith.truncf %219 : vector<1x128xf32> to vector<1x128xbf16>
      %c0_91 = arith.constant 0 : index
      %c0_92 = arith.constant 0 : index
      %221 = vector.load %arg18[%c0_91, %c0_92] : memref<128x128xbf16, #tpu.memory_space<vmem>>, vector<128x128xbf16>
      %cst_93 = arith.constant dense<0.000000e+00> : vector<1x128xf32>
      %222 = tpu.matmul %220, %221, %cst_93 {dimension_numbers = #tpu.dot_dimension_numbers<[1], [0], [0], [1], [0, 0, 1, 1], [], []>} : vector<1x128xbf16>, vector<128x128xbf16>, vector<1x128xf32> -> vector<1x128xf32>
      %c0_94 = arith.constant 0 : index
      %c0_95 = arith.constant 0 : index
      %223 = vector.load %arg19[%c0_94, %c0_95] : memref<1x128xf32, #tpu.memory_space<vmem>>, vector<1x128xf32>
      %224 = arith.addf %222, %223 : vector<1x128xf32>
      %225 = math.tanh %224 : vector<1x128xf32>
      %c0_96 = arith.constant 0 : index
      %c0_97 = arith.constant 0 : index
      %226 = vector.load %arg20[%c0_96, %c0_97] : memref<1x128xf32, #tpu.memory_space<vmem>>, vector<1x128xf32>
      %227 = arith.mulf %225, %226 : vector<1x128xf32>
      %cst_98 = arith.constant dense<0.000000e+00> : vector<1xf32>
      %228 = vector.multi_reduction <add>, %227, %cst_98 [1] : vector<1x128xf32> to vector<1xf32>
      %229 = vector.shape_cast %228 : vector<1xf32> to vector<1x1xf32>
      %c0_99 = arith.constant 0 : index
      %c0_100 = arith.constant 0 : index
      %230 = vector.load %arg21[%c0_99, %c0_100] : memref<1x1xf32, #tpu.memory_space<vmem>>, vector<1x1xf32>
      %231 = arith.addf %229, %230 : vector<1x1xf32>
      %232 = arith.negf %231 : vector<1x1xf32>
      %233 = math.exp %232 : vector<1x1xf32>
      %cst_101 = arith.constant 1.000000e+00 : f32
      %234 = vector.broadcast %cst_101 : f32 to vector<1x1xf32>
      %235 = arith.addf %234, %233 : vector<1x1xf32>
      %236 = arith.divf %234, %235 : vector<1x1xf32>
      %c0_102 = arith.constant 0 : index
      %c0_103 = arith.constant 0 : index
      %c0_104 = arith.constant 0 : index
      %237 = vector.load %arg22[%c0_102, %c0_103, %c0_104] : memref<1x1x1xf32, #tpu.memory_space<vmem>>, vector<1x1x1xf32>
      %238 = vector.shape_cast %237 : vector<1x1x1xf32> to vector<1x1xf32>
      %239 = vector.shape_cast %236 : vector<1x1xf32> to vector<1x1x1xf32>
      tpu.vector_store %arg22[%c0_102, %c0_103, %c0_104], %239 {strides = array<i32>} : memref<1x1x1xf32, #tpu.memory_space<vmem>>, vector<1x1x1xf32>,
    } else {
    }
    return
  }
  func.func @transform_0(%arg0: i32, %arg1: i32) -> (i32, i32, i32) {
    %c0_i32 = arith.constant 0 : i32
    %c0_i32_0 = arith.constant 0 : i32
    %c0_i32_1 = arith.constant 0 : i32
    return %arg0, %c0_i32, %c0_i32_0 : i32, i32, i32
  }
  func.func @transform_1(%arg0: i32, %arg1: i32) -> (i32, i32, i32) {
    %c0_i32 = arith.constant 0 : i32
    %c0_i32_0 = arith.constant 0 : i32
    %c0_i32_1 = arith.constant 0 : i32
    return %arg0, %c0_i32, %c0_i32_0 : i32, i32, i32
  }
  func.func @transform_2(%arg0: i32, %arg1: i32) -> (i32, i32) {
    %c0_i32 = arith.constant 0 : i32
    %c0_i32_0 = arith.constant 0 : i32
    %c0_i32_1 = arith.constant 0 : i32
    return %c0_i32, %c0_i32_0 : i32, i32
  }
  func.func @transform_3(%arg0: i32, %arg1: i32) -> (i32, i32) {
    %c0_i32 = arith.constant 0 : i32
    %c0_i32_0 = arith.constant 0 : i32
    %c0_i32_1 = arith.constant 0 : i32
    return %c0_i32, %c0_i32_0 : i32, i32
  }
  func.func @transform_4(%arg0: i32, %arg1: i32) -> (i32, i32, i32) {
    %c0_i32 = arith.constant 0 : i32
    %c0_i32_0 = arith.constant 0 : i32
    %c0_i32_1 = arith.constant 0 : i32
    return %arg1, %c0_i32, %c0_i32_0 : i32, i32, i32
  }
  func.func @transform_5(%arg0: i32, %arg1: i32) -> (i32, i32, i32) {
    %c0_i32 = arith.constant 0 : i32
    %c0_i32_0 = arith.constant 0 : i32
    %c0_i32_1 = arith.constant 0 : i32
    return %arg1, %c0_i32, %c0_i32_0 : i32, i32, i32
  }
  func.func @transform_6(%arg0: i32, %arg1: i32) -> (i32, i32, i32) {
    %c0_i32 = arith.constant 0 : i32
    %c0_i32_0 = arith.constant 0 : i32
    %c0_i32_1 = arith.constant 0 : i32
    return %arg1, %c0_i32, %c0_i32_0 : i32, i32, i32
  }
  func.func @transform_7(%arg0: i32, %arg1: i32) -> (i32, i32, i32) {
    %c0_i32 = arith.constant 0 : i32
    %c0_i32_0 = arith.constant 0 : i32
    %c0_i32_1 = arith.constant 0 : i32
    return %arg1, %c0_i32, %c0_i32_0 : i32, i32, i32
  }
  func.func @transform_8(%arg0: i32, %arg1: i32) -> (i32, i32, i32) {
    %c0_i32 = arith.constant 0 : i32
    %c0_i32_0 = arith.constant 0 : i32
    %c0_i32_1 = arith.constant 0 : i32
    return %arg1, %c0_i32, %c0_i32_0 : i32, i32, i32
  }
  func.func @transform_9(%arg0: i32, %arg1: i32) -> (i32, i32, i32) {
    %c0_i32 = arith.constant 0 : i32
    %c0_i32_0 = arith.constant 0 : i32
    %c0_i32_1 = arith.constant 0 : i32
    return %arg1, %c0_i32, %c0_i32_0 : i32, i32, i32
  }
  func.func @transform_10(%arg0: i32, %arg1: i32) -> (i32, i32, i32) {
    %c0_i32 = arith.constant 0 : i32
    %c0_i32_0 = arith.constant 0 : i32
    %c0_i32_1 = arith.constant 0 : i32
    return %arg1, %c0_i32, %c0_i32_0 : i32, i32, i32
  }
  func.func @transform_11(%arg0: i32, %arg1: i32) -> (i32, i32, i32) {
    %c0_i32 = arith.constant 0 : i32
    %c0_i32_0 = arith.constant 0 : i32
    %c0_i32_1 = arith.constant 0 : i32
    return %arg1, %c0_i32, %c0_i32_0 : i32, i32, i32
  }
  func.func @transform_12(%arg0: i32, %arg1: i32) -> (i32, i32, i32) {
    %c0_i32 = arith.constant 0 : i32
    %c0_i32_0 = arith.constant 0 : i32
    %c0_i32_1 = arith.constant 0 : i32
    return %arg1, %c0_i32, %c0_i32_0 : i32, i32, i32
  }
  func.func @transform_13(%arg0: i32, %arg1: i32) -> (i32, i32, i32) {
    %c0_i32 = arith.constant 0 : i32
    %c0_i32_0 = arith.constant 0 : i32
    %c0_i32_1 = arith.constant 0 : i32
    return %arg1, %c0_i32, %c0_i32_0 : i32, i32, i32
  }
  func.func @transform_14(%arg0: i32, %arg1: i32) -> (i32, i32, i32) {
    %c0_i32 = arith.constant 0 : i32
    %c0_i32_0 = arith.constant 0 : i32
    %c0_i32_1 = arith.constant 0 : i32
    return %arg1, %c0_i32, %c0_i32_0 : i32, i32, i32
  }
  func.func @transform_15(%arg0: i32, %arg1: i32) -> (i32, i32, i32) {
    %c0_i32 = arith.constant 0 : i32
    %c0_i32_0 = arith.constant 0 : i32
    %c0_i32_1 = arith.constant 0 : i32
    return %arg1, %c0_i32, %c0_i32_0 : i32, i32, i32
  }
  func.func @transform_16(%arg0: i32, %arg1: i32) -> (i32, i32) {
    %c0_i32 = arith.constant 0 : i32
    %c0_i32_0 = arith.constant 0 : i32
    %c0_i32_1 = arith.constant 0 : i32
    return %c0_i32, %c0_i32_0 : i32, i32
  }
  func.func @transform_17(%arg0: i32, %arg1: i32) -> (i32, i32) {
    %c0_i32 = arith.constant 0 : i32
    %c0_i32_0 = arith.constant 0 : i32
    %c0_i32_1 = arith.constant 0 : i32
    return %c0_i32, %c0_i32_0 : i32, i32
  }
  func.func @transform_18(%arg0: i32, %arg1: i32) -> (i32, i32) {
    %c0_i32 = arith.constant 0 : i32
    %c0_i32_0 = arith.constant 0 : i32
    %c0_i32_1 = arith.constant 0 : i32
    return %c0_i32, %c0_i32_0 : i32, i32
  }
  func.func @transform_19(%arg0: i32, %arg1: i32) -> (i32, i32) {
    %c0_i32 = arith.constant 0 : i32
    %c0_i32_0 = arith.constant 0 : i32
    %c0_i32_1 = arith.constant 0 : i32
    return %c0_i32, %c0_i32_0 : i32, i32
  }
  func.func @transform_20(%arg0: i32, %arg1: i32) -> (i32, i32, i32) {
    %c0_i32 = arith.constant 0 : i32
    %c0_i32_0 = arith.constant 0 : i32
    %c0_i32_1 = arith.constant 0 : i32
    return %arg0, %c0_i32, %c0_i32_0 : i32, i32, i32
  }
}

</mosaic_0001>

<llo_original>
// kernel: bert_classifier_forward.1
$region0: #{bert_classifier_forward.1}
  #allocation0 [shape = 'u32[]', space=smem, size = 0x4, offset = 0x4, fixed_abs, tag = 'smem constant byte address 0x4 - core index']
  #allocation1 [shape = 'u32[144,128]{1,0:T(1,128)}', space=vmem, size = 0x12000, scoped, tag = 'internal scratch']
  #allocation2 [shape = 'f32[128,128]{1,0:T(8,128)}', space=vmem, size = 0x10000, scoped, tag = 'scratch operand']
  #allocation3 [shape = 'f32[1,1]{1,0:T(1,128)S(1)}', space=vmem, size = 0x200, scoped, tag = 'scoped memory for bert_classifier_forward.1']
  %s0 = inlined_call_operand.vmem [shape: f32[2,128,128], index: 0, kind: input, shape index: {}]
  %s1 = inlined_call_operand.vmem [shape: f32[2,1,128], index: 1, kind: input, shape index: {}]
  %s2 = inlined_call_operand.vmem [shape: f32[1,128], index: 2, kind: input, shape index: {}]
  %s3 = inlined_call_operand.vmem [shape: f32[1,128], index: 3, kind: input, shape index: {}]
  %s4 = inlined_call_operand.vmem [shape: bf16[2,128,384], index: 4, kind: input, shape index: {}]
  %s5 = inlined_call_operand.vmem [shape: f32[2,1,384], index: 5, kind: input, shape index: {}]
  %s6 = inlined_call_operand.vmem [shape: bf16[2,128,128], index: 6, kind: input, shape index: {}]
  %s7 = inlined_call_operand.vmem [shape: f32[2,1,128], index: 7, kind: input, shape index: {}]
  %s8 = inlined_call_operand.vmem [shape: f32[2,1,128], index: 8, kind: input, shape index: {}]
  %s9 = inlined_call_operand.vmem [shape: f32[2,1,128], index: 9, kind: input, shape index: {}]
  %s10 = inlined_call_operand.vmem [shape: bf16[2,128,512], index: 10, kind: input, shape index: {}]
  %s11 = inlined_call_operand.vmem [shape: f32[2,1,512], index: 11, kind: input, shape index: {}]
  %s12 = inlined_call_operand.vmem [shape: bf16[2,512,128], index: 12, kind: input, shape index: {}]
  %s13 = inlined_call_operand.vmem [shape: f32[2,1,128], index: 13, kind: input, shape index: {}]
  %s14 = inlined_call_operand.vmem [shape: f32[2,1,128], index: 14, kind: input, shape index: {}]
  %s15 = inlined_call_operand.vmem [shape: f32[2,1,128], index: 15, kind: input, shape index: {}]
  %s16 = inlined_call_operand.vmem [shape: bf16[128,128], index: 16, kind: input, shape index: {}]
  %s17 = inlined_call_operand.vmem [shape: f32[1,128], index: 17, kind: input, shape index: {}]
  %s18 = inlined_call_operand.vmem [shape: f32[1,128], index: 18, kind: input, shape index: {}]
  %s19 = inlined_call_operand.<no memory space> [shape: f32[1,1], index: 19, kind: input, shape index: {}]
  %s20 = inlined_call_operand.vmem [shape: f32[2,1,1], index: 20, kind: output, shape index: {}]
  %s21 = sld [smem:[#allocation0]]
  $region121: #{bert_classifier_forward.1} parent=0
    _
  %s23 = ssub.s32 1, %s21
  %s24 = scalar_select 0, %s23, %s21
  %v25 = vstv %s19
  %26 = vst [vmem:[#allocation3] sm:$0x1] %v25
  loop: start=0, step=1, limit=6
  $region2: #{bert_classifier_forward.1} parent=0 // loop_pre_header
    _
  $region3: #{bert_classifier_forward.1} parent=0 // loop_header
    %s28 = sphi 0, %s32
    %p29 = scmp.ge.s32.totalorder %s28, 6
    %s35 = sphi 0, %s47
    %s36 = sphi 0, %s43
    %s37 = sphi 0, %s35
    %s38 = sphi 0, %s36
    %s39 = sphi 0, %s37
    %s40 = sphi 0, %s38
    %s50 = sphi 0, %s52
    %s53 = sphi 0, %s50
    %s54 = sphi 0, %s53
    %s70 = sphi 0, %s54
    %s76 = sphi 0, %s78
    %s79 = sphi 0, %s76
    %s80 = sphi 0, %s79
    %s96 = sphi 0, %s80
    %s100 = sphi 0, %s100
    %s102 = sphi 0, %s100
    %s103 = sphi 0, %s102
    %s117 = sphi 0, %s103
    %s121 = sphi 0, %s121
    %s123 = sphi 0, %s121
    %s124 = sphi 0, %s123
    %s138 = sphi 0, %s124
    %s144 = sphi 0, %s146
    %s147 = sphi 0, %s144
    %s148 = sphi 0, %s147
    %s164 = sphi 0, %s148
    %s170 = sphi 0, %s172
    %s173 = sphi 0, %s170
    %s174 = sphi 0, %s173
    %s190 = sphi 0, %s174
    %s196 = sphi 0, %s198
    %s199 = sphi 0, %s196
    %s200 = sphi 0, %s199
    %s216 = sphi 0, %s200
    %s222 = sphi 0, %s224
    %s225 = sphi 0, %s222
    %s226 = sphi 0, %s225
    %s242 = sphi 0, %s226
    %s248 = sphi 0, %s250
    %s251 = sphi 0, %s248
    %s252 = sphi 0, %s251
    %s268 = sphi 0, %s252
    %s274 = sphi 0, %s276
    %s277 = sphi 0, %s274
    %s278 = sphi 0, %s277
    %s294 = sphi 0, %s278
    %s300 = sphi 0, %s302
    %s303 = sphi 0, %s300
    %s304 = sphi 0, %s303
    %s320 = sphi 0, %s304
    %s326 = sphi 0, %s328
    %s329 = sphi 0, %s326
    %s330 = sphi 0, %s329
    %s346 = sphi 0, %s330
    %s352 = sphi 0, %s354
    %s355 = sphi 0, %s352
    %s356 = sphi 0, %s355
    %s372 = sphi 0, %s356
    %s378 = sphi 0, %s380
    %s381 = sphi 0, %s378
    %s382 = sphi 0, %s381
    %s398 = sphi 0, %s382
    %s404 = sphi 0, %s406
    %s407 = sphi 0, %s404
    %s408 = sphi 0, %s407
    %s424 = sphi 0, %s408
    %s430 = sphi 0, %s432
    %s433 = sphi 0, %s430
    %s434 = sphi 0, %s433
    %s450 = sphi 0, %s434
    %s454 = sphi 0, %s454
    %s456 = sphi 0, %s454
    %s457 = sphi 0, %s456
    %s471 = sphi 0, %s457
    %s475 = sphi 0, %s475
    %s477 = sphi 0, %s475
    %s478 = sphi 0, %s477
    %s492 = sphi 0, %s478
    %s496 = sphi 0, %s496
    %s498 = sphi 0, %s496
    %s499 = sphi 0, %s498
    %s513 = sphi 0, %s499
    %s517 = sphi 0, %s517
    %s519 = sphi 0, %s517
    %s520 = sphi 0, %s519
    %s534 = sphi 0, %s520
    %s540 = sphi 0, %s542
    %s543 = sphi 0, %s540
    %s544 = sphi 0, %s543
    %s560 = sphi 0, %s544
  $region4: #{bert_classifier_forward.1} parent=0 // loop_header_branch
    %31 = sbr.rel (%p29) target = $region8
  $region5: #{bert_classifier_forward.1} parent=0 // loop_body
    %s33 = ssub.s32 %s28, 1
    %s34 = ssub.s32 %s28, 2
    %s41 = sadd.s32 1, %s36
    %p42 = scmp.ge.s32.totalorder %s41, 2
    %s43 = scalar_select %p42, 0, %s41
    %s44 = sadd.s32 1, %s35
    %s45 = scalar_select %p42, %s44, %s35
    %p46 = scmp.ge.s32.totalorder %s45, 2
    %s47 = scalar_select %p46, 0, %s45
    %s48 = ssub.s32 %s35, %s47
    %p49 = scmp.eq.s32.totalorder %s48, 0
    %s51 = sadd.s32 %s50, 1
    %s52 = scalar_select %p49, %s50, %s51
    %p55 = pneg %p49
    %p56 = scmp.eq.s32.totalorder %s28, 3
    %p57 = por %p55, %p56
    %p58 = scmp.ne.s32.totalorder %s50, %s53
    %p59 = scmp.eq.s32.totalorder %s28, 0
    %p60 = por %p58, %p59
    %p61 = scmp.ne.s32.totalorder %s50, %s53
    %p62 = scmp.eq.s32.totalorder %s33, 3
    %p63 = por %p61, %p62
    %p64 = scmp.ne.s32.totalorder %s53, %s54
    %p65 = scmp.eq.s32.totalorder %s33, 0
    %p66 = por %p64, %p65
    %p67 = scmp.ne.s32.totalorder %s53, %s54
    %p68 = scmp.eq.s32.totalorder %s34, 3
    %p69 = por %p67, %p68
    %p71 = scmp.ne.s32.totalorder %s54, %s70
    %p72 = scmp.eq.s32.totalorder %s34, 0
    %p73 = por %p71, %p72
    %s74 = ssub.s32 %s35, %s47
    %p75 = scmp.eq.s32.totalorder %s74, 0
    %s77 = sadd.s32 %s76, 1
    %s78 = scalar_select %p75, %s76, %s77
    %p81 = pneg %p75
    %p82 = scmp.eq.s32.totalorder %s28, 3
    %p83 = por %p81, %p82
    %p84 = scmp.ne.s32.totalorder %s76, %s79
    %p85 = scmp.eq.s32.totalorder %s28, 0
    %p86 = por %p84, %p85
    %p87 = scmp.ne.s32.totalorder %s76, %s79
    %p88 = scmp.eq.s32.totalorder %s33, 3
    %p89 = por %p87, %p88
    %p90 = scmp.ne.s32.totalorder %s79, %s80
    %p91 = scmp.eq.s32.totalorder %s33, 0
    %p92 = por %p90, %p91
    %p93 = scmp.ne.s32.totalorder %s79, %s80
    %p94 = scmp.eq.s32.totalorder %s34, 3
    %p95 = por %p93, %p94
    %p97 = scmp.ne.s32.totalorder %s80, %s96
    %p98 = scmp.eq.s32.totalorder %s34, 0
    %p99 = por %p97, %p98
    %s101 = sadd.s32 %s100, 1
    %p104 = scmp.eq.s32.totalorder %s28, 3
    %p105 = scmp.ne.s32.totalorder %s100, %s102
    %p106 = scmp.eq.s32.totalorder %s28, 0
    %p107 = por %p105, %p106
    %p108 = scmp.ne.s32.totalorder %s100, %s102
    %p109 = scmp.eq.s32.totalorder %s33, 3
    %p110 = por %p108, %p109
    %p111 = scmp.ne.s32.totalorder %s102, %s103
    %p112 = scmp.eq.s32.totalorder %s33, 0
    %p113 = por %p111, %p112
    %p114 = scmp.ne.s32.totalorder %s102, %s103
    %p115 = scmp.eq.s32.totalorder %s34, 3
    %p116 = por %p114, %p115
    %p118 = scmp.ne.s32.totalorder %s103, %s117
    %p119 = scmp.eq.s32.totalorder %s34, 0
    %p120 = por %p118, %p119
    %s122 = sadd.s32 %s121, 1
    %p125 = scmp.eq.s32.totalorder %s28, 3
    %p126 = scmp.ne.s32.totalorder %s121, %s123
    %p127 = scmp.eq.s32.totalorder %s28, 0
    %p128 = por %p126, %p127
    %p129 = scmp.ne.s32.totalorder %s121, %s123
    %p130 = scmp.eq.s32.totalorder %s33, 3
    %p131 = por %p129, %p130
    %p132 = scmp.ne.s32.totalorder %s123, %s124
    %p133 = scmp.eq.s32.totalorder %s33, 0
    %p134 = por %p132, %p133
    %p135 = scmp.ne.s32.totalorder %s123, %s124
    %p136 = scmp.eq.s32.totalorder %s34, 3
    %p137 = por %p135, %p136
    %p139 = scmp.ne.s32.totalorder %s124, %s138
    %p140 = scmp.eq.s32.totalorder %s34, 0
    %p141 = por %p139, %p140
    %s142 = ssub.s32 %s36, %s43
    %p143 = scmp.eq.s32.totalorder %s142, 0
    %s145 = sadd.s32 %s144, 1
    %s146 = scalar_select %p143, %s144, %s145
    %p149 = pneg %p143
    %p150 = scmp.eq.s32.totalorder %s28, 3
    %p151 = por %p149, %p150
    %p152 = scmp.ne.s32.totalorder %s144, %s147
    %p153 = scmp.eq.s32.totalorder %s28, 0
    %p154 = por %p152, %p153
    %p155 = scmp.ne.s32.totalorder %s144, %s147
    %p156 = scmp.eq.s32.totalorder %s33, 3
    %p157 = por %p155, %p156
    %p158 = scmp.ne.s32.totalorder %s147, %s148
    %p159 = scmp.eq.s32.totalorder %s33, 0
    %p160 = por %p158, %p159
    %p161 = scmp.ne.s32.totalorder %s147, %s148
    %p162 = scmp.eq.s32.totalorder %s34, 3
    %p163 = por %p161, %p162
    %p165 = scmp.ne.s32.totalorder %s148, %s164
    %p166 = scmp.eq.s32.totalorder %s34, 0
    %p167 = por %p165, %p166
    %s168 = ssub.s32 %s36, %s43
    %p169 = scmp.eq.s32.totalorder %s168, 0
    %s171 = sadd.s32 %s170, 1
    %s172 = scalar_select %p169, %s170, %s171
    %p175 = pneg %p169
    %p176 = scmp.eq.s32.totalorder %s28, 3
    %p177 = por %p175, %p176
    %p178 = scmp.ne.s32.totalorder %s170, %s173
    %p179 = scmp.eq.s32.totalorder %s28, 0
    %p180 = por %p178, %p179
    %p181 = scmp.ne.s32.totalorder %s170, %s173
    %p182 = scmp.eq.s32.totalorder %s33, 3
    %p183 = por %p181, %p182
    %p184 = scmp.ne.s32.totalorder %s173, %s174
    %p185 = scmp.eq.s32.totalorder %s33, 0
    %p186 = por %p184, %p185
    %p187 = scmp.ne.s32.totalorder %s173, %s174
    %p188 = scmp.eq.s32.totalorder %s34, 3
    %p189 = por %p187, %p188
    %p191 = scmp.ne.s32.totalorder %s174, %s190
    %p192 = scmp.eq.s32.totalorder %s34, 0
    %p193 = por %p191, %p192
    %s194 = ssub.s32 %s36, %s43
    %p195 = scmp.eq.s32.totalorder %s194, 0
    %s197 = sadd.s32 %s196, 1
    %s198 = scalar_select %p195, %s196, %s197
    %p201 = pneg %p195
    %p202 = scmp.eq.s32.totalorder %s28, 3
    %p203 = por %p201, %p202
    %p204 = scmp.ne.s32.totalorder %s196, %s199
    %p205 = scmp.eq.s32.totalorder %s28, 0
    %p206 = por %p204, %p205
    %p207 = scmp.ne.s32.totalorder %s196, %s199
    %p208 = scmp.eq.s32.totalorder %s33, 3
    %p209 = por %p207, %p208
    %p210 = scmp.ne.s32.totalorder %s199, %s200
    %p211 = scmp.eq.s32.totalorder %s33, 0
    %p212 = por %p210, %p211
    %p213 = scmp.ne.s32.totalorder %s199, %s200
    %p214 = scmp.eq.s32.totalorder %s34, 3
    %p215 = por %p213, %p214
    %p217 = scmp.ne.s32.totalorder %s200, %s216
    %p218 = scmp.eq.s32.totalorder %s34, 0
    %p219 = por %p217, %p218
    %s220 = ssub.s32 %s36, %s43
    %p221 = scmp.eq.s32.totalorder %s220, 0
    %s223 = sadd.s32 %s222, 1
    %s224 = scalar_select %p221, %s222, %s223
    %p227 = pneg %p221
    %p228 = scmp.eq.s32.totalorder %s28, 3
    %p229 = por %p227, %p228
    %p230 = scmp.ne.s32.totalorder %s222, %s225
    %p231 = scmp.eq.s32.totalorder %s28, 0
    %p232 = por %p230, %p231
    %p233 = scmp.ne.s32.totalorder %s222, %s225
    %p234 = scmp.eq.s32.totalorder %s33, 3
    %p235 = por %p233, %p234
    %p236 = scmp.ne.s32.totalorder %s225, %s226
    %p237 = scmp.eq.s32.totalorder %s33, 0
    %p238 = por %p236, %p237
    %p239 = scmp.ne.s32.totalorder %s225, %s226
    %p240 = scmp.eq.s32.totalorder %s34, 3
    %p241 = por %p239, %p240
    %p243 = scmp.ne.s32.totalorder %s226, %s242
    %p244 = scmp.eq.s32.totalorder %s34, 0
    %p245 = por %p243, %p244
    %s246 = ssub.s32 %s36, %s43
    %p247 = scmp.eq.s32.totalorder %s246, 0
    %s249 = sadd.s32 %s248, 1
    %s250 = scalar_select %p247, %s248, %s249
    %p253 = pneg %p247
    %p254 = scmp.eq.s32.totalorder %s28, 3
    %p255 = por %p253, %p254
    %p256 = scmp.ne.s32.totalorder %s248, %s251
    %p257 = scmp.eq.s32.totalorder %s28, 0
    %p258 = por %p256, %p257
    %p259 = scmp.ne.s32.totalorder %s248, %s251
    %p260 = scmp.eq.s32.totalorder %s33, 3
    %p261 = por %p259, %p260
    %p262 = scmp.ne.s32.totalorder %s251, %s252
    %p263 = scmp.eq.s32.totalorder %s33, 0
    %p264 = por %p262, %p263
    %p265 = scmp.ne.s32.totalorder %s251, %s252
    %p266 = scmp.eq.s32.totalorder %s34, 3
    %p267 = por %p265, %p266
    %p269 = scmp.ne.s32.totalorder %s252, %s268
    %p270 = scmp.eq.s32.totalorder %s34, 0
    %p271 = por %p269, %p270
    %s272 = ssub.s32 %s36, %s43
    %p273 = scmp.eq.s32.totalorder %s272, 0
    %s275 = sadd.s32 %s274, 1
    %s276 = scalar_select %p273, %s274, %s275
    %p279 = pneg %p273
    %p280 = scmp.eq.s32.totalorder %s28, 3
    %p281 = por %p279, %p280
    %p282 = scmp.ne.s32.totalorder %s274, %s277
    %p283 = scmp.eq.s32.totalorder %s28, 0
    %p284 = por %p282, %p283
    %p285 = scmp.ne.s32.totalorder %s274, %s277
    %p286 = scmp.eq.s32.totalorder %s33, 3
    %p287 = por %p285, %p286
    %p288 = scmp.ne.s32.totalorder %s277, %s278
    %p289 = scmp.eq.s32.totalorder %s33, 0
    %p290 = por %p288, %p289
    %p291 = scmp.ne.s32.totalorder %s277, %s278
    %p292 = scmp.eq.s32.totalorder %s34, 3
    %p293 = por %p291, %p292
    %p295 = scmp.ne.s32.totalorder %s278, %s294
    %p296 = scmp.eq.s32.totalorder %s34, 0
    %p297 = por %p295, %p296
    %s298 = ssub.s32 %s36, %s43
    %p299 = scmp.eq.s32.totalorder %s298, 0
    %s301 = sadd.s32 %s300, 1
    %s302 = scalar_select %p299, %s300, %s301
    %p305 = pneg %p299
    %p306 = scmp.eq.s32.totalorder %s28, 3
    %p307 = por %p305, %p306
    %p308 = scmp.ne.s32.totalorder %s300, %s303
    %p309 = scmp.eq.s32.totalorder %s28, 0
    %p310 = por %p308, %p309
    %p311 = scmp.ne.s32.totalorder %s300, %s303
    %p312 = scmp.eq.s32.totalorder %s33, 3
    %p313 = por %p311, %p312
    %p314 = scmp.ne.s32.totalorder %s303, %s304
    %p315 = scmp.eq.s32.totalorder %s33, 0
    %p316 = por %p314, %p315
    %p317 = scmp.ne.s32.totalorder %s303, %s304
    %p318 = scmp.eq.s32.totalorder %s34, 3
    %p319 = por %p317, %p318
    %p321 = scmp.ne.s32.totalorder %s304, %s320
    %p322 = scmp.eq.s32.totalorder %s34, 0
    %p323 = por %p321, %p322
    %s324 = ssub.s32 %s36, %s43
    %p325 = scmp.eq.s32.totalorder %s324, 0
    %s327 = sadd.s32 %s326, 1
    %s328 = scalar_select %p325, %s326, %s327
    %p331 = pneg %p325
    %p332 = scmp.eq.s32.totalorder %s28, 3
    %p333 = por %p331, %p332
    %p334 = scmp.ne.s32.totalorder %s326, %s329
    %p335 = scmp.eq.s32.totalorder %s28, 0
    %p336 = por %p334, %p335
    %p337 = scmp.ne.s32.totalorder %s326, %s329
    %p338 = scmp.eq.s32.totalorder %s33, 3
    %p339 = por %p337, %p338
    %p340 = scmp.ne.s32.totalorder %s329, %s330
    %p341 = scmp.eq.s32.totalorder %s33, 0
    %p342 = por %p340, %p341
    %p343 = scmp.ne.s32.totalorder %s329, %s330
    %p344 = scmp.eq.s32.totalorder %s34, 3
    %p345 = por %p343, %p344
    %p347 = scmp.ne.s32.totalorder %s330, %s346
    %p348 = scmp.eq.s32.totalorder %s34, 0
    %p349 = por %p347, %p348
    %s350 = ssub.s32 %s36, %s43
    %p351 = scmp.eq.s32.totalorder %s350, 0
    %s353 = sadd.s32 %s352, 1
    %s354 = scalar_select %p351, %s352, %s353
    %p357 = pneg %p351
    %p358 = scmp.eq.s32.totalorder %s28, 3
    %p359 = por %p357, %p358
    %p360 = scmp.ne.s32.totalorder %s352, %s355
    %p361 = scmp.eq.s32.totalorder %s28, 0
    %p362 = por %p360, %p361
    %p363 = scmp.ne.s32.totalorder %s352, %s355
    %p364 = scmp.eq.s32.totalorder %s33, 3
    %p365 = por %p363, %p364
    %p366 = scmp.ne.s32.totalorder %s355, %s356
    %p367 = scmp.eq.s32.totalorder %s33, 0
    %p368 = por %p366, %p367
    %p369 = scmp.ne.s32.totalorder %s355, %s356
    %p370 = scmp.eq.s32.totalorder %s34, 3
    %p371 = por %p369, %p370
    %p373 = scmp.ne.s32.totalorder %s356, %s372
    %p374 = scmp.eq.s32.totalorder %s34, 0
    %p375 = por %p373, %p374
    %s376 = ssub.s32 %s36, %s43
    %p377 = scmp.eq.s32.totalorder %s376, 0
    %s379 = sadd.s32 %s378, 1
    %s380 = scalar_select %p377, %s378, %s379
    %p383 = pneg %p377
    %p384 = scmp.eq.s32.totalorder %s28, 3
    %p385 = por %p383, %p384
    %p386 = scmp.ne.s32.totalorder %s378, %s381
    %p387 = scmp.eq.s32.totalorder %s28, 0
    %p388 = por %p386, %p387
    %p389 = scmp.ne.s32.totalorder %s378, %s381
    %p390 = scmp.eq.s32.totalorder %s33, 3
    %p391 = por %p389, %p390
    %p392 = scmp.ne.s32.totalorder %s381, %s382
    %p393 = scmp.eq.s32.totalorder %s33, 0
    %p394 = por %p392, %p393
    %p395 = scmp.ne.s32.totalorder %s381, %s382
    %p396 = scmp.eq.s32.totalorder %s34, 3
    %p397 = por %p395, %p396
    %p399 = scmp.ne.s32.totalorder %s382, %s398
    %p400 = scmp.eq.s32.totalorder %s34, 0
    %p401 = por %p399, %p400
    %s402 = ssub.s32 %s36, %s43
    %p403 = scmp.eq.s32.totalorder %s402, 0
    %s405 = sadd.s32 %s404, 1
    %s406 = scalar_select %p403, %s404, %s405
    %p409 = pneg %p403
    %p410 = scmp.eq.s32.totalorder %s28, 3
    %p411 = por %p409, %p410
    %p412 = scmp.ne.s32.totalorder %s404, %s407
    %p413 = scmp.eq.s32.totalorder %s28, 0
    %p414 = por %p412, %p413
    %p415 = scmp.ne.s32.totalorder %s404, %s407
    %p416 = scmp.eq.s32.totalorder %s33, 3
    %p417 = por %p415, %p416
    %p418 = scmp.ne.s32.totalorder %s407, %s408
    %p419 = scmp.eq.s32.totalorder %s33, 0
    %p420 = por %p418, %p419
    %p421 = scmp.ne.s32.totalorder %s407, %s408
    %p422 = scmp.eq.s32.totalorder %s34, 3
    %p423 = por %p421, %p422
    %p425 = scmp.ne.s32.totalorder %s408, %s424
    %p426 = scmp.eq.s32.totalorder %s34, 0
    %p427 = por %p425, %p426
    %s428 = ssub.s32 %s36, %s43
    %p429 = scmp.eq.s32.totalorder %s428, 0
    %s431 = sadd.s32 %s430, 1
    %s432 = scalar_select %p429, %s430, %s431
    %p435 = pneg %p429
    %p436 = scmp.eq.s32.totalorder %s28, 3
    %p437 = por %p435, %p436
    %p438 = scmp.ne.s32.totalorder %s430, %s433
    %p439 = scmp.eq.s32.totalorder %s28, 0
    %p440 = por %p438, %p439
    %p441 = scmp.ne.s32.totalorder %s430, %s433
    %p442 = scmp.eq.s32.totalorder %s33, 3
    %p443 = por %p441, %p442
    %p444 = scmp.ne.s32.totalorder %s433, %s434
    %p445 = scmp.eq.s32.totalorder %s33, 0
    %p446 = por %p444, %p445
    %p447 = scmp.ne.s32.totalorder %s433, %s434
    %p448 = scmp.eq.s32.totalorder %s34, 3
    %p449 = por %p447, %p448
    %p451 = scmp.ne.s32.totalorder %s434, %s450
    %p452 = scmp.eq.s32.totalorder %s34, 0
    %p453 = por %p451, %p452
    %s455 = sadd.s32 %s454, 1
    %p458 = scmp.eq.s32.totalorder %s28, 3
    %p459 = scmp.ne.s32.totalorder %s454, %s456
    %p460 = scmp.eq.s32.totalorder %s28, 0
    %p461 = por %p459, %p460
    %p462 = scmp.ne.s32.totalorder %s454, %s456
    %p463 = scmp.eq.s32.totalorder %s33, 3
    %p464 = por %p462, %p463
    %p465 = scmp.ne.s32.totalorder %s456, %s457
    %p466 = scmp.eq.s32.totalorder %s33, 0
    %p467 = por %p465, %p466
    %p468 = scmp.ne.s32.totalorder %s456, %s457
    %p469 = scmp.eq.s32.totalorder %s34, 3
    %p470 = por %p468, %p469
    %p472 = scmp.ne.s32.totalorder %s457, %s471
    %p473 = scmp.eq.s32.totalorder %s34, 0
    %p474 = por %p472, %p473
    %s476 = sadd.s32 %s475, 1
    %p479 = scmp.eq.s32.totalorder %s28, 3
    %p480 = scmp.ne.s32.totalorder %s475, %s477
    %p481 = scmp.eq.s32.totalorder %s28, 0
    %p482 = por %p480, %p481
    %p483 = scmp.ne.s32.totalorder %s475, %s477
    %p484 = scmp.eq.s32.totalorder %s33, 3
    %p485 = por %p483, %p484
    %p486 = scmp.ne.s32.totalorder %s477, %s478
    %p487 = scmp.eq.s32.totalorder %s33, 0
    %p488 = por %p486, %p487
    %p489 = scmp.ne.s32.totalorder %s477, %s478
    %p490 = scmp.eq.s32.totalorder %s34, 3
    %p491 = por %p489, %p490
    %p493 = scmp.ne.s32.totalorder %s478, %s492
    %p494 = scmp.eq.s32.totalorder %s34, 0
    %p495 = por %p493, %p494
    %s497 = sadd.s32 %s496, 1
    %p500 = scmp.eq.s32.totalorder %s28, 3
    %p501 = scmp.ne.s32.totalorder %s496, %s498
    %p502 = scmp.eq.s32.totalorder %s28, 0
    %p503 = por %p501, %p502
    %p504 = scmp.ne.s32.totalorder %s496, %s498
    %p505 = scmp.eq.s32.totalorder %s33, 3
    %p506 = por %p504, %p505
    %p507 = scmp.ne.s32.totalorder %s498, %s499
    %p508 = scmp.eq.s32.totalorder %s33, 0
    %p509 = por %p507, %p508
    %p510 = scmp.ne.s32.totalorder %s498, %s499
    %p511 = scmp.eq.s32.totalorder %s34, 3
    %p512 = por %p510, %p511
    %p514 = scmp.ne.s32.totalorder %s499, %s513
    %p515 = scmp.eq.s32.totalorder %s34, 0
    %p516 = por %p514, %p515
    %s518 = sadd.s32 %s517, 1
    %p521 = scmp.eq.s32.totalorder %s28, 3
    %p522 = scmp.ne.s32.totalorder %s517, %s519
    %p523 = scmp.eq.s32.totalorder %s28, 0
    %p524 = por %p522, %p523
    %p525 = scmp.ne.s32.totalorder %s517, %s519
    %p526 = scmp.eq.s32.totalorder %s33, 3
    %p527 = por %p525, %p526
    %p528 = scmp.ne.s32.totalorder %s519, %s520
    %p529 = scmp.eq.s32.totalorder %s33, 0
    %p530 = por %p528, %p529
    %p531 = scmp.ne.s32.totalorder %s519, %s520
    %p532 = scmp.eq.s32.totalorder %s34, 3
    %p533 = por %p531, %p532
    %p535 = scmp.ne.s32.totalorder %s520, %s534
    %p536 = scmp.eq.s32.totalorder %s34, 0
    %p537 = por %p535, %p536
    %s538 = ssub.s32 %s35, %s47
    %p539 = scmp.eq.s32.totalorder %s538, 0
    %s541 = sadd.s32 %s540, 1
    %s542 = scalar_select %p539, %s540, %s541
    %p545 = pneg %p539
    %p546 = scmp.eq.s32.totalorder %s28, 3
    %p547 = por %p545, %p546
    %p548 = scmp.ne.s32.totalorder %s540, %s543
    %p549 = scmp.eq.s32.totalorder %s28, 0
    %p550 = por %p548, %p549
    %p551 = scmp.ne.s32.totalorder %s540, %s543
    %p552 = scmp.eq.s32.totalorder %s33, 3
    %p553 = por %p551, %p552
    %p554 = scmp.ne.s32.totalorder %s543, %s544
    %p555 = scmp.eq.s32.totalorder %s33, 0
    %p556 = por %p554, %p555
    %p557 = scmp.ne.s32.totalorder %s543, %s544
    %p558 = scmp.eq.s32.totalorder %s34, 3
    %p559 = por %p557, %p558
    %p561 = scmp.ne.s32.totalorder %s544, %s560
    %p562 = scmp.eq.s32.totalorder %s34, 0
    %p563 = por %p561, %p562
    %p564 = scmp.le.s32.totalorder 1, %s28
    %p565 = scmp.lt.s32.totalorder %s28, 5
    %p566 = pnand %p564, %p565
    %p567 = pneg %p566
    // Predicated region
    $region9: #{bert_classifier_forward.1} parent=5 // pred_check
      _
    $region10: #{bert_classifier_forward.1} parent=5 // pred_check_branch
      %569 = sbr.rel (%p566) target = $region12
    $region11: #{bert_classifier_forward.1} parent=5 // pred_region
      %s570 = ssub.s32 %s28, 1
      // Predicated region
      $region13: #{bert_classifier_forward.1} parent=11 // pred_check
        %p571 = pneg %p113
      $region14: #{bert_classifier_forward.1} parent=11 // pred_check_branch
        %573 = sbr.rel (%p571) target = $region16
      $region15: #{bert_classifier_forward.1} parent=11 // pred_region
        _
      $region16: #{bert_classifier_forward.1} parent=11 // pred_fallthru
        _
      // Predicated region
      $region17: #{bert_classifier_forward.1} parent=11 // pred_check
        %p574 = pneg %p134
      $region18: #{bert_classifier_forward.1} parent=11 // pred_check_branch
        %576 = sbr.rel (%p574) target = $region20
      $region19: #{bert_classifier_forward.1} parent=11 // pred_region
        _
      $region20: #{bert_classifier_forward.1} parent=11 // pred_fallthru
        _
      // Predicated region
      $region21: #{bert_classifier_forward.1} parent=11 // pred_check
        %p577 = pneg %p467
      $region22: #{bert_classifier_forward.1} parent=11 // pred_check_branch
        %579 = sbr.rel (%p577) target = $region24
      $region23: #{bert_classifier_forward.1} parent=11 // pred_region
        _
      $region24: #{bert_classifier_forward.1} parent=11 // pred_fallthru
        _
      // Predicated region
      $region25: #{bert_classifier_forward.1} parent=11 // pred_check
        %p580 = pneg %p488
      $region26: #{bert_classifier_forward.1} parent=11 // pred_check_branch
        %582 = sbr.rel (%p580) target = $region28
      $region27: #{bert_classifier_forward.1} parent=11 // pred_region
        _
      $region28: #{bert_classifier_forward.1} parent=11 // pred_fallthru
        _
      // Predicated region
      $region29: #{bert_classifier_forward.1} parent=11 // pred_check
        %p583 = pneg %p509
      $region30: #{bert_classifier_forward.1} parent=11 // pred_check_branch
        %585 = sbr.rel (%p583) target = $region32
      $region31: #{bert_classifier_forward.1} parent=11 // pred_region
        _
      $region32: #{bert_classifier_forward.1} parent=11 // pred_fallthru
        _
      // Predicated region
      $region33: #{bert_classifier_forward.1} parent=11 // pred_check
        %p586 = pneg %p530
      $region34: #{bert_classifier_forward.1} parent=11 // pred_check_branch
        %588 = sbr.rel (%p586) target = $region36
      $region35: #{bert_classifier_forward.1} parent=11 // pred_region
        _
      $region36: #{bert_classifier_forward.1} parent=11 // pred_fallthru
        _
    $region12: #{bert_classifier_forward.1} parent=5 // pred_fallthru
      _
    %p589 = scmp.lt.s32.totalorder %s28, 4
    // Predicated region
    $region37: #{bert_classifier_forward.1} parent=5 // pred_check
      %p590 = pneg %p589
    $region38: #{bert_classifier_forward.1} parent=5 // pred_check_branch
      %592 = sbr.rel (%p590) target = $region40
    $region39: #{bert_classifier_forward.1} parent=5 // pred_region
      // Predicated region
      $region41: #{bert_classifier_forward.1} parent=39 // pred_check
        %p593 = pneg %p60
      $region42: #{bert_classifier_forward.1} parent=39 // pred_check_branch
        %595 = sbr.rel (%p593) target = $region44
      $region43: #{bert_classifier_forward.1} parent=39 // pred_region
        %p596 = scmp.lt.s32.totalorder %s35, 1
        %s597 = scalar_select %p596, %s35, 1
        %s598 = smul.addr %s597, 16
        %s599 = smul.addr %s598, 8
        %s600 = scalar_lea.vmem %s0, %s599
      $region44: #{bert_classifier_forward.1} parent=39 // pred_fallthru
        _
      // Predicated region
      $region45: #{bert_classifier_forward.1} parent=39 // pred_check
        %p601 = pneg %p86
      $region46: #{bert_classifier_forward.1} parent=39 // pred_check_branch
        %603 = sbr.rel (%p601) target = $region48
      $region47: #{bert_classifier_forward.1} parent=39 // pred_region
        %p604 = scmp.lt.s32.totalorder %s35, 1
        %s605 = scalar_select %p604, %s35, 1
        %s606 = scalar_lea.vmem %s1, %s605
      $region48: #{bert_classifier_forward.1} parent=39 // pred_fallthru
        _
      // Predicated region
      $region49: #{bert_classifier_forward.1} parent=39 // pred_check
        %p607 = pneg %p154
      $region50: #{bert_classifier_forward.1} parent=39 // pred_check_branch
        %609 = sbr.rel (%p607) target = $region52
      $region51: #{bert_classifier_forward.1} parent=39 // pred_region
        %p610 = scmp.lt.s32.totalorder %s36, 1
        %s611 = scalar_select %p610, %s36, 1
        %s612 = smul.addr %s611, 48
        %s613 = smul.addr %s612, 4
        %s614 = scalar_lea.vmem %s4, %s613
      $region52: #{bert_classifier_forward.1} parent=39 // pred_fallthru
        _
      // Predicated region
      $region53: #{bert_classifier_forward.1} parent=39 // pred_check
        %p615 = pneg %p180
      $region54: #{bert_classifier_forward.1} parent=39 // pred_check_branch
        %617 = sbr.rel (%p615) target = $region56
      $region55: #{bert_classifier_forward.1} parent=39 // pred_region
        %p618 = scmp.lt.s32.totalorder %s36, 1
        %s619 = scalar_select %p618, %s36, 1
        %s620 = smul.addr %s619, 3
        %s621 = scalar_lea.vmem %s5, %s620
      $region56: #{bert_classifier_forward.1} parent=39 // pred_fallthru
        _
      // Predicated region
      $region57: #{bert_classifier_forward.1} parent=39 // pred_check
        %p622 = pneg %p206
      $region58: #{bert_classifier_forward.1} parent=39 // pred_check_branch
        %624 = sbr.rel (%p622) target = $region60
      $region59: #{bert_classifier_forward.1} parent=39 // pred_region
        %p625 = scmp.lt.s32.totalorder %s36, 1
        %s626 = scalar_select %p625, %s36, 1
        %s627 = smul.addr %s626, 16
        %s628 = smul.addr %s627, 4
        %s629 = scalar_lea.vmem %s6, %s628
      $region60: #{bert_classifier_forward.1} parent=39 // pred_fallthru
        _
      // Predicated region
      $region61: #{bert_classifier_forward.1} parent=39 // pred_check
        %p630 = pneg %p232
      $region62: #{bert_classifier_forward.1} parent=39 // pred_check_branch
        %632 = sbr.rel (%p630) target = $region64
      $region63: #{bert_classifier_forward.1} parent=39 // pred_region
        %p633 = scmp.lt.s32.totalorder %s36, 1
        %s634 = scalar_select %p633, %s36, 1
        %s635 = scalar_lea.vmem %s7, %s634
      $region64: #{bert_classifier_forward.1} parent=39 // pred_fallthru
        _
      // Predicated region
      $region65: #{bert_classifier_forward.1} parent=39 // pred_check
        %p636 = pneg %p258
      $region66: #{bert_classifier_forward.1} parent=39 // pred_check_branch
        %638 = sbr.rel (%p636) target = $region68
      $region67: #{bert_classifier_forward.1} parent=39 // pred_region
        %p639 = scmp.lt.s32.totalorder %s36, 1
        %s640 = scalar_select %p639, %s36, 1
        %s641 = scalar_lea.vmem %s8, %s640
      $region68: #{bert_classifier_forward.1} parent=39 // pred_fallthru
        _
      // Predicated region
      $region69: #{bert_classifier_forward.1} parent=39 // pred_check
        %p642 = pneg %p284
      $region70: #{bert_classifier_forward.1} parent=39 // pred_check_branch
        %644 = sbr.rel (%p642) target = $region72
      $region71: #{bert_classifier_forward.1} parent=39 // pred_region
        %p645 = scmp.lt.s32.totalorder %s36, 1
        %s646 = scalar_select %p645, %s36, 1
        %s647 = scalar_lea.vmem %s9, %s646
      $region72: #{bert_classifier_forward.1} parent=39 // pred_fallthru
        _
      // Predicated region
      $region73: #{bert_classifier_forward.1} parent=39 // pred_check
        %p648 = pneg %p310
      $region74: #{bert_classifier_forward.1} parent=39 // pred_check_branch
        %650 = sbr.rel (%p648) target = $region76
      $region75: #{bert_classifier_forward.1} parent=39 // pred_region
        %p651 = scmp.lt.s32.totalorder %s36, 1
        %s652 = scalar_select %p651, %s36, 1
        %s653 = smul.addr %s652, 64
        %s654 = smul.addr %s653, 4
        %s655 = scalar_lea.vmem %s10, %s654
      $region76: #{bert_classifier_forward.1} parent=39 // pred_fallthru
        _
      // Predicated region
      $region77: #{bert_classifier_forward.1} parent=39 // pred_check
        %p656 = pneg %p336
      $region78: #{bert_classifier_forward.1} parent=39 // pred_check_branch
        %658 = sbr.rel (%p656) target = $region80
      $region79: #{bert_classifier_forward.1} parent=39 // pred_region
        %p659 = scmp.lt.s32.totalorder %s36, 1
        %s660 = scalar_select %p659, %s36, 1
        %s661 = smul.addr %s660, 4
        %s662 = scalar_lea.vmem %s11, %s661
      $region80: #{bert_classifier_forward.1} parent=39 // pred_fallthru
        _
      // Predicated region
      $region81: #{bert_classifier_forward.1} parent=39 // pred_check
        %p663 = pneg %p362
      $region82: #{bert_classifier_forward.1} parent=39 // pred_check_branch
        %665 = sbr.rel (%p663) target = $region84
      $region83: #{bert_classifier_forward.1} parent=39 // pred_region
        %p666 = scmp.lt.s32.totalorder %s36, 1
        %s667 = scalar_select %p666, %s36, 1
        %s668 = smul.addr %s667, 64
        %s669 = smul.addr %s668, 4
        %s670 = scalar_lea.vmem %s12, %s669
      $region84: #{bert_classifier_forward.1} parent=39 // pred_fallthru
        _
      // Predicated region
      $region85: #{bert_classifier_forward.1} parent=39 // pred_check
        %p671 = pneg %p388
      $region86: #{bert_classifier_forward.1} parent=39 // pred_check_branch
        %673 = sbr.rel (%p671) target = $region88
      $region87: #{bert_classifier_forward.1} parent=39 // pred_region
        %p674 = scmp.lt.s32.totalorder %s36, 1
        %s675 = scalar_select %p674, %s36, 1
        %s676 = scalar_lea.vmem %s13, %s675
      $region88: #{bert_classifier_forward.1} parent=39 // pred_fallthru
        _
      // Predicated region
      $region89: #{bert_classifier_forward.1} parent=39 // pred_check
        %p677 = pneg %p414
      $region90: #{bert_classifier_forward.1} parent=39 // pred_check_branch
        %679 = sbr.rel (%p677) target = $region92
      $region91: #{bert_classifier_forward.1} parent=39 // pred_region
        %p680 = scmp.lt.s32.totalorder %s36, 1
        %s681 = scalar_select %p680, %s36, 1
        %s682 = scalar_lea.vmem %s14, %s681
      $region92: #{bert_classifier_forward.1} parent=39 // pred_fallthru
        _
      // Predicated region
      $region93: #{bert_classifier_forward.1} parent=39 // pred_check
        %p683 = pneg %p440
      $region94: #{bert_classifier_forward.1} parent=39 // pred_check_branch
        %685 = sbr.rel (%p683) target = $region96
      $region95: #{bert_classifier_forward.1} parent=39 // pred_region
        %p686 = scmp.lt.s32.totalorder %s36, 1
        %s687 = scalar_select %p686, %s36, 1
        %s688 = scalar_lea.vmem %s15, %s687
      $region96: #{bert_classifier_forward.1} parent=39 // pred_fallthru
        _
    $region40: #{bert_classifier_forward.1} parent=5 // pred_fallthru
      _
    %p689 = scmp.le.s32.totalorder 1, %s28
    %p690 = scmp.lt.s32.totalorder %s28, 5
    %p691 = pnand %p689, %p690
    %p692 = pneg %p691
    // Predicated region
    $region97: #{bert_classifier_forward.1} parent=5 // pred_check
      _
    $region98: #{bert_classifier_forward.1} parent=5 // pred_check_branch
      %694 = sbr.rel (%p691) target = $region100
    $region99: #{bert_classifier_forward.1} parent=5 // pred_region
      %s695 = ssub.s32 %s28, 1
      %p696 = scmp.lt.s32.totalorder %s37, 1
      %s697 = scalar_select %p696, %s37, 1
      %s698 = smul.addr %s697, 16
      %s699 = smul.addr %s698, 8
      %s700 = scalar_lea.vmem %s0, %s699
      %p701 = pneg %p66
      %p702 = pneg %p63
      %p703 = scmp.lt.s32.totalorder %s37, 1
      %s704 = scalar_select %p703, %s37, 1
      %s705 = scalar_lea.vmem %s1, %s704
      %p706 = pneg %p92
      %p707 = pneg %p89
      %p708 = pneg %p113
      %p709 = pneg %p110
      %p710 = pneg %p134
      %p711 = pneg %p131
      %p712 = scmp.lt.s32.totalorder %s38, 1
      %s713 = scalar_select %p712, %s38, 1
      %s714 = smul.addr %s713, 48
      %s715 = smul.addr %s714, 4
      %s716 = scalar_lea.vmem %s4, %s715
      %p717 = pneg %p160
      %p718 = pneg %p157
      %p719 = scmp.lt.s32.totalorder %s38, 1
      %s720 = scalar_select %p719, %s38, 1
      %s721 = smul.addr %s720, 3
      %s722 = scalar_lea.vmem %s5, %s721
      %p723 = pneg %p186
      %p724 = pneg %p183
      %p725 = scmp.lt.s32.totalorder %s38, 1
      %s726 = scalar_select %p725, %s38, 1
      %s727 = smul.addr %s726, 16
      %s728 = smul.addr %s727, 4
      %s729 = scalar_lea.vmem %s6, %s728
      %p730 = pneg %p212
      %p731 = pneg %p209
      %p732 = scmp.lt.s32.totalorder %s38, 1
      %s733 = scalar_select %p732, %s38, 1
      %s734 = scalar_lea.vmem %s7, %s733
      %p735 = pneg %p238
      %p736 = pneg %p235
      %p737 = scmp.lt.s32.totalorder %s38, 1
      %s738 = scalar_select %p737, %s38, 1
      %s739 = scalar_lea.vmem %s8, %s738
      %p740 = pneg %p264
      %p741 = pneg %p261
      %p742 = scmp.lt.s32.totalorder %s38, 1
      %s743 = scalar_select %p742, %s38, 1
      %s744 = scalar_lea.vmem %s9, %s743
      %p745 = pneg %p290
      %p746 = pneg %p287
      %p747 = scmp.lt.s32.totalorder %s38, 1
      %s748 = scalar_select %p747, %s38, 1
      %s749 = smul.addr %s748, 64
      %s750 = smul.addr %s749, 4
      %s751 = scalar_lea.vmem %s10, %s750
      %p752 = pneg %p316
      %p753 = pneg %p313
      %p754 = scmp.lt.s32.totalorder %s38, 1
      %s755 = scalar_select %p754, %s38, 1
      %s756 = smul.addr %s755, 4
      %s757 = scalar_lea.vmem %s11, %s756
      %p758 = pneg %p342
      %p759 = pneg %p339
      %p760 = scmp.lt.s32.totalorder %s38, 1
      %s761 = scalar_select %p760, %s38, 1
      %s762 = smul.addr %s761, 64
      %s763 = smul.addr %s762, 4
      %s764 = scalar_lea.vmem %s12, %s763
      %p765 = pneg %p368
      %p766 = pneg %p365
      %p767 = scmp.lt.s32.totalorder %s38, 1
      %s768 = scalar_select %p767, %s38, 1
      %s769 = scalar_lea.vmem %s13, %s768
      %p770 = pneg %p394
      %p771 = pneg %p391
      %p772 = scmp.lt.s32.totalorder %s38, 1
      %s773 = scalar_select %p772, %s38, 1
      %s774 = scalar_lea.vmem %s14, %s773
      %p775 = pneg %p420
      %p776 = pneg %p417
      %p777 = scmp.lt.s32.totalorder %s38, 1
      %s778 = scalar_select %p777, %s38, 1
      %s779 = scalar_lea.vmem %s15, %s778
      %p780 = pneg %p446
      %p781 = pneg %p443
      %p782 = pneg %p467
      %p783 = pneg %p464
      %p784 = pneg %p488
      %p785 = pneg %p485
      %p786 = pneg %p509
      %p787 = pneg %p506
      %p788 = pneg %p530
      %p789 = pneg %p527
      %p790 = pneg %p556
      %p791 = pneg %p553
      %p792 = scmp.lt.s32.totalorder %s37, 1
      %s793 = scalar_select %p792, %s37, 1
      %s794 = scalar_lea.vmem %s20, %s793
      %p795 = scmp.lt.s32.totalorder %s37, 1
      %s796 = scalar_select %p795, %s37, 1
      %s797 = smul.addr %s796, 16
      %s798 = smul.addr %s797, 8
      %s799 = scalar_lea.vmem %s0, %s798
      %p800 = scmp.lt.s32.totalorder %s37, 1
      %s801 = scalar_select %p800, %s37, 1
      %s802 = scalar_lea.vmem %s1, %s801
      %p803 = scmp.lt.s32.totalorder %s38, 1
      %s804 = scalar_select %p803, %s38, 1
      %s805 = smul.addr %s804, 48
      %s806 = smul.addr %s805, 4
      %s807 = scalar_lea.vmem %s4, %s806
      %p808 = scmp.lt.s32.totalorder %s38, 1
      %s809 = scalar_select %p808, %s38, 1
      %s810 = smul.addr %s809, 3
      %s811 = scalar_lea.vmem %s5, %s810
      %p812 = scmp.lt.s32.totalorder %s38, 1
      %s813 = scalar_select %p812, %s38, 1
      %s814 = smul.addr %s813, 16
      %s815 = smul.addr %s814, 4
      %s816 = scalar_lea.vmem %s6, %s815
      %p817 = scmp.lt.s32.totalorder %s38, 1
      %s818 = scalar_select %p817, %s38, 1
      %s819 = scalar_lea.vmem %s7, %s818
      %p820 = scmp.lt.s32.totalorder %s38, 1
      %s821 = scalar_select %p820, %s38, 1
      %s822 = scalar_lea.vmem %s8, %s821
      %p823 = scmp.lt.s32.totalorder %s38, 1
      %s824 = scalar_select %p823, %s38, 1
      %s825 = scalar_lea.vmem %s9, %s824
      %p826 = scmp.lt.s32.totalorder %s38, 1
      %s827 = scalar_select %p826, %s38, 1
      %s828 = smul.addr %s827, 64
      %s829 = smul.addr %s828, 4
      %s830 = scalar_lea.vmem %s10, %s829
      %p831 = scmp.lt.s32.totalorder %s38, 1
      %s832 = scalar_select %p831, %s38, 1
      %s833 = smul.addr %s832, 4
      %s834 = scalar_lea.vmem %s11, %s833
      %p835 = scmp.lt.s32.totalorder %s38, 1
      %s836 = scalar_select %p835, %s38, 1
      %s837 = smul.addr %s836, 64
      %s838 = smul.addr %s837, 4
      %s839 = scalar_lea.vmem %s12, %s838
      %p840 = scmp.lt.s32.totalorder %s38, 1
      %s841 = scalar_select %p840, %s38, 1
      %s842 = scalar_lea.vmem %s13, %s841
      %p843 = scmp.lt.s32.totalorder %s38, 1
      %s844 = scalar_select %p843, %s38, 1
      %s845 = scalar_lea.vmem %s14, %s844
      %p846 = scmp.lt.s32.totalorder %s38, 1
      %s847 = scalar_select %p846, %s38, 1
      %s848 = scalar_lea.vmem %s15, %s847
      %p849 = scmp.lt.s32.totalorder %s37, 1
      %s850 = scalar_select %p849, %s37, 1
      %s851 = scalar_lea.vmem %s20, %s850
      %p853 = scmp.eq.s32.totalorder %s38, 0
      // Predicated region
      $region101: #{bert_classifier_forward.1} parent=99 // pred_check
        %p854 = pneg %p853
      $region102: #{bert_classifier_forward.1} parent=99 // pred_check_branch
        %856 = sbr.rel (%p854) target = $region104
      $region103: #{bert_classifier_forward.1} parent=99 // pred_region
        %v857 = vld [vmem:[%s799] sm:$0xff]
        %v858 = vld [vmem:[%s799 + $0x8] sm:$0xff]
        %v859 = vld [vmem:[%s799 + $0x10] sm:$0xff]
        %v860 = vld [vmem:[%s799 + $0x18] sm:$0xff]
        %v861 = vld [vmem:[%s799 + $0x20] sm:$0xff]
        %v862 = vld [vmem:[%s799 + $0x28] sm:$0xff]
        %v863 = vld [vmem:[%s799 + $0x30] sm:$0xff]
        %v864 = vld [vmem:[%s799 + $0x38] sm:$0xff]
        %v865 = vld [vmem:[%s799 + $0x40] sm:$0xff]
        %v866 = vld [vmem:[%s799 + $0x48] sm:$0xff]
        %v867 = vld [vmem:[%s799 + $0x50] sm:$0xff]
        %v868 = vld [vmem:[%s799 + $0x58] sm:$0xff]
        %v869 = vld [vmem:[%s799 + $0x60] sm:$0xff]
        %v870 = vld [vmem:[%s799 + $0x68] sm:$0xff]
        %v871 = vld [vmem:[%s799 + $0x70] sm:$0xff]
        %v872 = vld [vmem:[%s799 + $0x78] sm:$0xff]
        %v873 = vld [vmem:[%s2] sm:$0x1]
        %v874 = vld [vmem:[%s3] sm:$0x1]
        %875 = vadd.xlane.f32.xlu0 %v857
        %v876 = vpop.xlane.xlu0 %875
        %877 = vadd.xlane.f32.xlu0 %v858
        %v878 = vpop.xlane.xlu0 %877
        %879 = vadd.xlane.f32.xlu0 %v859
        %v880 = vpop.xlane.xlu0 %879
        %881 = vadd.xlane.f32.xlu0 %v860
        %v882 = vpop.xlane.xlu0 %881
        %883 = vadd.xlane.f32.xlu0 %v861
        %v884 = vpop.xlane.xlu0 %883
        %885 = vadd.xlane.f32.xlu0 %v862
        %v886 = vpop.xlane.xlu0 %885
        %887 = vadd.xlane.f32.xlu0 %v863
        %v888 = vpop.xlane.xlu0 %887
        %889 = vadd.xlane.f32.xlu0 %v864
        %v890 = vpop.xlane.xlu0 %889
        %891 = vadd.xlane.f32.xlu0 %v865
        %v892 = vpop.xlane.xlu0 %891
        %893 = vadd.xlane.f32.xlu0 %v866
        %v894 = vpop.xlane.xlu0 %893
        %895 = vadd.xlane.f32.xlu0 %v867
        %v896 = vpop.xlane.xlu0 %895
        %897 = vadd.xlane.f32.xlu0 %v868
        %v898 = vpop.xlane.xlu0 %897
        %899 = vadd.xlane.f32.xlu0 %v869
        %v900 = vpop.xlane.xlu0 %899
        %901 = vadd.xlane.f32.xlu0 %v870
        %v902 = vpop.xlane.xlu0 %901
        %903 = vadd.xlane.f32.xlu0 %v871
        %v904 = vpop.xlane.xlu0 %903
        %905 = vadd.xlane.f32.xlu0 %v872
        %v906 = vpop.xlane.xlu0 %905
        %v907 = vrcp.pop 128.0
        %v908 = vmul.f32 %v876, %v907
        %v909 = vmul.f32 %v878, %v907
        %v910 = vmul.f32 %v880, %v907
        %v911 = vmul.f32 %v882, %v907
        %v912 = vmul.f32 %v884, %v907
        %v913 = vmul.f32 %v886, %v907
        %v914 = vmul.f32 %v888, %v907
        %v915 = vmul.f32 %v890, %v907
        %v916 = vmul.f32 %v892, %v907
        %v917 = vmul.f32 %v894, %v907
        %v918 = vmul.f32 %v896, %v907
        %v919 = vmul.f32 %v898, %v907
        %v920 = vmul.f32 %v900, %v907
        %v921 = vmul.f32 %v902, %v907
        %v922 = vmul.f32 %v904, %v907
        %v923 = vmul.f32 %v906, %v907
        %v924 = vsub.f32 %v857, %v908
        %v925 = vsub.f32 %v858, %v909
        %v926 = vsub.f32 %v859, %v910
        %v927 = vsub.f32 %v860, %v911
        %v928 = vsub.f32 %v861, %v912
        %v929 = vsub.f32 %v862, %v913
        %v930 = vsub.f32 %v863, %v914
        %v931 = vsub.f32 %v864, %v915
        %v932 = vsub.f32 %v865, %v916
        %v933 = vsub.f32 %v866, %v917
        %v934 = vsub.f32 %v867, %v918
        %v935 = vsub.f32 %v868, %v919
        %v936 = vsub.f32 %v869, %v920
        %v937 = vsub.f32 %v870, %v921
        %v938 = vsub.f32 %v871, %v922
        %v939 = vsub.f32 %v872, %v923
        %v940 = vmul.f32 %v924, %v924
        %v941 = vmul.f32 %v925, %v925
        %v942 = vmul.f32 %v926, %v926
        %v943 = vmul.f32 %v927, %v927
        %v944 = vmul.f32 %v928, %v928
        %v945 = vmul.f32 %v929, %v929
        %v946 = vmul.f32 %v930, %v930
        %v947 = vmul.f32 %v931, %v931
        %v948 = vmul.f32 %v932, %v932
        %v949 = vmul.f32 %v933, %v933
        %v950 = vmul.f32 %v934, %v934
        %v951 = vmul.f32 %v935, %v935
        %v952 = vmul.f32 %v936, %v936
        %v953 = vmul.f32 %v937, %v937
        %v954 = vmul.f32 %v938, %v938
        %v955 = vmul.f32 %v939, %v939
        %956 = vadd.xlane.f32.xlu0 %v940
        %v957 = vpop.xlane.xlu0 %956
        %958 = vadd.xlane.f32.xlu0 %v941
        %v959 = vpop.xlane.xlu0 %958
        %960 = vadd.xlane.f32.xlu0 %v942
        %v961 = vpop.xlane.xlu0 %960
        %962 = vadd.xlane.f32.xlu0 %v943
        %v963 = vpop.xlane.xlu0 %962
        %964 = vadd.xlane.f32.xlu0 %v944
        %v965 = vpop.xlane.xlu0 %964
        %966 = vadd.xlane.f32.xlu0 %v945
        %v967 = vpop.xlane.xlu0 %966
        %968 = vadd.xlane.f32.xlu0 %v946
        %v969 = vpop.xlane.xlu0 %968
        %970 = vadd.xlane.f32.xlu0 %v947
        %v971 = vpop.xlane.xlu0 %970
        %972 = vadd.xlane.f32.xlu0 %v948
        %v973 = vpop.xlane.xlu0 %972
        %974 = vadd.xlane.f32.xlu0 %v949
        %v975 = vpop.xlane.xlu0 %974
        %976 = vadd.xlane.f32.xlu0 %v950
        %v977 = vpop.xlane.xlu0 %976
        %978 = vadd.xlane.f32.xlu0 %v951
        %v979 = vpop.xlane.xlu0 %978
        %980 = vadd.xlane.f32.xlu0 %v952
        %v981 = vpop.xlane.xlu0 %980
        %982 = vadd.xlane.f32.xlu0 %v953
        %v983 = vpop.xlane.xlu0 %982
        %984 = vadd.xlane.f32.xlu0 %v954
        %v985 = vpop.xlane.xlu0 %984
        %986 = vadd.xlane.f32.xlu0 %v955
        %v987 = vpop.xlane.xlu0 %986
        %v988 = vmul.f32 %v957, %v907
        %v989 = vmul.f32 %v959, %v907
        %v990 = vmul.f32 %v961, %v907
        %v991 = vmul.f32 %v963, %v907
        %v992 = vmul.f32 %v965, %v907
        %v993 = vmul.f32 %v967, %v907
        %v994 = vmul.f32 %v969, %v907
        %v995 = vmul.f32 %v971, %v907
        %v996 = vmul.f32 %v973, %v907
        %v997 = vmul.f32 %v975, %v907
        %v998 = vmul.f32 %v977, %v907
        %v999 = vmul.f32 %v979, %v907
        %v1000 = vmul.f32 %v981, %v907
        %v1001 = vmul.f32 %v983, %v907
        %v1002 = vmul.f32 %v985, %v907
        %v1003 = vmul.f32 %v987, %v907
        %v1004 = vadd.f32 %v988, 1e-12
        %v1005 = vadd.f32 %v989, 1e-12
        %v1006 = vadd.f32 %v990, 1e-12
        %v1007 = vadd.f32 %v991, 1e-12
        %v1008 = vadd.f32 %v992, 1e-12
        %v1009 = vadd.f32 %v993, 1e-12
        %v1010 = vadd.f32 %v994, 1e-12
        %v1011 = vadd.f32 %v995, 1e-12
        %v1012 = vadd.f32 %v996, 1e-12
        %v1013 = vadd.f32 %v997, 1e-12
        %v1014 = vadd.f32 %v998, 1e-12
        %v1015 = vadd.f32 %v999, 1e-12
        %v1016 = vadd.f32 %v1000, 1e-12
        %v1017 = vadd.f32 %v1001, 1e-12
        %v1018 = vadd.f32 %v1002, 1e-12
        %v1019 = vadd.f32 %v1003, 1e-12
        %v1020 = vrsqrt.pop %v1004
        %v1021 = vrsqrt.pop %v1005
        %v1022 = vrsqrt.pop %v1006
        %v1023 = vrsqrt.pop %v1007
        %v1024 = vrsqrt.pop %v1008
        %v1025 = vrsqrt.pop %v1009
        %v1026 = vrsqrt.pop %v1010
        %v1027 = vrsqrt.pop %v1011
        %v1028 = vrsqrt.pop %v1012
        %v1029 = vrsqrt.pop %v1013
        %v1030 = vrsqrt.pop %v1014
        %v1031 = vrsqrt.pop %v1015
        %v1032 = vrsqrt.pop %v1016
        %v1033 = vrsqrt.pop %v1017
        %v1034 = vrsqrt.pop %v1018
        %v1035 = vrsqrt.pop %v1019
        %v1036 = vmul.f32 %v924, %v1020
        %v1037 = vmul.f32 %v925, %v1021
        %v1038 = vmul.f32 %v926, %v1022
        %v1039 = vmul.f32 %v927, %v1023
        %v1040 = vmul.f32 %v928, %v1024
        %v1041 = vmul.f32 %v929, %v1025
        %v1042 = vmul.f32 %v930, %v1026
        %v1043 = vmul.f32 %v931, %v1027
        %v1044 = vmul.f32 %v932, %v1028
        %v1045 = vmul.f32 %v933, %v1029
        %v1046 = vmul.f32 %v934, %v1030
        %v1047 = vmul.f32 %v935, %v1031
        %v1048 = vmul.f32 %v936, %v1032
        %v1049 = vmul.f32 %v937, %v1033
        %v1050 = vmul.f32 %v938, %v1034
        %v1051 = vmul.f32 %v939, %v1035
        %v1053 = vlaneseq
        %v1054 = vshrl.u32 %v1053, 7
        %v1055 = vsub.s32 0, %v1054
        %v1056 = vrot.slane %v873, %v1055
        %v1058 = vmul.f32 %v1036, %v1056
        %v1059 = vmul.f32 %v1037, %v1056
        %v1060 = vmul.f32 %v1038, %v1056
        %v1061 = vmul.f32 %v1039, %v1056
        %v1062 = vmul.f32 %v1040, %v1056
        %v1063 = vmul.f32 %v1041, %v1056
        %v1064 = vmul.f32 %v1042, %v1056
        %v1065 = vmul.f32 %v1043, %v1056
        %v1066 = vmul.f32 %v1044, %v1056
        %v1067 = vmul.f32 %v1045, %v1056
        %v1068 = vmul.f32 %v1046, %v1056
        %v1069 = vmul.f32 %v1047, %v1056
        %v1070 = vmul.f32 %v1048, %v1056
        %v1071 = vmul.f32 %v1049, %v1056
        %v1072 = vmul.f32 %v1050, %v1056
        %v1073 = vmul.f32 %v1051, %v1056
        %v1075 = vlaneseq
        %v1076 = vshrl.u32 %v1075, 7
        %v1077 = vsub.s32 0, %v1076
        %v1078 = vrot.slane %v874, %v1077
        %v1080 = vadd.f32 %v1058, %v1078
        %v1081 = vadd.f32 %v1059, %v1078
        %v1082 = vadd.f32 %v1060, %v1078
        %v1083 = vadd.f32 %v1061, %v1078
        %v1084 = vadd.f32 %v1062, %v1078
        %v1085 = vadd.f32 %v1063, %v1078
        %v1086 = vadd.f32 %v1064, %v1078
        %v1087 = vadd.f32 %v1065, %v1078
        %v1088 = vadd.f32 %v1066, %v1078
        %v1089 = vadd.f32 %v1067, %v1078
        %v1090 = vadd.f32 %v1068, %v1078
        %v1091 = vadd.f32 %v1069, %v1078
        %v1092 = vadd.f32 %v1070, %v1078
        %v1093 = vadd.f32 %v1071, %v1078
        %v1094 = vadd.f32 %v1072, %v1078
        %v1095 = vadd.f32 %v1073, %v1078
        %1096 = vst [vmem:[#allocation2] sm:$0xff] %v1080
        %1097 = vst [vmem:[#allocation2 + $0x8] sm:$0xff] %v1081
        %1098 = vst [vmem:[#allocation2 + $0x10] sm:$0xff] %v1082
        %1099 = vst [vmem:[#allocation2 + $0x18] sm:$0xff] %v1083
        %1100 = vst [vmem:[#allocation2 + $0x20] sm:$0xff] %v1084
        %1101 = vst [vmem:[#allocation2 + $0x28] sm:$0xff] %v1085
        %1102 = vst [vmem:[#allocation2 + $0x30] sm:$0xff] %v1086
        %1103 = vst [vmem:[#allocation2 + $0x38] sm:$0xff] %v1087
        %1104 = vst [vmem:[#allocation2 + $0x40] sm:$0xff] %v1088
        %1105 = vst [vmem:[#allocation2 + $0x48] sm:$0xff] %v1089
        %1106 = vst [vmem:[#allocation2 + $0x50] sm:$0xff] %v1090
        %1107 = vst [vmem:[#allocation2 + $0x58] sm:$0xff] %v1091
        %1108 = vst [vmem:[#allocation2 + $0x60] sm:$0xff] %v1092
        %1109 = vst [vmem:[#allocation2 + $0x68] sm:$0xff] %v1093
        %1110 = vst [vmem:[#allocation2 + $0x70] sm:$0xff] %v1094
        %1111 = vst [vmem:[#allocation2 + $0x78] sm:$0xff] %v1095
      $region104: #{bert_classifier_forward.1} parent=99 // pred_fallthru
        _
      %v1112 = vld [vmem:[#allocation2] sm:$0xff]
      %v1113 = vld [vmem:[#allocation2 + $0x8] sm:$0xff]
      %v1114 = vld [vmem:[#allocation2 + $0x10] sm:$0xff]
      %v1115 = vld [vmem:[#allocation2 + $0x18] sm:$0xff]
      %v1116 = vld [vmem:[#allocation2 + $0x20] sm:$0xff]
      %v1117 = vld [vmem:[#allocation2 + $0x28] sm:$0xff]
      %v1118 = vld [vmem:[#allocation2 + $0x30] sm:$0xff]
      %v1119 = vld [vmem:[#allocation2 + $0x38] sm:$0xff]
      %v1120 = vld [vmem:[#allocation2 + $0x40] sm:$0xff]
      %v1121 = vld [vmem:[#allocation2 + $0x48] sm:$0xff]
      %v1122 = vld [vmem:[#allocation2 + $0x50] sm:$0xff]
      %v1123 = vld [vmem:[#allocation2 + $0x58] sm:$0xff]
      %v1124 = vld [vmem:[#allocation2 + $0x60] sm:$0xff]
      %v1125 = vld [vmem:[#allocation2 + $0x68] sm:$0xff]
      %v1126 = vld [vmem:[#allocation2 + $0x70] sm:$0xff]
      %v1127 = vld [vmem:[#allocation2 + $0x78] sm:$0xff]
      %v1128 = vld [vmem:[%s802] sm:$0x1]
      %v1129 = vpack.c.bf16 %v1113, %v1112
      %v1130 = vpack.c.bf16 %v1115, %v1114
      %v1131 = vpack.c.bf16 %v1117, %v1116
      %v1132 = vpack.c.bf16 %v1119, %v1118
      %v1133 = vpack.c.bf16 %v1121, %v1120
      %v1134 = vpack.c.bf16 %v1123, %v1122
      %v1135 = vpack.c.bf16 %v1125, %v1124
      %v1136 = vpack.c.bf16 %v1127, %v1126
      %v1137 = vld [vmem:[%s807] sm:$0xff]
      %v1138 = vld [vmem:[%s807 + $0x8] sm:$0xf]
      %v1139 = vld [vmem:[%s807 + $0xc] sm:$0xff]
      %v1140 = vld [vmem:[%s807 + $0x14] sm:$0xf]
      %v1141 = vld [vmem:[%s807 + $0x18] sm:$0xff]
      %v1142 = vld [vmem:[%s807 + $0x20] sm:$0xf]
      %v1143 = vld [vmem:[%s807 + $0x24] sm:$0xff]
      %v1144 = vld [vmem:[%s807 + $0x2c] sm:$0xf]
      %v1145 = vld [vmem:[%s807 + $0x30] sm:$0xff]
      %v1146 = vld [vmem:[%s807 + $0x38] sm:$0xf]
      %v1147 = vld [vmem:[%s807 + $0x3c] sm:$0xff]
      %v1148 = vld [vmem:[%s807 + $0x44] sm:$0xf]
      %v1149 = vld [vmem:[%s807 + $0x48] sm:$0xff]
      %v1150 = vld [vmem:[%s807 + $0x50] sm:$0xf]
      %v1151 = vld [vmem:[%s807 + $0x54] sm:$0xff]
      %v1152 = vld [vmem:[%s807 + $0x5c] sm:$0xf]
      %v1153 = vld [vmem:[%s807 + $0x60] sm:$0xff]
      %v1154 = vld [vmem:[%s807 + $0x68] sm:$0xf]
      %v1155 = vld [vmem:[%s807 + $0x6c] sm:$0xff]
      %v1156 = vld [vmem:[%s807 + $0x74] sm:$0xf]
      %v1157 = vld [vmem:[%s807 + $0x78] sm:$0xff]
      %v1158 = vld [vmem:[%s807 + $0x80] sm:$0xf]
      %v1159 = vld [vmem:[%s807 + $0x84] sm:$0xff]
      %v1160 = vld [vmem:[%s807 + $0x8c] sm:$0xf]
      %v1161 = vld [vmem:[%s807 + $0x90] sm:$0xff]
      %v1162 = vld [vmem:[%s807 + $0x98] sm:$0xf]
      %v1163 = vld [vmem:[%s807 + $0x9c] sm:$0xff]
      %v1164 = vld [vmem:[%s807 + $0xa4] sm:$0xf]
      %v1165 = vld [vmem:[%s807 + $0xa8] sm:$0xff]
      %v1166 = vld [vmem:[%s807 + $0xb0] sm:$0xf]
      %v1167 = vld [vmem:[%s807 + $0xb4] sm:$0xff]
      %v1168 = vld [vmem:[%s807 + $0xbc] sm:$0xf]
      %v1169 = vld [vmem:[%s811] sm:$0x7]
      %v1171 = vlaneseq
      %v1172 = vshrl.u32 %v1171, 7
      %v1173 = vsub.s32 0, %v1172
      %v1174 = vrot.slane %v1169, %v1173
      %v1175 = vlaneseq
      %v1176 = vshrl.u32 %v1175, 7
      %v1177 = vsub.s32 1, %v1176
      %v1178 = vrot.slane %v1169, %v1177
      %v1179 = vlaneseq
      %v1180 = vshrl.u32 %v1179, 7
      %v1181 = vsub.s32 2, %v1180
      %v1182 = vrot.slane %v1169, %v1181
      %v1218 = vunpack.c.l.b16 %v1137
      %v1219 = vunpack.c.h.b16 %v1137
      %v1220 = vunpack.c.l.b16 %v1138
      %v1221 = vunpack.c.l.b16 %v1139
      %v1222 = vunpack.c.h.b16 %v1139
      %v1223 = vunpack.c.l.b16 %v1140
      %v1224 = vunpack.c.l.b16 %v1141
      %v1225 = vunpack.c.h.b16 %v1141
      %v1226 = vunpack.c.l.b16 %v1142
      %v1227 = vunpack.c.l.b16 %v1143
      %v1228 = vunpack.c.h.b16 %v1143
      %v1229 = vunpack.c.l.b16 %v1144
      %v1230 = vunpack.c.l.b16 %v1145
      %v1231 = vunpack.c.h.b16 %v1145
      %v1232 = vunpack.c.l.b16 %v1146
      %v1233 = vunpack.c.l.b16 %v1147
      %v1234 = vunpack.c.h.b16 %v1147
      %v1235 = vunpack.c.l.b16 %v1148
      %v1236 = vunpack.c.l.b16 %v1149
      %v1237 = vunpack.c.h.b16 %v1149
      %v1238 = vunpack.c.l.b16 %v1150
      %v1239 = vunpack.c.l.b16 %v1151
      %v1240 = vunpack.c.h.b16 %v1151
      %v1241 = vunpack.c.l.b16 %v1152
      %v1242 = vunpack.c.l.b16 %v1153
      %v1243 = vunpack.c.h.b16 %v1153
      %v1244 = vunpack.c.l.b16 %v1154
      %v1245 = vunpack.c.l.b16 %v1155
      %v1246 = vunpack.c.h.b16 %v1155
      %v1247 = vunpack.c.l.b16 %v1156
      %v1248 = vunpack.c.l.b16 %v1157
      %v1249 = vunpack.c.h.b16 %v1157
      %v1250 = vunpack.c.l.b16 %v1158
      %v1251 = vunpack.c.l.b16 %v1159
      %v1252 = vunpack.c.h.b16 %v1159
      %v1253 = vunpack.c.l.b16 %v1160
      %v1254 = vunpack.c.l.b16 %v1161
      %v1255 = vunpack.c.h.b16 %v1161
      %v1256 = vunpack.c.l.b16 %v1162
      %v1257 = vunpack.c.l.b16 %v1163
      %v1258 = vunpack.c.h.b16 %v1163
      %v1259 = vunpack.c.l.b16 %v1164
      %v1260 = vunpack.c.l.b16 %v1165
      %v1261 = vunpack.c.h.b16 %v1165
      %v1262 = vunpack.c.l.b16 %v1166
      %v1263 = vunpack.c.l.b16 %v1167
      %v1264 = vunpack.c.h.b16 %v1167
      %v1265 = vunpack.c.l.b16 %v1168
      %v1266 = vpack.c.b16 %v1221, %v1218
      %v1267 = vpack.c.b16 %v1222, %v1219
      %v1268 = vpack.c.b16 %v1223, %v1220
      %v1269 = vpack.c.b16 %v1227, %v1224
      %v1270 = vpack.c.b16 %v1228, %v1225
      %v1271 = vpack.c.b16 %v1229, %v1226
      %v1272 = vpack.c.b16 %v1233, %v1230
      %v1273 = vpack.c.b16 %v1234, %v1231
      %v1274 = vpack.c.b16 %v1235, %v1232
      %v1275 = vpack.c.b16 %v1239, %v1236
      %v1276 = vpack.c.b16 %v1240, %v1237
      %v1277 = vpack.c.b16 %v1241, %v1238
      %v1278 = vpack.c.b16 %v1245, %v1242
      %v1279 = vpack.c.b16 %v1246, %v1243
      %v1280 = vpack.c.b16 %v1247, %v1244
      %v1281 = vpack.c.b16 %v1251, %v1248
      %v1282 = vpack.c.b16 %v1252, %v1249
      %v1283 = vpack.c.b16 %v1253, %v1250
      %v1284 = vpack.c.b16 %v1257, %v1254
      %v1285 = vpack.c.b16 %v1258, %v1255
      %v1286 = vpack.c.b16 %v1259, %v1256
      %v1287 = vpack.c.b16 %v1263, %v1260
      %v1288 = vpack.c.b16 %v1264, %v1261
      %v1289 = vpack.c.b16 %v1265, %v1262
      %1314 = vmatprep.subr.bf16.mxu0 %v1267
      %1315 = vmatpush1.bf16.msra.mxu0 %v1266
      %1316 = vmatprep.subr.bf16.mxu0 %v1270
      %1317 = vmatpush1.bf16.msra.mxu0 %v1269
      %1318 = vmatprep.subr.bf16.mxu0 %v1273
      %1319 = vmatpush1.bf16.msra.mxu0 %v1272
      %1320 = vmatprep.subr.bf16.mxu0 %v1276
      %1321 = vmatpush1.bf16.msra.mxu0 %v1275
      %1322 = vmatprep.subr.bf16.mxu0 %v1279
      %1323 = vmatpush1.bf16.msra.mxu0 %v1278
      %1324 = vmatprep.subr.bf16.mxu0 %v1282
      %1325 = vmatpush1.bf16.msra.mxu0 %v1281
      %1326 = vmatprep.subr.bf16.mxu0 %v1285
      %1327 = vmatpush1.bf16.msra.mxu0 %v1284
      %1328 = vmatprep.subr.bf16.mxu0 %v1288
      %1329 = vmatpush1.bf16.msra.mxu0 %v1287
      %1330 = vmatprep.subr.bf16.mxu0 0
      %1331 = vmatpush1.bf16.msra.mxu0 0
      %1332 = vmatprep.subr.bf16.mxu0 0
      %1333 = vmatpush1.bf16.msra.mxu0 0
      %1334 = vmatprep.subr.bf16.mxu0 0
      %1335 = vmatpush1.bf16.msra.mxu0 0
      %1336 = vmatprep.subr.bf16.mxu0 0
      %1337 = vmatpush1.bf16.msra.mxu0 0
      %1338 = vmatprep.subr.bf16.mxu0 0
      %1339 = vmatpush1.bf16.msra.mxu0 0
      %1340 = vmatprep.subr.bf16.mxu0 0
      %1341 = vmatpush1.bf16.msra.mxu0 0
      %1342 = vmatprep.subr.bf16.mxu0 0
      %1343 = vmatpush1.bf16.msra.mxu0 0
      %1344 = vmatprep.subr.bf16.mxu0 0
      %1345 = vmatpush1.bf16.msra.mxu0 0
      %1346 = vmatprep.mubr.bf16.mxu0 0
      %1347 = vmatmul.mubr.bf16.gmra.mrb[0].mxu0 %v1129
      %v1348 = vpop.f32.mrb[0].mxu0
      %v1349 = vadd.f32 %v1174, %v1348
      %v1350 = vpop.f32.mrb[0].mxu0
      %v1351 = vadd.f32 %v1178, %v1350
      %v1352 = vpop.f32.mrb[0].mxu0
      %v1353 = vadd.f32 %v1174, %v1352
      %v1354 = vpop.f32.mrb[0].mxu0
      %v1355 = vadd.f32 %v1178, %v1354
      %1356 = vmatprep.mubr.bf16.mxu0 0
      %1357 = vmatmul.mubr.bf16.gmra.mrb[0].mxu0 %v1130
      %v1358 = vpop.f32.mrb[0].mxu0
      %v1359 = vadd.f32 %v1174, %v1358
      %v1360 = vpop.f32.mrb[0].mxu0
      %v1361 = vadd.f32 %v1178, %v1360
      %v1362 = vpop.f32.mrb[0].mxu0
      %v1363 = vadd.f32 %v1174, %v1362
      %v1364 = vpop.f32.mrb[0].mxu0
      %v1365 = vadd.f32 %v1178, %v1364
      %1366 = vmatprep.mubr.bf16.mxu0 0
      %1367 = vmatmul.mubr.bf16.gmra.mrb[0].mxu0 %v1131
      %v1368 = vpop.f32.mrb[0].mxu0
      %v1369 = vadd.f32 %v1174, %v1368
      %v1370 = vpop.f32.mrb[0].mxu0
      %v1371 = vadd.f32 %v1178, %v1370
      %v1372 = vpop.f32.mrb[0].mxu0
      %v1373 = vadd.f32 %v1174, %v1372
      %v1374 = vpop.f32.mrb[0].mxu0
      %v1375 = vadd.f32 %v1178, %v1374
      %1376 = vmatprep.mubr.bf16.mxu0 0
      %1377 = vmatmul.mubr.bf16.gmra.mrb[0].mxu0 %v1132
      %v1378 = vpop.f32.mrb[0].mxu0
      %v1379 = vadd.f32 %v1174, %v1378
      %v1380 = vpop.f32.mrb[0].mxu0
      %v1381 = vadd.f32 %v1178, %v1380
      %v1382 = vpop.f32.mrb[0].mxu0
      %v1383 = vadd.f32 %v1174, %v1382
      %v1384 = vpop.f32.mrb[0].mxu0
      %v1385 = vadd.f32 %v1178, %v1384
      %1386 = vmatprep.mubr.bf16.mxu0 0
      %1387 = vmatmul.mubr.bf16.gmra.mrb[0].mxu0 %v1133
      %v1388 = vpop.f32.mrb[0].mxu0
      %v1389 = vadd.f32 %v1174, %v1388
      %v1390 = vpop.f32.mrb[0].mxu0
      %v1391 = vadd.f32 %v1178, %v1390
      %v1392 = vpop.f32.mrb[0].mxu0
      %v1393 = vadd.f32 %v1174, %v1392
      %v1394 = vpop.f32.mrb[0].mxu0
      %v1395 = vadd.f32 %v1178, %v1394
      %1396 = vmatprep.mubr.bf16.mxu0 0
      %1397 = vmatmul.mubr.bf16.gmra.mrb[0].mxu0 %v1134
      %v1398 = vpop.f32.mrb[0].mxu0
      %v1399 = vadd.f32 %v1174, %v1398
      %v1400 = vpop.f32.mrb[0].mxu0
      %v1401 = vadd.f32 %v1178, %v1400
      %v1402 = vpop.f32.mrb[0].mxu0
      %v1403 = vadd.f32 %v1174, %v1402
      %v1404 = vpop.f32.mrb[0].mxu0
      %v1405 = vadd.f32 %v1178, %v1404
      %1406 = vmatprep.mubr.bf16.mxu0 0
      %1407 = vmatmul.mubr.bf16.gmra.mrb[0].mxu0 %v1135
      %v1408 = vpop.f32.mrb[0].mxu0
      %v1409 = vadd.f32 %v1174, %v1408
      %v1410 = vpop.f32.mrb[0].mxu0
      %v1411 = vadd.f32 %v1178, %v1410
      %v1412 = vpop.f32.mrb[0].mxu0
      %v1413 = vadd.f32 %v1174, %v1412
      %v1414 = vpop.f32.mrb[0].mxu0
      %v1415 = vadd.f32 %v1178, %v1414
      %1416 = vmatprep.mubr.bf16.mxu0 0
      %1417 = vmatmul.mubr.bf16.gmra.mrb[0].mxu0 %v1136
      %v1418 = vpop.f32.mrb[0].mxu0
      %v1419 = vadd.f32 %v1174, %v1418
      %v1420 = vpop.f32.mrb[0].mxu0
      %v1421 = vadd.f32 %v1178, %v1420
      %v1422 = vpop.f32.mrb[0].mxu0
      %v1423 = vadd.f32 %v1174, %v1422
      %v1424 = vpop.f32.mrb[0].mxu0
      %v1425 = vadd.f32 %v1178, %v1424
      %1426 = vdwg.mxu0
      %1427 = vmatprep.subr.bf16.mxu0 0
      %1428 = vmatpush1.bf16.msra.mxu0 %v1268
      %1429 = vmatprep.subr.bf16.mxu0 0
      %1430 = vmatpush1.bf16.msra.mxu0 %v1271
      %1431 = vmatprep.subr.bf16.mxu0 0
      %1432 = vmatpush1.bf16.msra.mxu0 %v1274
      %1433 = vmatprep.subr.bf16.mxu0 0
      %1434 = vmatpush1.bf16.msra.mxu0 %v1277
      %1435 = vmatprep.subr.bf16.mxu0 0
      %1436 = vmatpush1.bf16.msra.mxu0 %v1280
      %1437 = vmatprep.subr.bf16.mxu0 0
      %1438 = vmatpush1.bf16.msra.mxu0 %v1283
      %1439 = vmatprep.subr.bf16.mxu0 0
      %1440 = vmatpush1.bf16.msra.mxu0 %v1286
      %1441 = vmatprep.subr.bf16.mxu0 0
      %1442 = vmatpush1.bf16.msra.mxu0 %v1289
      %1443 = vmatprep.subr.bf16.mxu0 0
      %1444 = vmatpush1.bf16.msra.mxu0 0
      %1445 = vmatprep.subr.bf16.mxu0 0
      %1446 = vmatpush1.bf16.msra.mxu0 0
      %1447 = vmatprep.subr.bf16.mxu0 0
      %1448 = vmatpush1.bf16.msra.mxu0 0
      %1449 = vmatprep.subr.bf16.mxu0 0
      %1450 = vmatpush1.bf16.msra.mxu0 0
      %1451 = vmatprep.subr.bf16.mxu0 0
      %1452 = vmatpush1.bf16.msra.mxu0 0
      %1453 = vmatprep.subr.bf16.mxu0 0
      %1454 = vmatpush1.bf16.msra.mxu0 0
      %1455 = vmatprep.subr.bf16.mxu0 0
      %1456 = vmatpush1.bf16.msra.mxu0 0
      %1457 = vmatprep.subr.bf16.mxu0 0
      %1458 = vmatpush1.bf16.msra.mxu0 0
      %1459 = vmatprep.mubr.bf16.mxu0 0
      %1460 = vmatmul.mubr.bf16.gmra.mrb[0].mxu0 %v1129
      %v1461 = vpop.f32.mrb[0].mxu0
      %v1462 = vadd.f32 %v1182, %v1461
      %v1463 = vpop.f32.mrb[0].mxu0
      %v1464 = vpop.f32.mrb[0].mxu0
      %v1465 = vadd.f32 %v1182, %v1464
      %v1466 = vpop.f32.mrb[0].mxu0
      %1467 = vmatprep.mubr.bf16.mxu0 0
      %1468 = vmatmul.mubr.bf16.gmra.mrb[0].mxu0 %v1130
      %v1469 = vpop.f32.mrb[0].mxu0
      %v1470 = vadd.f32 %v1182, %v1469
      %v1471 = vpop.f32.mrb[0].mxu0
      %v1472 = vpop.f32.mrb[0].mxu0
      %v1473 = vadd.f32 %v1182, %v1472
      %v1474 = vpop.f32.mrb[0].mxu0
      %1475 = vmatprep.mubr.bf16.mxu0 0
      %1476 = vmatmul.mubr.bf16.gmra.mrb[0].mxu0 %v1131
      %v1477 = vpop.f32.mrb[0].mxu0
      %v1478 = vadd.f32 %v1182, %v1477
      %v1479 = vpop.f32.mrb[0].mxu0
      %v1480 = vpop.f32.mrb[0].mxu0
      %v1481 = vadd.f32 %v1182, %v1480
      %v1482 = vpop.f32.mrb[0].mxu0
      %1483 = vmatprep.mubr.bf16.mxu0 0
      %1484 = vmatmul.mubr.bf16.gmra.mrb[0].mxu0 %v1132
      %v1485 = vpop.f32.mrb[0].mxu0
      %v1486 = vadd.f32 %v1182, %v1485
      %v1487 = vpop.f32.mrb[0].mxu0
      %v1488 = vpop.f32.mrb[0].mxu0
      %v1489 = vadd.f32 %v1182, %v1488
      %v1490 = vpop.f32.mrb[0].mxu0
      %1491 = vmatprep.mubr.bf16.mxu0 0
      %1492 = vmatmul.mubr.bf16.gmra.mrb[0].mxu0 %v1133
      %v1493 = vpop.f32.mrb[0].mxu0
      %v1494 = vadd.f32 %v1182, %v1493
      %v1495 = vpop.f32.mrb[0].mxu0
      %v1496 = vpop.f32.mrb[0].mxu0
      %v1497 = vadd.f32 %v1182, %v1496
      %v1498 = vpop.f32.mrb[0].mxu0
      %1499 = vmatprep.mubr.bf16.mxu0 0
      %1500 = vmatmul.mubr.bf16.gmra.mrb[0].mxu0 %v1134
      %v1501 = vpop.f32.mrb[0].mxu0
      %v1502 = vadd.f32 %v1182, %v1501
      %v1503 = vpop.f32.mrb[0].mxu0
      %v1504 = vpop.f32.mrb[0].mxu0
      %v1505 = vadd.f32 %v1182, %v1504
      %v1506 = vpop.f32.mrb[0].mxu0
      %1507 = vmatprep.mubr.bf16.mxu0 0
      %1508 = vmatmul.mubr.bf16.gmra.mrb[0].mxu0 %v1135
      %v1509 = vpop.f32.mrb[0].mxu0
      %v1510 = vadd.f32 %v1182, %v1509
      %v1511 = vpop.f32.mrb[0].mxu0
      %v1512 = vpop.f32.mrb[0].mxu0
      %v1513 = vadd.f32 %v1182, %v1512
      %v1514 = vpop.f32.mrb[0].mxu0
      %1515 = vmatprep.mubr.bf16.mxu0 0
      %1516 = vmatmul.mubr.bf16.gmra.mrb[0].mxu0 %v1136
      %v1517 = vpop.f32.mrb[0].mxu0
      %v1518 = vadd.f32 %v1182, %v1517
      %v1519 = vpop.f32.mrb[0].mxu0
      %v1520 = vpop.f32.mrb[0].mxu0
      %v1521 = vadd.f32 %v1182, %v1520
      %v1522 = vpop.f32.mrb[0].mxu0
      %1523 = vdwg.mxu0
      %v1524 = vpack.c.bf16 %v1353, %v1349
      %v1525 = vpack.c.bf16 %v1363, %v1359
      %v1526 = vpack.c.bf16 %v1373, %v1369
      %v1527 = vpack.c.bf16 %v1383, %v1379
      %v1528 = vpack.c.bf16 %v1393, %v1389
      %v1529 = vpack.c.bf16 %v1403, %v1399
      %v1530 = vpack.c.bf16 %v1413, %v1409
      %v1531 = vpack.c.bf16 %v1423, %v1419
      %v1532 = vpack.c.bf16 %v1355, %v1351
      %v1533 = vpack.c.bf16 %v1365, %v1361
      %v1534 = vpack.c.bf16 %v1375, %v1371
      %v1535 = vpack.c.bf16 %v1385, %v1381
      %v1536 = vpack.c.bf16 %v1395, %v1391
      %v1537 = vpack.c.bf16 %v1405, %v1401
      %v1538 = vpack.c.bf16 %v1415, %v1411
      %v1539 = vpack.c.bf16 %v1425, %v1421
      %v1540 = vpack.c.bf16 %v1465, %v1462
      %v1541 = vpack.c.bf16 %v1473, %v1470
      %v1542 = vpack.c.bf16 %v1481, %v1478
      %v1543 = vpack.c.bf16 %v1489, %v1486
      %v1544 = vpack.c.bf16 %v1497, %v1494
      %v1545 = vpack.c.bf16 %v1505, %v1502
      %v1546 = vpack.c.bf16 %v1513, %v1510
      %v1547 = vpack.c.bf16 %v1521, %v1518
      %v1549 = vlaneseq
      %v1550 = vshrl.u32 %v1549, 7
      %v1551 = vsub.s32 0, %v1550
      %v1552 = vrot.slane %v1128, %v1551
      %vm1554 = vcmask 261120
      %v1556 = vsel %vm1554, %v1524, 0
      %v1559 = vsel %vm1554, %v1525, 0
      %v1562 = vsel %vm1554, %v1526, 0
      %v1565 = vsel %vm1554, %v1527, 0
      %v1568 = vsel %vm1554, %v1528, 0
      %v1571 = vsel %vm1554, %v1529, 0
      %v1574 = vsel %vm1554, %v1530, 0
      %v1577 = vsel %vm1554, %v1531, 0
      %v1580 = vsel %vm1554, %v1532, 0
      %v1583 = vsel %vm1554, %v1533, 0
      %v1586 = vsel %vm1554, %v1534, 0
      %v1589 = vsel %vm1554, %v1535, 0
      %v1592 = vsel %vm1554, %v1536, 0
      %v1595 = vsel %vm1554, %v1537, 0
      %v1598 = vsel %vm1554, %v1538, 0
      %v1601 = vsel %vm1554, %v1539, 0
      %1603 = vmatprep.subr.bf16.mxu0 0
      %1604 = vmatpush1.bf16.xpose.msra.mxu0 %v1580
      %1605 = vmatprep.subr.bf16.mxu0 0
      %1606 = vmatpush1.bf16.xpose.msra.mxu0 %v1583
      %1607 = vmatprep.subr.bf16.mxu0 0
      %1608 = vmatpush1.bf16.xpose.msra.mxu0 %v1586
      %1609 = vmatprep.subr.bf16.mxu0 0
      %1610 = vmatpush1.bf16.xpose.msra.mxu0 %v1589
      %1611 = vmatprep.subr.bf16.mxu0 0
      %1612 = vmatpush1.bf16.xpose.msra.mxu0 %v1592
      %1613 = vmatprep.subr.bf16.mxu0 0
      %1614 = vmatpush1.bf16.xpose.msra.mxu0 %v1595
      %1615 = vmatprep.subr.bf16.mxu0 0
      %1616 = vmatpush1.bf16.xpose.msra.mxu0 %v1598
      %1617 = vmatprep.subr.bf16.mxu0 0
      %1618 = vmatpush1.bf16.xpose.msra.mxu0 %v1601
      %1619 = vmatprep.subr.bf16.mxu0 0
      %1620 = vmatpush1.bf16.xpose.msra.mxu0 0
      %1621 = vmatprep.subr.bf16.mxu0 0
      %1622 = vmatpush1.bf16.xpose.msra.mxu0 0
      %1623 = vmatprep.subr.bf16.mxu0 0
      %1624 = vmatpush1.bf16.xpose.msra.mxu0 0
      %1625 = vmatprep.subr.bf16.mxu0 0
      %1626 = vmatpush1.bf16.xpose.msra.mxu0 0
      %1627 = vmatprep.subr.bf16.mxu0 0
      %1628 = vmatpush1.bf16.xpose.msra.mxu0 0
      %1629 = vmatprep.subr.bf16.mxu0 0
      %1630 = vmatpush1.bf16.xpose.msra.mxu0 0
      %1631 = vmatprep.subr.bf16.mxu0 0
      %1632 = vmatpush1.bf16.xpose.msra.mxu0 0
      %1633 = vmatprep.subr.bf16.mxu0 0
      %1634 = vmatpush1.bf16.xpose.msra.mxu0 0
      %1635 = vmatprep.mubr.bf16.mxu0 0
      %1636 = vmatmul.mubr.bf16.gmra.mrb[0].mxu0 %v1556
      %v1637 = vpop.f32.mrb[0].mxu0
      %v1638 = vadd.f32 %v1552, %v1637
      %v1639 = vpop.f32.mrb[0].mxu0
      %v1640 = vpop.f32.mrb[0].mxu0
      %v1641 = vadd.f32 %v1552, %v1640
      %v1642 = vpop.f32.mrb[0].mxu0
      %1643 = vmatprep.mubr.bf16.mxu0 0
      %1644 = vmatmul.mubr.bf16.gmra.mrb[0].mxu0 %v1559
      %v1645 = vpop.f32.mrb[0].mxu0
      %v1646 = vadd.f32 %v1552, %v1645
      %v1647 = vpop.f32.mrb[0].mxu0
      %v1648 = vpop.f32.mrb[0].mxu0
      %v1649 = vadd.f32 %v1552, %v1648
      %v1650 = vpop.f32.mrb[0].mxu0
      %1651 = vmatprep.mubr.bf16.mxu0 0
      %1652 = vmatmul.mubr.bf16.gmra.mrb[0].mxu0 %v1562
      %v1653 = vpop.f32.mrb[0].mxu0
      %v1654 = vadd.f32 %v1552, %v1653
      %v1655 = vpop.f32.mrb[0].mxu0
      %v1656 = vpop.f32.mrb[0].mxu0
      %v1657 = vadd.f32 %v1552, %v1656
      %v1658 = vpop.f32.mrb[0].mxu0
      %1659 = vmatprep.mubr.bf16.mxu0 0
      %1660 = vmatmul.mubr.bf16.gmra.mrb[0].mxu0 %v1565
      %v1661 = vpop.f32.mrb[0].mxu0
      %v1662 = vadd.f32 %v1552, %v1661
      %v1663 = vpop.f32.mrb[0].mxu0
      %v1664 = vpop.f32.mrb[0].mxu0
      %v1665 = vadd.f32 %v1552, %v1664
      %v1666 = vpop.f32.mrb[0].mxu0
      %1667 = vmatprep.mubr.bf16.mxu0 0
      %1668 = vmatmul.mubr.bf16.gmra.mrb[0].mxu0 %v1568
      %v1669 = vpop.f32.mrb[0].mxu0
      %v1670 = vadd.f32 %v1552, %v1669
      %v1671 = vpop.f32.mrb[0].mxu0
      %v1672 = vpop.f32.mrb[0].mxu0
      %v1673 = vadd.f32 %v1552, %v1672
      %v1674 = vpop.f32.mrb[0].mxu0
      %1675 = vmatprep.mubr.bf16.mxu0 0
      %1676 = vmatmul.mubr.bf16.gmra.mrb[0].mxu0 %v1571
      %v1677 = vpop.f32.mrb[0].mxu0
      %v1678 = vadd.f32 %v1552, %v1677
      %v1679 = vpop.f32.mrb[0].mxu0
      %v1680 = vpop.f32.mrb[0].mxu0
      %v1681 = vadd.f32 %v1552, %v1680
      %v1682 = vpop.f32.mrb[0].mxu0
      %1683 = vmatprep.mubr.bf16.mxu0 0
      %1684 = vmatmul.mubr.bf16.gmra.mrb[0].mxu0 %v1574
      %v1685 = vpop.f32.mrb[0].mxu0
      %v1686 = vadd.f32 %v1552, %v1685
      %v1687 = vpop.f32.mrb[0].mxu0
      %v1688 = vpop.f32.mrb[0].mxu0
      %v1689 = vadd.f32 %v1552, %v1688
      %v1690 = vpop.f32.mrb[0].mxu0
      %1691 = vmatprep.mubr.bf16.mxu0 0
      %1692 = vmatmul.mubr.bf16.gmra.mrb[0].mxu0 %v1577
      %v1693 = vpop.f32.mrb[0].mxu0
      %v1694 = vadd.f32 %v1552, %v1693
      %v1695 = vpop.f32.mrb[0].mxu0
      %v1696 = vpop.f32.mrb[0].mxu0
      %v1697 = vadd.f32 %v1552, %v1696
      %v1698 = vpop.f32.mrb[0].mxu0
      %1699 = vdwg.mxu0
      %1700 = vmax.xlane.f32.xlu0 %v1638
      %v1701 = vpop.xlane.xlu0 %1700
      %1702 = vmax.xlane.f32.xlu0 %v1641
      %v1703 = vpop.xlane.xlu0 %1702
      %1704 = vmax.xlane.f32.xlu0 %v1646
      %v1705 = vpop.xlane.xlu0 %1704
      %1706 = vmax.xlane.f32.xlu0 %v1649
      %v1707 = vpop.xlane.xlu0 %1706
      %1708 = vmax.xlane.f32.xlu0 %v1654
      %v1709 = vpop.xlane.xlu0 %1708
      %1710 = vmax.xlane.f32.xlu0 %v1657
      %v1711 = vpop.xlane.xlu0 %1710
      %1712 = vmax.xlane.f32.xlu0 %v1662
      %v1713 = vpop.xlane.xlu0 %1712
      %1714 = vmax.xlane.f32.xlu0 %v1665
      %v1715 = vpop.xlane.xlu0 %1714
      %1716 = vmax.xlane.f32.xlu0 %v1670
      %v1717 = vpop.xlane.xlu0 %1716
      %1718 = vmax.xlane.f32.xlu0 %v1673
      %v1719 = vpop.xlane.xlu0 %1718
      %1720 = vmax.xlane.f32.xlu0 %v1678
      %v1721 = vpop.xlane.xlu0 %1720
      %1722 = vmax.xlane.f32.xlu0 %v1681
      %v1723 = vpop.xlane.xlu0 %1722
      %1724 = vmax.xlane.f32.xlu0 %v1686
      %v1725 = vpop.xlane.xlu0 %1724
      %1726 = vmax.xlane.f32.xlu0 %v1689
      %v1727 = vpop.xlane.xlu0 %1726
      %1728 = vmax.xlane.f32.xlu0 %v1694
      %v1729 = vpop.xlane.xlu0 %1728
      %1730 = vmax.xlane.f32.xlu0 %v1697
      %v1731 = vpop.xlane.xlu0 %1730
      %v1732 = vsub.f32 %v1638, %v1701
      %v1733 = vsub.f32 %v1641, %v1703
      %v1734 = vsub.f32 %v1646, %v1705
      %v1735 = vsub.f32 %v1649, %v1707
      %v1736 = vsub.f32 %v1654, %v1709
      %v1737 = vsub.f32 %v1657, %v1711
      %v1738 = vsub.f32 %v1662, %v1713
      %v1739 = vsub.f32 %v1665, %v1715
      %v1740 = vsub.f32 %v1670, %v1717
      %v1741 = vsub.f32 %v1673, %v1719
      %v1742 = vsub.f32 %v1678, %v1721
      %v1743 = vsub.f32 %v1681, %v1723
      %v1744 = vsub.f32 %v1686, %v1725
      %v1745 = vsub.f32 %v1689, %v1727
      %v1746 = vsub.f32 %v1694, %v1729
      %v1747 = vsub.f32 %v1697, %v1731
      %v1748 = vmul.f32 %v1732, 1.442695
      %v1749 = vpow.pop %v1748
      %v1750 = vmul.f32 %v1733, 1.442695
      %v1751 = vpow.pop %v1750
      %v1752 = vmul.f32 %v1734, 1.442695
      %v1753 = vpow.pop %v1752
      %v1754 = vmul.f32 %v1735, 1.442695
      %v1755 = vpow.pop %v1754
      %v1756 = vmul.f32 %v1736, 1.442695
      %v1757 = vpow.pop %v1756
      %v1758 = vmul.f32 %v1737, 1.442695
      %v1759 = vpow.pop %v1758
      %v1760 = vmul.f32 %v1738, 1.442695
      %v1761 = vpow.pop %v1760
      %v1762 = vmul.f32 %v1739, 1.442695
      %v1763 = vpow.pop %v1762
      %v1764 = vmul.f32 %v1740, 1.442695
      %v1765 = vpow.pop %v1764
      %v1766 = vmul.f32 %v1741, 1.442695
      %v1767 = vpow.pop %v1766
      %v1768 = vmul.f32 %v1742, 1.442695
      %v1769 = vpow.pop %v1768
      %v1770 = vmul.f32 %v1743, 1.442695
      %v1771 = vpow.pop %v1770
      %v1772 = vmul.f32 %v1744, 1.442695
      %v1773 = vpow.pop %v1772
      %v1774 = vmul.f32 %v1745, 1.442695
      %v1775 = vpow.pop %v1774
      %v1776 = vmul.f32 %v1746, 1.442695
      %v1777 = vpow.pop %v1776
      %v1778 = vmul.f32 %v1747, 1.442695
      %v1779 = vpow.pop %v1778
      %1780 = vadd.xlane.f32.xlu0 %v1749
      %v1781 = vpop.xlane.xlu0 %1780
      %1782 = vadd.xlane.f32.xlu0 %v1751
      %v1783 = vpop.xlane.xlu0 %1782
      %1784 = vadd.xlane.f32.xlu0 %v1753
      %v1785 = vpop.xlane.xlu0 %1784
      %1786 = vadd.xlane.f32.xlu0 %v1755
      %v1787 = vpop.xlane.xlu0 %1786
      %1788 = vadd.xlane.f32.xlu0 %v1757
      %v1789 = vpop.xlane.xlu0 %1788
      %1790 = vadd.xlane.f32.xlu0 %v1759
      %v1791 = vpop.xlane.xlu0 %1790
      %1792 = vadd.xlane.f32.xlu0 %v1761
      %v1793 = vpop.xlane.xlu0 %1792
      %1794 = vadd.xlane.f32.xlu0 %v1763
      %v1795 = vpop.xlane.xlu0 %1794
      %1796 = vadd.xlane.f32.xlu0 %v1765
      %v1797 = vpop.xlane.xlu0 %1796
      %1798 = vadd.xlane.f32.xlu0 %v1767
      %v1799 = vpop.xlane.xlu0 %1798
      %1800 = vadd.xlane.f32.xlu0 %v1769
      %v1801 = vpop.xlane.xlu0 %1800
      %1802 = vadd.xlane.f32.xlu0 %v1771
      %v1803 = vpop.xlane.xlu0 %1802
      %1804 = vadd.xlane.f32.xlu0 %v1773
      %v1805 = vpop.xlane.xlu0 %1804
      %1806 = vadd.xlane.f32.xlu0 %v1775
      %v1807 = vpop.xlane.xlu0 %1806
      %1808 = vadd.xlane.f32.xlu0 %v1777
      %v1809 = vpop.xlane.xlu0 %1808
      %1810 = vadd.xlane.f32.xlu0 %v1779
      %v1811 = vpop.xlane.xlu0 %1810
      %v1812 = vrcp.pop %v1781
      %v1813 = vrcp.pop %v1783
      %v1814 = vrcp.pop %v1785
      %v1815 = vrcp.pop %v1787
      %v1816 = vrcp.pop %v1789
      %v1817 = vrcp.pop %v1791
      %v1818 = vrcp.pop %v1793
      %v1819 = vrcp.pop %v1795
      %v1820 = vrcp.pop %v1797
      %v1821 = vrcp.pop %v1799
      %v1822 = vrcp.pop %v1801
      %v1823 = vrcp.pop %v1803
      %v1824 = vrcp.pop %v1805
      %v1825 = vrcp.pop %v1807
      %v1826 = vrcp.pop %v1809
      %v1827 = vrcp.pop %v1811
      %v1828 = vmul.f32 %v1749, %v1812
      %v1829 = vmul.f32 %v1751, %v1813
      %v1830 = vmul.f32 %v1753, %v1814
      %v1831 = vmul.f32 %v1755, %v1815
      %v1832 = vmul.f32 %v1757, %v1816
      %v1833 = vmul.f32 %v1759, %v1817
      %v1834 = vmul.f32 %v1761, %v1818
      %v1835 = vmul.f32 %v1763, %v1819
      %v1836 = vmul.f32 %v1765, %v1820
      %v1837 = vmul.f32 %v1767, %v1821
      %v1838 = vmul.f32 %v1769, %v1822
      %v1839 = vmul.f32 %v1771, %v1823
      %v1840 = vmul.f32 %v1773, %v1824
      %v1841 = vmul.f32 %v1775, %v1825
      %v1842 = vmul.f32 %v1777, %v1826
      %v1843 = vmul.f32 %v1779, %v1827
      %v1844 = vpack.c.bf16 %v1829, %v1828
      %v1845 = vpack.c.bf16 %v1831, %v1830
      %v1846 = vpack.c.bf16 %v1833, %v1832
      %v1847 = vpack.c.bf16 %v1835, %v1834
      %v1848 = vpack.c.bf16 %v1837, %v1836
      %v1849 = vpack.c.bf16 %v1839, %v1838
      %v1850 = vpack.c.bf16 %v1841, %v1840
      %v1851 = vpack.c.bf16 %v1843, %v1842
      %1852 = vmatprep.subr.bf16.mxu0 0
      %1853 = vmatpush1.bf16.msra.mxu0 %v1540
      %1854 = vmatprep.subr.bf16.mxu0 0
      %1855 = vmatpush1.bf16.msra.mxu0 %v1541
      %1856 = vmatprep.subr.bf16.mxu0 0
      %1857 = vmatpush1.bf16.msra.mxu0 %v1542
      %1858 = vmatprep.subr.bf16.mxu0 0
      %1859 = vmatpush1.bf16.msra.mxu0 %v1543
      %1860 = vmatprep.subr.bf16.mxu0 0
      %1861 = vmatpush1.bf16.msra.mxu0 %v1544
      %1862 = vmatprep.subr.bf16.mxu0 0
      %1863 = vmatpush1.bf16.msra.mxu0 %v1545
      %1864 = vmatprep.subr.bf16.mxu0 0
      %1865 = vmatpush1.bf16.msra.mxu0 %v1546
      %1866 = vmatprep.subr.bf16.mxu0 0
      %1867 = vmatpush1.bf16.msra.mxu0 %v1547
      %1868 = vmatprep.subr.bf16.mxu0 0
      %1869 = vmatpush1.bf16.msra.mxu0 0
      %1870 = vmatprep.subr.bf16.mxu0 0
      %1871 = vmatpush1.bf16.msra.mxu0 0
      %1872 = vmatprep.subr.bf16.mxu0 0
      %1873 = vmatpush1.bf16.msra.mxu0 0
      %1874 = vmatprep.subr.bf16.mxu0 0
      %1875 = vmatpush1.bf16.msra.mxu0 0
      %1876 = vmatprep.subr.bf16.mxu0 0
      %1877 = vmatpush1.bf16.msra.mxu0 0
      %1878 = vmatprep.subr.bf16.mxu0 0
      %1879 = vmatpush1.bf16.msra.mxu0 0
      %1880 = vmatprep.subr.bf16.mxu0 0
      %1881 = vmatpush1.bf16.msra.mxu0 0
      %1882 = vmatprep.subr.bf16.mxu0 0
      %1883 = vmatpush1.bf16.msra.mxu0 0
      %1884 = vmatprep.mubr.bf16.mxu0 0
      %1885 = vmatmul.mubr.bf16.gmra.mrb[0].mxu0 %v1844
      %v1886 = vpop.f32.mrb[0].mxu0
      %v1887 = vadd.f32 0.0, %v1886
      %v1888 = vpop.f32.mrb[0].mxu0
      %v1889 = vpop.f32.mrb[0].mxu0
      %v1890 = vadd.f32 0.0, %v1889
      %v1891 = vpop.f32.mrb[0].mxu0
      %1892 = vmatprep.mubr.bf16.mxu0 0
      %1893 = vmatmul.mubr.bf16.gmra.mrb[0].mxu0 %v1845
      %v1894 = vpop.f32.mrb[0].mxu0
      %v1895 = vadd.f32 0.0, %v1894
      %v1896 = vpop.f32.mrb[0].mxu0
      %v1897 = vpop.f32.mrb[0].mxu0
      %v1898 = vadd.f32 0.0, %v1897
      %v1899 = vpop.f32.mrb[0].mxu0
      %1900 = vmatprep.mubr.bf16.mxu0 0
      %1901 = vmatmul.mubr.bf16.gmra.mrb[0].mxu0 %v1846
      %v1902 = vpop.f32.mrb[0].mxu0
      %v1903 = vadd.f32 0.0, %v1902
      %v1904 = vpop.f32.mrb[0].mxu0
      %v1905 = vpop.f32.mrb[0].mxu0
      %v1906 = vadd.f32 0.0, %v1905
      %v1907 = vpop.f32.mrb[0].mxu0
      %1908 = vmatprep.mubr.bf16.mxu0 0
      %1909 = vmatmul.mubr.bf16.gmra.mrb[0].mxu0 %v1847
      %v1910 = vpop.f32.mrb[0].mxu0
      %v1911 = vadd.f32 0.0, %v1910
      %v1912 = vpop.f32.mrb[0].mxu0
      %v1913 = vpop.f32.mrb[0].mxu0
      %v1914 = vadd.f32 0.0, %v1913
      %v1915 = vpop.f32.mrb[0].mxu0
      %1916 = vmatprep.mubr.bf16.mxu0 0
      %1917 = vmatmul.mubr.bf16.gmra.mrb[0].mxu0 %v1848
      %v1918 = vpop.f32.mrb[0].mxu0
      %v1919 = vadd.f32 0.0, %v1918
      %v1920 = vpop.f32.mrb[0].mxu0
      %v1921 = vpop.f32.mrb[0].mxu0
      %v1922 = vadd.f32 0.0, %v1921
      %v1923 = vpop.f32.mrb[0].mxu0
      %1924 = vmatprep.mubr.bf16.mxu0 0
      %1925 = vmatmul.mubr.bf16.gmra.mrb[0].mxu0 %v1849
      %v1926 = vpop.f32.mrb[0].mxu0
      %v1927 = vadd.f32 0.0, %v1926
      %v1928 = vpop.f32.mrb[0].mxu0
      %v1929 = vpop.f32.mrb[0].mxu0
      %v1930 = vadd.f32 0.0, %v1929
      %v1931 = vpop.f32.mrb[0].mxu0
      %1932 = vmatprep.mubr.bf16.mxu0 0
      %1933 = vmatmul.mubr.bf16.gmra.mrb[0].mxu0 %v1850
      %v1934 = vpop.f32.mrb[0].mxu0
      %v1935 = vadd.f32 0.0, %v1934
      %v1936 = vpop.f32.mrb[0].mxu0
      %v1937 = vpop.f32.mrb[0].mxu0
      %v1938 = vadd.f32 0.0, %v1937
      %v1939 = vpop.f32.mrb[0].mxu0
      %1940 = vmatprep.mubr.bf16.mxu0 0
      %1941 = vmatmul.mubr.bf16.gmra.mrb[0].mxu0 %v1851
      %v1942 = vpop.f32.mrb[0].mxu0
      %v1943 = vadd.f32 0.0, %v1942
      %v1944 = vpop.f32.mrb[0].mxu0
      %v1945 = vpop.f32.mrb[0].mxu0
      %v1946 = vadd.f32 0.0, %v1945
      %v1947 = vpop.f32.mrb[0].mxu0
      %1948 = vdwg.mxu0
      %1957 = vrot.lane.b32.xlu0 %v1524, 96
      %v1958 = vpop.permute.xlu0 %1957
      %1959 = vrot.lane.b32.xlu0 %v1525, 96
      %v1960 = vpop.permute.xlu0 %1959
      %1961 = vrot.lane.b32.xlu0 %v1526, 96
      %v1962 = vpop.permute.xlu0 %1961
      %1963 = vrot.lane.b32.xlu0 %v1527, 96
      %v1964 = vpop.permute.xlu0 %1963
      %1965 = vrot.lane.b32.xlu0 %v1528, 96
      %v1966 = vpop.permute.xlu0 %1965
      %1967 = vrot.lane.b32.xlu0 %v1529, 96
      %v1968 = vpop.permute.xlu0 %1967
      %1969 = vrot.lane.b32.xlu0 %v1530, 96
      %v1970 = vpop.permute.xlu0 %1969
      %1971 = vrot.lane.b32.xlu0 %v1531, 96
      %v1972 = vpop.permute.xlu0 %1971
      %1981 = vrot.lane.b32.xlu0 %v1532, 96
      %v1982 = vpop.permute.xlu0 %1981
      %1983 = vrot.lane.b32.xlu0 %v1533, 96
      %v1984 = vpop.permute.xlu0 %1983
      %1985 = vrot.lane.b32.xlu0 %v1534, 96
      %v1986 = vpop.permute.xlu0 %1985
      %1987 = vrot.lane.b32.xlu0 %v1535, 96
      %v1988 = vpop.permute.xlu0 %1987
      %1989 = vrot.lane.b32.xlu0 %v1536, 96
      %v1990 = vpop.permute.xlu0 %1989
      %1991 = vrot.lane.b32.xlu0 %v1537, 96
      %v1992 = vpop.permute.xlu0 %1991
      %1993 = vrot.lane.b32.xlu0 %v1538, 96
      %v1994 = vpop.permute.xlu0 %1993
      %1995 = vrot.lane.b32.xlu0 %v1539, 96
      %v1996 = vpop.permute.xlu0 %1995
      %v1998 = vsel %vm1554, %v1958, 0
      %v2001 = vsel %vm1554, %v1960, 0
      %v2004 = vsel %vm1554, %v1962, 0
      %v2007 = vsel %vm1554, %v1964, 0
      %v2010 = vsel %vm1554, %v1966, 0
      %v2013 = vsel %vm1554, %v1968, 0
      %v2016 = vsel %vm1554, %v1970, 0
      %v2019 = vsel %vm1554, %v1972, 0
      %v2022 = vsel %vm1554, %v1982, 0
      %v2025 = vsel %vm1554, %v1984, 0
      %v2028 = vsel %vm1554, %v1986, 0
      %v2031 = vsel %vm1554, %v1988, 0
      %v2034 = vsel %vm1554, %v1990, 0
      %v2037 = vsel %vm1554, %v1992, 0
      %v2040 = vsel %vm1554, %v1994, 0
      %v2043 = vsel %vm1554, %v1996, 0
      %2045 = vmatprep.subr.bf16.mxu0 0
      %2046 = vmatpush1.bf16.xpose.msra.mxu0 %v2022
      %2047 = vmatprep.subr.bf16.mxu0 0
      %2048 = vmatpush1.bf16.xpose.msra.mxu0 %v2025
      %2049 = vmatprep.subr.bf16.mxu0 0
      %2050 = vmatpush1.bf16.xpose.msra.mxu0 %v2028
      %2051 = vmatprep.subr.bf16.mxu0 0
      %2052 = vmatpush1.bf16.xpose.msra.mxu0 %v2031
      %2053 = vmatprep.subr.bf16.mxu0 0
      %2054 = vmatpush1.bf16.xpose.msra.mxu0 %v2034
      %2055 = vmatprep.subr.bf16.mxu0 0
      %2056 = vmatpush1.bf16.xpose.msra.mxu0 %v2037
      %2057 = vmatprep.subr.bf16.mxu0 0
      %2058 = vmatpush1.bf16.xpose.msra.mxu0 %v2040
      %2059 = vmatprep.subr.bf16.mxu0 0
      %2060 = vmatpush1.bf16.xpose.msra.mxu0 %v2043
      %2061 = vmatprep.subr.bf16.mxu0 0
      %2062 = vmatpush1.bf16.xpose.msra.mxu0 0
      %2063 = vmatprep.subr.bf16.mxu0 0
      %2064 = vmatpush1.bf16.xpose.msra.mxu0 0
      %2065 = vmatprep.subr.bf16.mxu0 0
      %2066 = vmatpush1.bf16.xpose.msra.mxu0 0
      %2067 = vmatprep.subr.bf16.mxu0 0
      %2068 = vmatpush1.bf16.xpose.msra.mxu0 0
      %2069 = vmatprep.subr.bf16.mxu0 0
      %2070 = vmatpush1.bf16.xpose.msra.mxu0 0
      %2071 = vmatprep.subr.bf16.mxu0 0
      %2072 = vmatpush1.bf16.xpose.msra.mxu0 0
      %2073 = vmatprep.subr.bf16.mxu0 0
      %2074 = vmatpush1.bf16.xpose.msra.mxu0 0
      %2075 = vmatprep.subr.bf16.mxu0 0
      %2076 = vmatpush1.bf16.xpose.msra.mxu0 0
      %2077 = vmatprep.mubr.bf16.mxu0 0
      %2078 = vmatmul.mubr.bf16.gmra.mrb[0].mxu0 %v1998
      %v2079 = vpop.f32.mrb[0].mxu0
      %v2080 = vadd.f32 %v1552, %v2079
      %v2081 = vpop.f32.mrb[0].mxu0
      %v2082 = vpop.f32.mrb[0].mxu0
      %v2083 = vadd.f32 %v1552, %v2082
      %v2084 = vpop.f32.mrb[0].mxu0
      %2085 = vmatprep.mubr.bf16.mxu0 0
      %2086 = vmatmul.mubr.bf16.gmra.mrb[0].mxu0 %v2001
      %v2087 = vpop.f32.mrb[0].mxu0
      %v2088 = vadd.f32 %v1552, %v2087
      %v2089 = vpop.f32.mrb[0].mxu0
      %v2090 = vpop.f32.mrb[0].mxu0
      %v2091 = vadd.f32 %v1552, %v2090
      %v2092 = vpop.f32.mrb[0].mxu0
      %2093 = vmatprep.mubr.bf16.mxu0 0
      %2094 = vmatmul.mubr.bf16.gmra.mrb[0].mxu0 %v2004
      %v2095 = vpop.f32.mrb[0].mxu0
      %v2096 = vadd.f32 %v1552, %v2095
      %v2097 = vpop.f32.mrb[0].mxu0
      %v2098 = vpop.f32.mrb[0].mxu0
      %v2099 = vadd.f32 %v1552, %v2098
      %v2100 = vpop.f32.mrb[0].mxu0
      %2101 = vmatprep.mubr.bf16.mxu0 0
      %2102 = vmatmul.mubr.bf16.gmra.mrb[0].mxu0 %v2007
      %v2103 = vpop.f32.mrb[0].mxu0
      %v2104 = vadd.f32 %v1552, %v2103
      %v2105 = vpop.f32.mrb[0].mxu0
      %v2106 = vpop.f32.mrb[0].mxu0
      %v2107 = vadd.f32 %v1552, %v2106
      %v2108 = vpop.f32.mrb[0].mxu0
      %2109 = vmatprep.mubr.bf16.mxu0 0
      %2110 = vmatmul.mubr.bf16.gmra.mrb[0].mxu0 %v2010
      %v2111 = vpop.f32.mrb[0].mxu0
      %v2112 = vadd.f32 %v1552, %v2111
      %v2113 = vpop.f32.mrb[0].mxu0
      %v2114 = vpop.f32.mrb[0].mxu0
      %v2115 = vadd.f32 %v1552, %v2114
      %v2116 = vpop.f32.mrb[0].mxu0
      %2117 = vmatprep.mubr.bf16.mxu0 0
      %2118 = vmatmul.mubr.bf16.gmra.mrb[0].mxu0 %v2013
      %v2119 = vpop.f32.mrb[0].mxu0
      %v2120 = vadd.f32 %v1552, %v2119
      %v2121 = vpop.f32.mrb[0].mxu0
      %v2122 = vpop.f32.mrb[0].mxu0
      %v2123 = vadd.f32 %v1552, %v2122
      %v2124 = vpop.f32.mrb[0].mxu0
      %2125 = vmatprep.mubr.bf16.mxu0 0
      %2126 = vmatmul.mubr.bf16.gmra.mrb[0].mxu0 %v2016
      %v2127 = vpop.f32.mrb[0].mxu0
      %v2128 = vadd.f32 %v1552, %v2127
      %v2129 = vpop.f32.mrb[0].mxu0
      %v2130 = vpop.f32.mrb[0].mxu0
      %v2131 = vadd.f32 %v1552, %v2130
      %v2132 = vpop.f32.mrb[0].mxu0
      %2133 = vmatprep.mubr.bf16.mxu0 0
      %2134 = vmatmul.mubr.bf16.gmra.mrb[0].mxu0 %v2019
      %v2135 = vpop.f32.mrb[0].mxu0
      %v2136 = vadd.f32 %v1552, %v2135
      %v2137 = vpop.f32.mrb[0].mxu0
      %v2138 = vpop.f32.mrb[0].mxu0
      %v2139 = vadd.f32 %v1552, %v2138
      %v2140 = vpop.f32.mrb[0].mxu0
      %2141 = vdwg.mxu0
      %2142 = vmax.xlane.f32.xlu0 %v2080
      %v2143 = vpop.xlane.xlu0 %2142
      %2144 = vmax.xlane.f32.xlu0 %v2083
      %v2145 = vpop.xlane.xlu0 %2144
      %2146 = vmax.xlane.f32.xlu0 %v2088
      %v2147 = vpop.xlane.xlu0 %2146
      %2148 = vmax.xlane.f32.xlu0 %v2091
      %v2149 = vpop.xlane.xlu0 %2148
      %2150 = vmax.xlane.f32.xlu0 %v2096
      %v2151 = vpop.xlane.xlu0 %2150
      %2152 = vmax.xlane.f32.xlu0 %v2099
      %v2153 = vpop.xlane.xlu0 %2152
      %2154 = vmax.xlane.f32.xlu0 %v2104
      %v2155 = vpop.xlane.xlu0 %2154
      %2156 = vmax.xlane.f32.xlu0 %v2107
      %v2157 = vpop.xlane.xlu0 %2156
      %2158 = vmax.xlane.f32.xlu0 %v2112
      %v2159 = vpop.xlane.xlu0 %2158
      %2160 = vmax.xlane.f32.xlu0 %v2115
      %v2161 = vpop.xlane.xlu0 %2160
      %2162 = vmax.xlane.f32.xlu0 %v2120
      %v2163 = vpop.xlane.xlu0 %2162
      %2164 = vmax.xlane.f32.xlu0 %v2123
      %v2165 = vpop.xlane.xlu0 %2164
      %2166 = vmax.xlane.f32.xlu0 %v2128
      %v2167 = vpop.xlane.xlu0 %2166
      %2168 = vmax.xlane.f32.xlu0 %v2131
      %v2169 = vpop.xlane.xlu0 %2168
      %2170 = vmax.xlane.f32.xlu0 %v2136
      %v2171 = vpop.xlane.xlu0 %2170
      %2172 = vmax.xlane.f32.xlu0 %v2139
      %v2173 = vpop.xlane.xlu0 %2172
      %v2174 = vsub.f32 %v2080, %v2143
      %v2175 = vsub.f32 %v2083, %v2145
      %v2176 = vsub.f32 %v2088, %v2147
      %v2177 = vsub.f32 %v2091, %v2149
      %v2178 = vsub.f32 %v2096, %v2151
      %v2179 = vsub.f32 %v2099, %v2153
      %v2180 = vsub.f32 %v2104, %v2155
      %v2181 = vsub.f32 %v2107, %v2157
      %v2182 = vsub.f32 %v2112, %v2159
      %v2183 = vsub.f32 %v2115, %v2161
      %v2184 = vsub.f32 %v2120, %v2163
      %v2185 = vsub.f32 %v2123, %v2165
      %v2186 = vsub.f32 %v2128, %v2167
      %v2187 = vsub.f32 %v2131, %v2169
      %v2188 = vsub.f32 %v2136, %v2171
      %v2189 = vsub.f32 %v2139, %v2173
      %v2190 = vmul.f32 %v2174, 1.442695
      %v2191 = vpow.pop %v2190
      %v2192 = vmul.f32 %v2175, 1.442695
      %v2193 = vpow.pop %v2192
      %v2194 = vmul.f32 %v2176, 1.442695
      %v2195 = vpow.pop %v2194
      %v2196 = vmul.f32 %v2177, 1.442695
      %v2197 = vpow.pop %v2196
      %v2198 = vmul.f32 %v2178, 1.442695
      %v2199 = vpow.pop %v2198
      %v2200 = vmul.f32 %v2179, 1.442695
      %v2201 = vpow.pop %v2200
      %v2202 = vmul.f32 %v2180, 1.442695
      %v2203 = vpow.pop %v2202
      %v2204 = vmul.f32 %v2181, 1.442695
      %v2205 = vpow.pop %v2204
      %v2206 = vmul.f32 %v2182, 1.442695
      %v2207 = vpow.pop %v2206
      %v2208 = vmul.f32 %v2183, 1.442695
      %v2209 = vpow.pop %v2208
      %v2210 = vmul.f32 %v2184, 1.442695
      %v2211 = vpow.pop %v2210
      %v2212 = vmul.f32 %v2185, 1.442695
      %v2213 = vpow.pop %v2212
      %v2214 = vmul.f32 %v2186, 1.442695
      %v2215 = vpow.pop %v2214
      %v2216 = vmul.f32 %v2187, 1.442695
      %v2217 = vpow.pop %v2216
      %v2218 = vmul.f32 %v2188, 1.442695
      %v2219 = vpow.pop %v2218
      %v2220 = vmul.f32 %v2189, 1.442695
      %v2221 = vpow.pop %v2220
      %2222 = vadd.xlane.f32.xlu0 %v2191
      %v2223 = vpop.xlane.xlu0 %2222
      %2224 = vadd.xlane.f32.xlu0 %v2193
      %v2225 = vpop.xlane.xlu0 %2224
      %2226 = vadd.xlane.f32.xlu0 %v2195
      %v2227 = vpop.xlane.xlu0 %2226
      %2228 = vadd.xlane.f32.xlu0 %v2197
      %v2229 = vpop.xlane.xlu0 %2228
      %2230 = vadd.xlane.f32.xlu0 %v2199
      %v2231 = vpop.xlane.xlu0 %2230
      %2232 = vadd.xlane.f32.xlu0 %v2201
      %v2233 = vpop.xlane.xlu0 %2232
      %2234 = vadd.xlane.f32.xlu0 %v2203
      %v2235 = vpop.xlane.xlu0 %2234
      %2236 = vadd.xlane.f32.xlu0 %v2205
      %v2237 = vpop.xlane.xlu0 %2236
      %2238 = vadd.xlane.f32.xlu0 %v2207
      %v2239 = vpop.xlane.xlu0 %2238
      %2240 = vadd.xlane.f32.xlu0 %v2209
      %v2241 = vpop.xlane.xlu0 %2240
      %2242 = vadd.xlane.f32.xlu0 %v2211
      %v2243 = vpop.xlane.xlu0 %2242
      %2244 = vadd.xlane.f32.xlu0 %v2213
      %v2245 = vpop.xlane.xlu0 %2244
      %2246 = vadd.xlane.f32.xlu0 %v2215
      %v2247 = vpop.xlane.xlu0 %2246
      %2248 = vadd.xlane.f32.xlu0 %v2217
      %v2249 = vpop.xlane.xlu0 %2248
      %2250 = vadd.xlane.f32.xlu0 %v2219
      %v2251 = vpop.xlane.xlu0 %2250
      %2252 = vadd.xlane.f32.xlu0 %v2221
      %v2253 = vpop.xlane.xlu0 %2252
      %v2254 = vrcp.pop %v2223
      %v2255 = vrcp.pop %v2225
      %v2256 = vrcp.pop %v2227
      %v2257 = vrcp.pop %v2229
      %v2258 = vrcp.pop %v2231
      %v2259 = vrcp.pop %v2233
      %v2260 = vrcp.pop %v2235
      %v2261 = vrcp.pop %v2237
      %v2262 = vrcp.pop %v2239
      %v2263 = vrcp.pop %v2241
      %v2264 = vrcp.pop %v2243
      %v2265 = vrcp.pop %v2245
      %v2266 = vrcp.pop %v2247
      %v2267 = vrcp.pop %v2249
      %v2268 = vrcp.pop %v2251
      %v2269 = vrcp.pop %v2253
      %v2270 = vmul.f32 %v2191, %v2254
      %v2271 = vmul.f32 %v2193, %v2255
      %v2272 = vmul.f32 %v2195, %v2256
      %v2273 = vmul.f32 %v2197, %v2257
      %v2274 = vmul.f32 %v2199, %v2258
      %v2275 = vmul.f32 %v2201, %v2259
      %v2276 = vmul.f32 %v2203, %v2260
      %v2277 = vmul.f32 %v2205, %v2261
      %v2278 = vmul.f32 %v2207, %v2262
      %v2279 = vmul.f32 %v2209, %v2263
      %v2280 = vmul.f32 %v2211, %v2264
      %v2281 = vmul.f32 %v2213, %v2265
      %v2282 = vmul.f32 %v2215, %v2266
      %v2283 = vmul.f32 %v2217, %v2267
      %v2284 = vmul.f32 %v2219, %v2268
      %v2285 = vmul.f32 %v2221, %v2269
      %v2286 = vpack.c.bf16 %v2271, %v2270
      %v2287 = vpack.c.bf16 %v2273, %v2272
      %v2288 = vpack.c.bf16 %v2275, %v2274
      %v2289 = vpack.c.bf16 %v2277, %v2276
      %v2290 = vpack.c.bf16 %v2279, %v2278
      %v2291 = vpack.c.bf16 %v2281, %v2280
      %v2292 = vpack.c.bf16 %v2283, %v2282
      %v2293 = vpack.c.bf16 %v2285, %v2284
      %2302 = vrot.lane.b32.xlu0 %v1540, 96
      %v2303 = vpop.permute.xlu0 %2302
      %2304 = vrot.lane.b32.xlu0 %v1541, 96
      %v2305 = vpop.permute.xlu0 %2304
      %2306 = vrot.lane.b32.xlu0 %v1542, 96
      %v2307 = vpop.permute.xlu0 %2306
      %2308 = vrot.lane.b32.xlu0 %v1543, 96
      %v2309 = vpop.permute.xlu0 %2308
      %2310 = vrot.lane.b32.xlu0 %v1544, 96
      %v2311 = vpop.permute.xlu0 %2310
      %2312 = vrot.lane.b32.xlu0 %v1545, 96
      %v2313 = vpop.permute.xlu0 %2312
      %2314 = vrot.lane.b32.xlu0 %v1546, 96
      %v2315 = vpop.permute.xlu0 %2314
      %2316 = vrot.lane.b32.xlu0 %v1547, 96
      %v2317 = vpop.permute.xlu0 %2316
      %2326 = vmatprep.subr.bf16.mxu0 0
      %2327 = vmatpush1.bf16.msra.mxu0 %v2303
      %2328 = vmatprep.subr.bf16.mxu0 0
      %2329 = vmatpush1.bf16.msra.mxu0 %v2305
      %2330 = vmatprep.subr.bf16.mxu0 0
      %2331 = vmatpush1.bf16.msra.mxu0 %v2307
      %2332 = vmatprep.subr.bf16.mxu0 0
      %2333 = vmatpush1.bf16.msra.mxu0 %v2309
      %2334 = vmatprep.subr.bf16.mxu0 0
      %2335 = vmatpush1.bf16.msra.mxu0 %v2311
      %2336 = vmatprep.subr.bf16.mxu0 0
      %2337 = vmatpush1.bf16.msra.mxu0 %v2313
      %2338 = vmatprep.subr.bf16.mxu0 0
      %2339 = vmatpush1.bf16.msra.mxu0 %v2315
      %2340 = vmatprep.subr.bf16.mxu0 0
      %2341 = vmatpush1.bf16.msra.mxu0 %v2317
      %2342 = vmatprep.subr.bf16.mxu0 0
      %2343 = vmatpush1.bf16.msra.mxu0 0
      %2344 = vmatprep.subr.bf16.mxu0 0
      %2345 = vmatpush1.bf16.msra.mxu0 0
      %2346 = vmatprep.subr.bf16.mxu0 0
      %2347 = vmatpush1.bf16.msra.mxu0 0
      %2348 = vmatprep.subr.bf16.mxu0 0
      %2349 = vmatpush1.bf16.msra.mxu0 0
      %2350 = vmatprep.subr.bf16.mxu0 0
      %2351 = vmatpush1.bf16.msra.mxu0 0
      %2352 = vmatprep.subr.bf16.mxu0 0
      %2353 = vmatpush1.bf16.msra.mxu0 0
      %2354 = vmatprep.subr.bf16.mxu0 0
      %2355 = vmatpush1.bf16.msra.mxu0 0
      %2356 = vmatprep.subr.bf16.mxu0 0
      %2357 = vmatpush1.bf16.msra.mxu0 0
      %2358 = vmatprep.mubr.bf16.mxu0 0
      %2359 = vmatmul.mubr.bf16.gmra.mrb[0].mxu0 %v2286
      %v2360 = vpop.f32.mrb[0].mxu0
      %v2361 = vadd.f32 0.0, %v2360
      %v2362 = vpop.f32.mrb[0].mxu0
      %v2363 = vpop.f32.mrb[0].mxu0
      %v2364 = vadd.f32 0.0, %v2363
      %v2365 = vpop.f32.mrb[0].mxu0
      %2366 = vmatprep.mubr.bf16.mxu0 0
      %2367 = vmatmul.mubr.bf16.gmra.mrb[0].mxu0 %v2287
      %v2368 = vpop.f32.mrb[0].mxu0
      %v2369 = vadd.f32 0.0, %v2368
      %v2370 = vpop.f32.mrb[0].mxu0
      %v2371 = vpop.f32.mrb[0].mxu0
      %v2372 = vadd.f32 0.0, %v2371
      %v2373 = vpop.f32.mrb[0].mxu0
      %2374 = vmatprep.mubr.bf16.mxu0 0
      %2375 = vmatmul.mubr.bf16.gmra.mrb[0].mxu0 %v2288
      %v2376 = vpop.f32.mrb[0].mxu0
      %v2377 = vadd.f32 0.0, %v2376
      %v2378 = vpop.f32.mrb[0].mxu0
      %v2379 = vpop.f32.mrb[0].mxu0
      %v2380 = vadd.f32 0.0, %v2379
      %v2381 = vpop.f32.mrb[0].mxu0
      %2382 = vmatprep.mubr.bf16.mxu0 0
      %2383 = vmatmul.mubr.bf16.gmra.mrb[0].mxu0 %v2289
      %v2384 = vpop.f32.mrb[0].mxu0
      %v2385 = vadd.f32 0.0, %v2384
      %v2386 = vpop.f32.mrb[0].mxu0
      %v2387 = vpop.f32.mrb[0].mxu0
      %v2388 = vadd.f32 0.0, %v2387
      %v2389 = vpop.f32.mrb[0].mxu0
      %2390 = vmatprep.mubr.bf16.mxu0 0
      %2391 = vmatmul.mubr.bf16.gmra.mrb[0].mxu0 %v2290
      %v2392 = vpop.f32.mrb[0].mxu0
      %v2393 = vadd.f32 0.0, %v2392
      %v2394 = vpop.f32.mrb[0].mxu0
      %v2395 = vpop.f32.mrb[0].mxu0
      %v2396 = vadd.f32 0.0, %v2395
      %v2397 = vpop.f32.mrb[0].mxu0
      %2398 = vmatprep.mubr.bf16.mxu0 0
      %2399 = vmatmul.mubr.bf16.gmra.mrb[0].mxu0 %v2291
      %v2400 = vpop.f32.mrb[0].mxu0
      %v2401 = vadd.f32 0.0, %v2400
      %v2402 = vpop.f32.mrb[0].mxu0
      %v2403 = vpop.f32.mrb[0].mxu0
      %v2404 = vadd.f32 0.0, %v2403
      %v2405 = vpop.f32.mrb[0].mxu0
      %2406 = vmatprep.mubr.bf16.mxu0 0
      %2407 = vmatmul.mubr.bf16.gmra.mrb[0].mxu0 %v2292
      %v2408 = vpop.f32.mrb[0].mxu0
      %v2409 = vadd.f32 0.0, %v2408
      %v2410 = vpop.f32.mrb[0].mxu0
      %v2411 = vpop.f32.mrb[0].mxu0
      %v2412 = vadd.f32 0.0, %v2411
      %v2413 = vpop.f32.mrb[0].mxu0
      %2414 = vmatprep.mubr.bf16.mxu0 0
      %2415 = vmatmul.mubr.bf16.gmra.mrb[0].mxu0 %v2293
      %v2416 = vpop.f32.mrb[0].mxu0
      %v2417 = vadd.f32 0.0, %v2416
      %v2418 = vpop.f32.mrb[0].mxu0
      %v2419 = vpop.f32.mrb[0].mxu0
      %v2420 = vadd.f32 0.0, %v2419
      %v2421 = vpop.f32.mrb[0].mxu0
      %2422 = vdwg.mxu0
      %2423 = vrot.lane.b32.xlu0 %v1524, 64
      %v2424 = vpop.permute.xlu0 %2423
      %2425 = vrot.lane.b32.xlu0 %v1525, 64
      %v2426 = vpop.permute.xlu0 %2425
      %2427 = vrot.lane.b32.xlu0 %v1526, 64
      %v2428 = vpop.permute.xlu0 %2427
      %2429 = vrot.lane.b32.xlu0 %v1527, 64
      %v2430 = vpop.permute.xlu0 %2429
      %2431 = vrot.lane.b32.xlu0 %v1528, 64
      %v2432 = vpop.permute.xlu0 %2431
      %2433 = vrot.lane.b32.xlu0 %v1529, 64
      %v2434 = vpop.permute.xlu0 %2433
      %2435 = vrot.lane.b32.xlu0 %v1530, 64
      %v2436 = vpop.permute.xlu0 %2435
      %2437 = vrot.lane.b32.xlu0 %v1531, 64
      %v2438 = vpop.permute.xlu0 %2437
      %2439 = vrot.lane.b32.xlu0 %v1532, 64
      %v2440 = vpop.permute.xlu0 %2439
      %2441 = vrot.lane.b32.xlu0 %v1533, 64
      %v2442 = vpop.permute.xlu0 %2441
      %2443 = vrot.lane.b32.xlu0 %v1534, 64
      %v2444 = vpop.permute.xlu0 %2443
      %2445 = vrot.lane.b32.xlu0 %v1535, 64
      %v2446 = vpop.permute.xlu0 %2445
      %2447 = vrot.lane.b32.xlu0 %v1536, 64
      %v2448 = vpop.permute.xlu0 %2447
      %2449 = vrot.lane.b32.xlu0 %v1537, 64
      %v2450 = vpop.permute.xlu0 %2449
      %2451 = vrot.lane.b32.xlu0 %v1538, 64
      %v2452 = vpop.permute.xlu0 %2451
      %2453 = vrot.lane.b32.xlu0 %v1539, 64
      %v2454 = vpop.permute.xlu0 %2453
      %v2456 = vsel %vm1554, %v2424, 0
      %v2459 = vsel %vm1554, %v2426, 0
      %v2462 = vsel %vm1554, %v2428, 0
      %v2465 = vsel %vm1554, %v2430, 0
      %v2468 = vsel %vm1554, %v2432, 0
      %v2471 = vsel %vm1554, %v2434, 0
      %v2474 = vsel %vm1554, %v2436, 0
      %v2477 = vsel %vm1554, %v2438, 0
      %v2480 = vsel %vm1554, %v2440, 0
      %v2483 = vsel %vm1554, %v2442, 0
      %v2486 = vsel %vm1554, %v2444, 0
      %v2489 = vsel %vm1554, %v2446, 0
      %v2492 = vsel %vm1554, %v2448, 0
      %v2495 = vsel %vm1554, %v2450, 0
      %v2498 = vsel %vm1554, %v2452, 0
      %v2501 = vsel %vm1554, %v2454, 0
      %2503 = vmatprep.subr.bf16.mxu0 0
      %2504 = vmatpush1.bf16.xpose.msra.mxu0 %v2480
      %2505 = vmatprep.subr.bf16.mxu0 0
      %2506 = vmatpush1.bf16.xpose.msra.mxu0 %v2483
      %2507 = vmatprep.subr.bf16.mxu0 0
      %2508 = vmatpush1.bf16.xpose.msra.mxu0 %v2486
      %2509 = vmatprep.subr.bf16.mxu0 0
      %2510 = vmatpush1.bf16.xpose.msra.mxu0 %v2489
      %2511 = vmatprep.subr.bf16.mxu0 0
      %2512 = vmatpush1.bf16.xpose.msra.mxu0 %v2492
      %2513 = vmatprep.subr.bf16.mxu0 0
      %2514 = vmatpush1.bf16.xpose.msra.mxu0 %v2495
      %2515 = vmatprep.subr.bf16.mxu0 0
      %2516 = vmatpush1.bf16.xpose.msra.mxu0 %v2498
      %2517 = vmatprep.subr.bf16.mxu0 0
      %2518 = vmatpush1.bf16.xpose.msra.mxu0 %v2501
      %2519 = vmatprep.subr.bf16.mxu0 0
      %2520 = vmatpush1.bf16.xpose.msra.mxu0 0
      %2521 = vmatprep.subr.bf16.mxu0 0
      %2522 = vmatpush1.bf16.xpose.msra.mxu0 0
      %2523 = vmatprep.subr.bf16.mxu0 0
      %2524 = vmatpush1.bf16.xpose.msra.mxu0 0
      %2525 = vmatprep.subr.bf16.mxu0 0
      %2526 = vmatpush1.bf16.xpose.msra.mxu0 0
      %2527 = vmatprep.subr.bf16.mxu0 0
      %2528 = vmatpush1.bf16.xpose.msra.mxu0 0
      %2529 = vmatprep.subr.bf16.mxu0 0
      %2530 = vmatpush1.bf16.xpose.msra.mxu0 0
      %2531 = vmatprep.subr.bf16.mxu0 0
      %2532 = vmatpush1.bf16.xpose.msra.mxu0 0
      %2533 = vmatprep.subr.bf16.mxu0 0
      %2534 = vmatpush1.bf16.xpose.msra.mxu0 0
      %2535 = vmatprep.mubr.bf16.mxu0 0
      %2536 = vmatmul.mubr.bf16.gmra.mrb[0].mxu0 %v2456
      %v2537 = vpop.f32.mrb[0].mxu0
      %v2538 = vadd.f32 %v1552, %v2537
      %v2539 = vpop.f32.mrb[0].mxu0
      %v2540 = vpop.f32.mrb[0].mxu0
      %v2541 = vadd.f32 %v1552, %v2540
      %v2542 = vpop.f32.mrb[0].mxu0
      %2543 = vmatprep.mubr.bf16.mxu0 0
      %2544 = vmatmul.mubr.bf16.gmra.mrb[0].mxu0 %v2459
      %v2545 = vpop.f32.mrb[0].mxu0
      %v2546 = vadd.f32 %v1552, %v2545
      %v2547 = vpop.f32.mrb[0].mxu0
      %v2548 = vpop.f32.mrb[0].mxu0
      %v2549 = vadd.f32 %v1552, %v2548
      %v2550 = vpop.f32.mrb[0].mxu0
      %2551 = vmatprep.mubr.bf16.mxu0 0
      %2552 = vmatmul.mubr.bf16.gmra.mrb[0].mxu0 %v2462
      %v2553 = vpop.f32.mrb[0].mxu0
      %v2554 = vadd.f32 %v1552, %v2553
      %v2555 = vpop.f32.mrb[0].mxu0
      %v2556 = vpop.f32.mrb[0].mxu0
      %v2557 = vadd.f32 %v1552, %v2556
      %v2558 = vpop.f32.mrb[0].mxu0
      %2559 = vmatprep.mubr.bf16.mxu0 0
      %2560 = vmatmul.mubr.bf16.gmra.mrb[0].mxu0 %v2465
      %v2561 = vpop.f32.mrb[0].mxu0
      %v2562 = vadd.f32 %v1552, %v2561
      %v2563 = vpop.f32.mrb[0].mxu0
      %v2564 = vpop.f32.mrb[0].mxu0
      %v2565 = vadd.f32 %v1552, %v2564
      %v2566 = vpop.f32.mrb[0].mxu0
      %2567 = vmatprep.mubr.bf16.mxu0 0
      %2568 = vmatmul.mubr.bf16.gmra.mrb[0].mxu0 %v2468
      %v2569 = vpop.f32.mrb[0].mxu0
      %v2570 = vadd.f32 %v1552, %v2569
      %v2571 = vpop.f32.mrb[0].mxu0
      %v2572 = vpop.f32.mrb[0].mxu0
      %v2573 = vadd.f32 %v1552, %v2572
      %v2574 = vpop.f32.mrb[0].mxu0
      %2575 = vmatprep.mubr.bf16.mxu0 0
      %2576 = vmatmul.mubr.bf16.gmra.mrb[0].mxu0 %v2471
      %v2577 = vpop.f32.mrb[0].mxu0
      %v2578 = vadd.f32 %v1552, %v2577
      %v2579 = vpop.f32.mrb[0].mxu0
      %v2580 = vpop.f32.mrb[0].mxu0
      %v2581 = vadd.f32 %v1552, %v2580
      %v2582 = vpop.f32.mrb[0].mxu0
      %2583 = vmatprep.mubr.bf16.mxu0 0
      %2584 = vmatmul.mubr.bf16.gmra.mrb[0].mxu0 %v2474
      %v2585 = vpop.f32.mrb[0].mxu0
      %v2586 = vadd.f32 %v1552, %v2585
      %v2587 = vpop.f32.mrb[0].mxu0
      %v2588 = vpop.f32.mrb[0].mxu0
      %v2589 = vadd.f32 %v1552, %v2588
      %v2590 = vpop.f32.mrb[0].mxu0
      %2591 = vmatprep.mubr.bf16.mxu0 0
      %2592 = vmatmul.mubr.bf16.gmra.mrb[0].mxu0 %v2477
      %v2593 = vpop.f32.mrb[0].mxu0
      %v2594 = vadd.f32 %v1552, %v2593
      %v2595 = vpop.f32.mrb[0].mxu0
      %v2596 = vpop.f32.mrb[0].mxu0
      %v2597 = vadd.f32 %v1552, %v2596
      %v2598 = vpop.f32.mrb[0].mxu0
      %2599 = vdwg.mxu0
      %2600 = vmax.xlane.f32.xlu0 %v2538
      %v2601 = vpop.xlane.xlu0 %2600
      %2602 = vmax.xlane.f32.xlu0 %v2541
      %v2603 = vpop.xlane.xlu0 %2602
      %2604 = vmax.xlane.f32.xlu0 %v2546
      %v2605 = vpop.xlane.xlu0 %2604
      %2606 = vmax.xlane.f32.xlu0 %v2549
      %v2607 = vpop.xlane.xlu0 %2606
      %2608 = vmax.xlane.f32.xlu0 %v2554
      %v2609 = vpop.xlane.xlu0 %2608
      %2610 = vmax.xlane.f32.xlu0 %v2557
      %v2611 = vpop.xlane.xlu0 %2610
      %2612 = vmax.xlane.f32.xlu0 %v2562
      %v2613 = vpop.xlane.xlu0 %2612
      %2614 = vmax.xlane.f32.xlu0 %v2565
      %v2615 = vpop.xlane.xlu0 %2614
      %2616 = vmax.xlane.f32.xlu0 %v2570
      %v2617 = vpop.xlane.xlu0 %2616
      %2618 = vmax.xlane.f32.xlu0 %v2573
      %v2619 = vpop.xlane.xlu0 %2618
      %2620 = vmax.xlane.f32.xlu0 %v2578
      %v2621 = vpop.xlane.xlu0 %2620
      %2622 = vmax.xlane.f32.xlu0 %v2581
      %v2623 = vpop.xlane.xlu0 %2622
      %2624 = vmax.xlane.f32.xlu0 %v2586
      %v2625 = vpop.xlane.xlu0 %2624
      %2626 = vmax.xlane.f32.xlu0 %v2589
      %v2627 = vpop.xlane.xlu0 %2626
      %2628 = vmax.xlane.f32.xlu0 %v2594
      %v2629 = vpop.xlane.xlu0 %2628
      %2630 = vmax.xlane.f32.xlu0 %v2597
      %v2631 = vpop.xlane.xlu0 %2630
      %v2632 = vsub.f32 %v2538, %v2601
      %v2633 = vsub.f32 %v2541, %v2603
      %v2634 = vsub.f32 %v2546, %v2605
      %v2635 = vsub.f32 %v2549, %v2607
      %v2636 = vsub.f32 %v2554, %v2609
      %v2637 = vsub.f32 %v2557, %v2611
      %v2638 = vsub.f32 %v2562, %v2613
      %v2639 = vsub.f32 %v2565, %v2615
      %v2640 = vsub.f32 %v2570, %v2617
      %v2641 = vsub.f32 %v2573, %v2619
      %v2642 = vsub.f32 %v2578, %v2621
      %v2643 = vsub.f32 %v2581, %v2623
      %v2644 = vsub.f32 %v2586, %v2625
      %v2645 = vsub.f32 %v2589, %v2627
      %v2646 = vsub.f32 %v2594, %v2629
      %v2647 = vsub.f32 %v2597, %v2631
      %v2648 = vmul.f32 %v2632, 1.442695
      %v2649 = vpow.pop %v2648
      %v2650 = vmul.f32 %v2633, 1.442695
      %v2651 = vpow.pop %v2650
      %v2652 = vmul.f32 %v2634, 1.442695
      %v2653 = vpow.pop %v2652
      %v2654 = vmul.f32 %v2635, 1.442695
      %v2655 = vpow.pop %v2654
      %v2656 = vmul.f32 %v2636, 1.442695
      %v2657 = vpow.pop %v2656
      %v2658 = vmul.f32 %v2637, 1.442695
      %v2659 = vpow.pop %v2658
      %v2660 = vmul.f32 %v2638, 1.442695
      %v2661 = vpow.pop %v2660
      %v2662 = vmul.f32 %v2639, 1.442695
      %v2663 = vpow.pop %v2662
      %v2664 = vmul.f32 %v2640, 1.442695
      %v2665 = vpow.pop %v2664
      %v2666 = vmul.f32 %v2641, 1.442695
      %v2667 = vpow.pop %v2666
      %v2668 = vmul.f32 %v2642, 1.442695
      %v2669 = vpow.pop %v2668
      %v2670 = vmul.f32 %v2643, 1.442695
      %v2671 = vpow.pop %v2670
      %v2672 = vmul.f32 %v2644, 1.442695
      %v2673 = vpow.pop %v2672
      %v2674 = vmul.f32 %v2645, 1.442695
      %v2675 = vpow.pop %v2674
      %v2676 = vmul.f32 %v2646, 1.442695
      %v2677 = vpow.pop %v2676
      %v2678 = vmul.f32 %v2647, 1.442695
      %v2679 = vpow.pop %v2678
      %2680 = vadd.xlane.f32.xlu0 %v2649
      %v2681 = vpop.xlane.xlu0 %2680
      %2682 = vadd.xlane.f32.xlu0 %v2651
      %v2683 = vpop.xlane.xlu0 %2682
      %2684 = vadd.xlane.f32.xlu0 %v2653
      %v2685 = vpop.xlane.xlu0 %2684
      %2686 = vadd.xlane.f32.xlu0 %v2655
      %v2687 = vpop.xlane.xlu0 %2686
      %2688 = vadd.xlane.f32.xlu0 %v2657
      %v2689 = vpop.xlane.xlu0 %2688
      %2690 = vadd.xlane.f32.xlu0 %v2659
      %v2691 = vpop.xlane.xlu0 %2690
      %2692 = vadd.xlane.f32.xlu0 %v2661
      %v2693 = vpop.xlane.xlu0 %2692
      %2694 = vadd.xlane.f32.xlu0 %v2663
      %v2695 = vpop.xlane.xlu0 %2694
      %2696 = vadd.xlane.f32.xlu0 %v2665
      %v2697 = vpop.xlane.xlu0 %2696
      %2698 = vadd.xlane.f32.xlu0 %v2667
      %v2699 = vpop.xlane.xlu0 %2698
      %2700 = vadd.xlane.f32.xlu0 %v2669
      %v2701 = vpop.xlane.xlu0 %2700
      %2702 = vadd.xlane.f32.xlu0 %v2671
      %v2703 = vpop.xlane.xlu0 %2702
      %2704 = vadd.xlane.f32.xlu0 %v2673
      %v2705 = vpop.xlane.xlu0 %2704
      %2706 = vadd.xlane.f32.xlu0 %v2675
      %v2707 = vpop.xlane.xlu0 %2706
      %2708 = vadd.xlane.f32.xlu0 %v2677
      %v2709 = vpop.xlane.xlu0 %2708
      %2710 = vadd.xlane.f32.xlu0 %v2679
      %v2711 = vpop.xlane.xlu0 %2710
      %v2712 = vrcp.pop %v2681
      %v2713 = vrcp.pop %v2683
      %v2714 = vrcp.pop %v2685
      %v2715 = vrcp.pop %v2687
      %v2716 = vrcp.pop %v2689
      %v2717 = vrcp.pop %v2691
      %v2718 = vrcp.pop %v2693
      %v2719 = vrcp.pop %v2695
      %v2720 = vrcp.pop %v2697
      %v2721 = vrcp.pop %v2699
      %v2722 = vrcp.pop %v2701
      %v2723 = vrcp.pop %v2703
      %v2724 = vrcp.pop %v2705
      %v2725 = vrcp.pop %v2707
      %v2726 = vrcp.pop %v2709
      %v2727 = vrcp.pop %v2711
      %v2728 = vmul.f32 %v2649, %v2712
      %v2729 = vmul.f32 %v2651, %v2713
      %v2730 = vmul.f32 %v2653, %v2714
      %v2731 = vmul.f32 %v2655, %v2715
      %v2732 = vmul.f32 %v2657, %v2716
      %v2733 = vmul.f32 %v2659, %v2717
      %v2734 = vmul.f32 %v2661, %v2718
      %v2735 = vmul.f32 %v2663, %v2719
      %v2736 = vmul.f32 %v2665, %v2720
      %v2737 = vmul.f32 %v2667, %v2721
      %v2738 = vmul.f32 %v2669, %v2722
      %v2739 = vmul.f32 %v2671, %v2723
      %v2740 = vmul.f32 %v2673, %v2724
      %v2741 = vmul.f32 %v2675, %v2725
      %v2742 = vmul.f32 %v2677, %v2726
      %v2743 = vmul.f32 %v2679, %v2727
      %v2744 = vpack.c.bf16 %v2729, %v2728
      %v2745 = vpack.c.bf16 %v2731, %v2730
      %v2746 = vpack.c.bf16 %v2733, %v2732
      %v2747 = vpack.c.bf16 %v2735, %v2734
      %v2748 = vpack.c.bf16 %v2737, %v2736
      %v2749 = vpack.c.bf16 %v2739, %v2738
      %v2750 = vpack.c.bf16 %v2741, %v2740
      %v2751 = vpack.c.bf16 %v2743, %v2742
      %2752 = vrot.lane.b32.xlu0 %v1540, 64
      %v2753 = vpop.permute.xlu0 %2752
      %2754 = vrot.lane.b32.xlu0 %v1541, 64
      %v2755 = vpop.permute.xlu0 %2754
      %2756 = vrot.lane.b32.xlu0 %v1542, 64
      %v2757 = vpop.permute.xlu0 %2756
      %2758 = vrot.lane.b32.xlu0 %v1543, 64
      %v2759 = vpop.permute.xlu0 %2758
      %2760 = vrot.lane.b32.xlu0 %v1544, 64
      %v2761 = vpop.permute.xlu0 %2760
      %2762 = vrot.lane.b32.xlu0 %v1545, 64
      %v2763 = vpop.permute.xlu0 %2762
      %2764 = vrot.lane.b32.xlu0 %v1546, 64
      %v2765 = vpop.permute.xlu0 %2764
      %2766 = vrot.lane.b32.xlu0 %v1547, 64
      %v2767 = vpop.permute.xlu0 %2766
      %2776 = vmatprep.subr.bf16.mxu0 0
      %2777 = vmatpush1.bf16.msra.mxu0 %v2753
      %2778 = vmatprep.subr.bf16.mxu0 0
      %2779 = vmatpush1.bf16.msra.mxu0 %v2755
      %2780 = vmatprep.subr.bf16.mxu0 0
      %2781 = vmatpush1.bf16.msra.mxu0 %v2757
      %2782 = vmatprep.subr.bf16.mxu0 0
      %2783 = vmatpush1.bf16.msra.mxu0 %v2759
      %2784 = vmatprep.subr.bf16.mxu0 0
      %2785 = vmatpush1.bf16.msra.mxu0 %v2761
      %2786 = vmatprep.subr.bf16.mxu0 0
      %2787 = vmatpush1.bf16.msra.mxu0 %v2763
      %2788 = vmatprep.subr.bf16.mxu0 0
      %2789 = vmatpush1.bf16.msra.mxu0 %v2765
      %2790 = vmatprep.subr.bf16.mxu0 0
      %2791 = vmatpush1.bf16.msra.mxu0 %v2767
      %2792 = vmatprep.subr.bf16.mxu0 0
      %2793 = vmatpush1.bf16.msra.mxu0 0
      %2794 = vmatprep.subr.bf16.mxu0 0
      %2795 = vmatpush1.bf16.msra.mxu0 0
      %2796 = vmatprep.subr.bf16.mxu0 0
      %2797 = vmatpush1.bf16.msra.mxu0 0
      %2798 = vmatprep.subr.bf16.mxu0 0
      %2799 = vmatpush1.bf16.msra.mxu0 0
      %2800 = vmatprep.subr.bf16.mxu0 0
      %2801 = vmatpush1.bf16.msra.mxu0 0
      %2802 = vmatprep.subr.bf16.mxu0 0
      %2803 = vmatpush1.bf16.msra.mxu0 0
      %2804 = vmatprep.subr.bf16.mxu0 0
      %2805 = vmatpush1.bf16.msra.mxu0 0
      %2806 = vmatprep.subr.bf16.mxu0 0
      %2807 = vmatpush1.bf16.msra.mxu0 0
      %2808 = vmatprep.mubr.bf16.mxu0 0
      %2809 = vmatmul.mubr.bf16.gmra.mrb[0].mxu0 %v2744
      %v2810 = vpop.f32.mrb[0].mxu0
      %v2811 = vadd.f32 0.0, %v2810
      %v2812 = vpop.f32.mrb[0].mxu0
      %v2813 = vpop.f32.mrb[0].mxu0
      %v2814 = vadd.f32 0.0, %v2813
      %v2815 = vpop.f32.mrb[0].mxu0
      %2816 = vmatprep.mubr.bf16.mxu0 0
      %2817 = vmatmul.mubr.bf16.gmra.mrb[0].mxu0 %v2745
      %v2818 = vpop.f32.mrb[0].mxu0
      %v2819 = vadd.f32 0.0, %v2818
      %v2820 = vpop.f32.mrb[0].mxu0
      %v2821 = vpop.f32.mrb[0].mxu0
      %v2822 = vadd.f32 0.0, %v2821
      %v2823 = vpop.f32.mrb[0].mxu0
      %2824 = vmatprep.mubr.bf16.mxu0 0
      %2825 = vmatmul.mubr.bf16.gmra.mrb[0].mxu0 %v2746
      %v2826 = vpop.f32.mrb[0].mxu0
      %v2827 = vadd.f32 0.0, %v2826
      %v2828 = vpop.f32.mrb[0].mxu0
      %v2829 = vpop.f32.mrb[0].mxu0
      %v2830 = vadd.f32 0.0, %v2829
      %v2831 = vpop.f32.mrb[0].mxu0
      %2832 = vmatprep.mubr.bf16.mxu0 0
      %2833 = vmatmul.mubr.bf16.gmra.mrb[0].mxu0 %v2747
      %v2834 = vpop.f32.mrb[0].mxu0
      %v2835 = vadd.f32 0.0, %v2834
      %v2836 = vpop.f32.mrb[0].mxu0
      %v2837 = vpop.f32.mrb[0].mxu0
      %v2838 = vadd.f32 0.0, %v2837
      %v2839 = vpop.f32.mrb[0].mxu0
      %2840 = vmatprep.mubr.bf16.mxu0 0
      %2841 = vmatmul.mubr.bf16.gmra.mrb[0].mxu0 %v2748
      %v2842 = vpop.f32.mrb[0].mxu0
      %v2843 = vadd.f32 0.0, %v2842
      %v2844 = vpop.f32.mrb[0].mxu0
      %v2845 = vpop.f32.mrb[0].mxu0
      %v2846 = vadd.f32 0.0, %v2845
      %v2847 = vpop.f32.mrb[0].mxu0
      %2848 = vmatprep.mubr.bf16.mxu0 0
      %2849 = vmatmul.mubr.bf16.gmra.mrb[0].mxu0 %v2749
      %v2850 = vpop.f32.mrb[0].mxu0
      %v2851 = vadd.f32 0.0, %v2850
      %v2852 = vpop.f32.mrb[0].mxu0
      %v2853 = vpop.f32.mrb[0].mxu0
      %v2854 = vadd.f32 0.0, %v2853
      %v2855 = vpop.f32.mrb[0].mxu0
      %2856 = vmatprep.mubr.bf16.mxu0 0
      %2857 = vmatmul.mubr.bf16.gmra.mrb[0].mxu0 %v2750
      %v2858 = vpop.f32.mrb[0].mxu0
      %v2859 = vadd.f32 0.0, %v2858
      %v2860 = vpop.f32.mrb[0].mxu0
      %v2861 = vpop.f32.mrb[0].mxu0
      %v2862 = vadd.f32 0.0, %v2861
      %v2863 = vpop.f32.mrb[0].mxu0
      %2864 = vmatprep.mubr.bf16.mxu0 0
      %2865 = vmatmul.mubr.bf16.gmra.mrb[0].mxu0 %v2751
      %v2866 = vpop.f32.mrb[0].mxu0
      %v2867 = vadd.f32 0.0, %v2866
      %v2868 = vpop.f32.mrb[0].mxu0
      %v2869 = vpop.f32.mrb[0].mxu0
      %v2870 = vadd.f32 0.0, %v2869
      %v2871 = vpop.f32.mrb[0].mxu0
      %2872 = vdwg.mxu0
      %2873 = vrot.lane.b32.xlu0 %v1524, 32
      %v2874 = vpop.permute.xlu0 %2873
      %2875 = vrot.lane.b32.xlu0 %v1525, 32
      %v2876 = vpop.permute.xlu0 %2875
      %2877 = vrot.lane.b32.xlu0 %v1526, 32
      %v2878 = vpop.permute.xlu0 %2877
      %2879 = vrot.lane.b32.xlu0 %v1527, 32
      %v2880 = vpop.permute.xlu0 %2879
      %2881 = vrot.lane.b32.xlu0 %v1528, 32
      %v2882 = vpop.permute.xlu0 %2881
      %2883 = vrot.lane.b32.xlu0 %v1529, 32
      %v2884 = vpop.permute.xlu0 %2883
      %2885 = vrot.lane.b32.xlu0 %v1530, 32
      %v2886 = vpop.permute.xlu0 %2885
      %2887 = vrot.lane.b32.xlu0 %v1531, 32
      %v2888 = vpop.permute.xlu0 %2887
      %2889 = vrot.lane.b32.xlu0 %v1532, 32
      %v2890 = vpop.permute.xlu0 %2889
      %2891 = vrot.lane.b32.xlu0 %v1533, 32
      %v2892 = vpop.permute.xlu0 %2891
      %2893 = vrot.lane.b32.xlu0 %v1534, 32
      %v2894 = vpop.permute.xlu0 %2893
      %2895 = vrot.lane.b32.xlu0 %v1535, 32
      %v2896 = vpop.permute.xlu0 %2895
      %2897 = vrot.lane.b32.xlu0 %v1536, 32
      %v2898 = vpop.permute.xlu0 %2897
      %2899 = vrot.lane.b32.xlu0 %v1537, 32
      %v2900 = vpop.permute.xlu0 %2899
      %2901 = vrot.lane.b32.xlu0 %v1538, 32
      %v2902 = vpop.permute.xlu0 %2901
      %2903 = vrot.lane.b32.xlu0 %v1539, 32
      %v2904 = vpop.permute.xlu0 %2903
      %v2906 = vsel %vm1554, %v2874, 0
      %v2909 = vsel %vm1554, %v2876, 0
      %v2912 = vsel %vm1554, %v2878, 0
      %v2915 = vsel %vm1554, %v2880, 0
      %v2918 = vsel %vm1554, %v2882, 0
      %v2921 = vsel %vm1554, %v2884, 0
      %v2924 = vsel %vm1554, %v2886, 0
      %v2927 = vsel %vm1554, %v2888, 0
      %v2930 = vsel %vm1554, %v2890, 0
      %v2933 = vsel %vm1554, %v2892, 0
      %v2936 = vsel %vm1554, %v2894, 0
      %v2939 = vsel %vm1554, %v2896, 0
      %v2942 = vsel %vm1554, %v2898, 0
      %v2945 = vsel %vm1554, %v2900, 0
      %v2948 = vsel %vm1554, %v2902, 0
      %v2951 = vsel %vm1554, %v2904, 0
      %2953 = vmatprep.subr.bf16.mxu0 0
      %2954 = vmatpush1.bf16.xpose.msra.mxu0 %v2930
      %2955 = vmatprep.subr.bf16.mxu0 0
      %2956 = vmatpush1.bf16.xpose.msra.mxu0 %v2933
      %2957 = vmatprep.subr.bf16.mxu0 0
      %2958 = vmatpush1.bf16.xpose.msra.mxu0 %v2936
      %2959 = vmatprep.subr.bf16.mxu0 0
      %2960 = vmatpush1.bf16.xpose.msra.mxu0 %v2939
      %2961 = vmatprep.subr.bf16.mxu0 0
      %2962 = vmatpush1.bf16.xpose.msra.mxu0 %v2942
      %2963 = vmatprep.subr.bf16.mxu0 0
      %2964 = vmatpush1.bf16.xpose.msra.mxu0 %v2945
      %2965 = vmatprep.subr.bf16.mxu0 0
      %2966 = vmatpush1.bf16.xpose.msra.mxu0 %v2948
      %2967 = vmatprep.subr.bf16.mxu0 0
      %2968 = vmatpush1.bf16.xpose.msra.mxu0 %v2951
      %2969 = vmatprep.subr.bf16.mxu0 0
      %2970 = vmatpush1.bf16.xpose.msra.mxu0 0
      %2971 = vmatprep.subr.bf16.mxu0 0
      %2972 = vmatpush1.bf16.xpose.msra.mxu0 0
      %2973 = vmatprep.subr.bf16.mxu0 0
      %2974 = vmatpush1.bf16.xpose.msra.mxu0 0
      %2975 = vmatprep.subr.bf16.mxu0 0
      %2976 = vmatpush1.bf16.xpose.msra.mxu0 0
      %2977 = vmatprep.subr.bf16.mxu0 0
      %2978 = vmatpush1.bf16.xpose.msra.mxu0 0
      %2979 = vmatprep.subr.bf16.mxu0 0
      %2980 = vmatpush1.bf16.xpose.msra.mxu0 0
      %2981 = vmatprep.subr.bf16.mxu0 0
      %2982 = vmatpush1.bf16.xpose.msra.mxu0 0
      %2983 = vmatprep.subr.bf16.mxu0 0
      %2984 = vmatpush1.bf16.xpose.msra.mxu0 0
      %2985 = vmatprep.mubr.bf16.mxu0 0
      %2986 = vmatmul.mubr.bf16.gmra.mrb[0].mxu0 %v2906
      %v2987 = vpop.f32.mrb[0].mxu0
      %v2988 = vadd.f32 %v1552, %v2987
      %v2989 = vpop.f32.mrb[0].mxu0
      %v2990 = vpop.f32.mrb[0].mxu0
      %v2991 = vadd.f32 %v1552, %v2990
      %v2992 = vpop.f32.mrb[0].mxu0
      %2993 = vmatprep.mubr.bf16.mxu0 0
      %2994 = vmatmul.mubr.bf16.gmra.mrb[0].mxu0 %v2909
      %v2995 = vpop.f32.mrb[0].mxu0
      %v2996 = vadd.f32 %v1552, %v2995
      %v2997 = vpop.f32.mrb[0].mxu0
      %v2998 = vpop.f32.mrb[0].mxu0
      %v2999 = vadd.f32 %v1552, %v2998
      %v3000 = vpop.f32.mrb[0].mxu0
      %3001 = vmatprep.mubr.bf16.mxu0 0
      %3002 = vmatmul.mubr.bf16.gmra.mrb[0].mxu0 %v2912
      %v3003 = vpop.f32.mrb[0].mxu0
      %v3004 = vadd.f32 %v1552, %v3003
      %v3005 = vpop.f32.mrb[0].mxu0
      %v3006 = vpop.f32.mrb[0].mxu0
      %v3007 = vadd.f32 %v1552, %v3006
      %v3008 = vpop.f32.mrb[0].mxu0
      %3009 = vmatprep.mubr.bf16.mxu0 0
      %3010 = vmatmul.mubr.bf16.gmra.mrb[0].mxu0 %v2915
      %v3011 = vpop.f32.mrb[0].mxu0
      %v3012 = vadd.f32 %v1552, %v3011
      %v3013 = vpop.f32.mrb[0].mxu0
      %v3014 = vpop.f32.mrb[0].mxu0
      %v3015 = vadd.f32 %v1552, %v3014
      %v3016 = vpop.f32.mrb[0].mxu0
      %3017 = vmatprep.mubr.bf16.mxu0 0
      %3018 = vmatmul.mubr.bf16.gmra.mrb[0].mxu0 %v2918
      %v3019 = vpop.f32.mrb[0].mxu0
      %v3020 = vadd.f32 %v1552, %v3019
      %v3021 = vpop.f32.mrb[0].mxu0
      %v3022 = vpop.f32.mrb[0].mxu0
      %v3023 = vadd.f32 %v1552, %v3022
      %v3024 = vpop.f32.mrb[0].mxu0
      %3025 = vmatprep.mubr.bf16.mxu0 0
      %3026 = vmatmul.mubr.bf16.gmra.mrb[0].mxu0 %v2921
      %v3027 = vpop.f32.mrb[0].mxu0
      %v3028 = vadd.f32 %v1552, %v3027
      %v3029 = vpop.f32.mrb[0].mxu0
      %v3030 = vpop.f32.mrb[0].mxu0
      %v3031 = vadd.f32 %v1552, %v3030
      %v3032 = vpop.f32.mrb[0].mxu0
      %3033 = vmatprep.mubr.bf16.mxu0 0
      %3034 = vmatmul.mubr.bf16.gmra.mrb[0].mxu0 %v2924
      %v3035 = vpop.f32.mrb[0].mxu0
      %v3036 = vadd.f32 %v1552, %v3035
      %v3037 = vpop.f32.mrb[0].mxu0
      %v3038 = vpop.f32.mrb[0].mxu0
      %v3039 = vadd.f32 %v1552, %v3038
      %v3040 = vpop.f32.mrb[0].mxu0
      %3041 = vmatprep.mubr.bf16.mxu0 0
      %3042 = vmatmul.mubr.bf16.gmra.mrb[0].mxu0 %v2927
      %v3043 = vpop.f32.mrb[0].mxu0
      %v3044 = vadd.f32 %v1552, %v3043
      %v3045 = vpop.f32.mrb[0].mxu0
      %v3046 = vpop.f32.mrb[0].mxu0
      %v3047 = vadd.f32 %v1552, %v3046
      %v3048 = vpop.f32.mrb[0].mxu0
      %3049 = vdwg.mxu0
      %3050 = vmax.xlane.f32.xlu0 %v2988
      %v3051 = vpop.xlane.xlu0 %3050
      %3052 = vmax.xlane.f32.xlu0 %v2991
      %v3053 = vpop.xlane.xlu0 %3052
      %3054 = vmax.xlane.f32.xlu0 %v2996
      %v3055 = vpop.xlane.xlu0 %3054
      %3056 = vmax.xlane.f32.xlu0 %v2999
      %v3057 = vpop.xlane.xlu0 %3056
      %3058 = vmax.xlane.f32.xlu0 %v3004
      %v3059 = vpop.xlane.xlu0 %3058
      %3060 = vmax.xlane.f32.xlu0 %v3007
      %v3061 = vpop.xlane.xlu0 %3060
      %3062 = vmax.xlane.f32.xlu0 %v3012
      %v3063 = vpop.xlane.xlu0 %3062
      %3064 = vmax.xlane.f32.xlu0 %v3015
      %v3065 = vpop.xlane.xlu0 %3064
      %3066 = vmax.xlane.f32.xlu0 %v3020
      %v3067 = vpop.xlane.xlu0 %3066
      %3068 = vmax.xlane.f32.xlu0 %v3023
      %v3069 = vpop.xlane.xlu0 %3068
      %3070 = vmax.xlane.f32.xlu0 %v3028
      %v3071 = vpop.xlane.xlu0 %3070
      %3072 = vmax.xlane.f32.xlu0 %v3031
      %v3073 = vpop.xlane.xlu0 %3072
      %3074 = vmax.xlane.f32.xlu0 %v3036
      %v3075 = vpop.xlane.xlu0 %3074
      %3076 = vmax.xlane.f32.xlu0 %v3039
      %v3077 = vpop.xlane.xlu0 %3076
      %3078 = vmax.xlane.f32.xlu0 %v3044
      %v3079 = vpop.xlane.xlu0 %3078
      %3080 = vmax.xlane.f32.xlu0 %v3047
      %v3081 = vpop.xlane.xlu0 %3080
      %v3082 = vsub.f32 %v2988, %v3051
      %v3083 = vsub.f32 %v2991, %v3053
      %v3084 = vsub.f32 %v2996, %v3055
      %v3085 = vsub.f32 %v2999, %v3057
      %v3086 = vsub.f32 %v3004, %v3059
      %v3087 = vsub.f32 %v3007, %v3061
      %v3088 = vsub.f32 %v3012, %v3063
      %v3089 = vsub.f32 %v3015, %v3065
      %v3090 = vsub.f32 %v3020, %v3067
      %v3091 = vsub.f32 %v3023, %v3069
      %v3092 = vsub.f32 %v3028, %v3071
      %v3093 = vsub.f32 %v3031, %v3073
      %v3094 = vsub.f32 %v3036, %v3075
      %v3095 = vsub.f32 %v3039, %v3077
      %v3096 = vsub.f32 %v3044, %v3079
      %v3097 = vsub.f32 %v3047, %v3081
      %v3098 = vmul.f32 %v3082, 1.442695
      %v3099 = vpow.pop %v3098
      %v3100 = vmul.f32 %v3083, 1.442695
      %v3101 = vpow.pop %v3100
      %v3102 = vmul.f32 %v3084, 1.442695
      %v3103 = vpow.pop %v3102
      %v3104 = vmul.f32 %v3085, 1.442695
      %v3105 = vpow.pop %v3104
      %v3106 = vmul.f32 %v3086, 1.442695
      %v3107 = vpow.pop %v3106
      %v3108 = vmul.f32 %v3087, 1.442695
      %v3109 = vpow.pop %v3108
      %v3110 = vmul.f32 %v3088, 1.442695
      %v3111 = vpow.pop %v3110
      %v3112 = vmul.f32 %v3089, 1.442695
      %v3113 = vpow.pop %v3112
      %v3114 = vmul.f32 %v3090, 1.442695
      %v3115 = vpow.pop %v3114
      %v3116 = vmul.f32 %v3091, 1.442695
      %v3117 = vpow.pop %v3116
      %v3118 = vmul.f32 %v3092, 1.442695
      %v3119 = vpow.pop %v3118
      %v3120 = vmul.f32 %v3093, 1.442695
      %v3121 = vpow.pop %v3120
      %v3122 = vmul.f32 %v3094, 1.442695
      %v3123 = vpow.pop %v3122
      %v3124 = vmul.f32 %v3095, 1.442695
      %v3125 = vpow.pop %v3124
      %v3126 = vmul.f32 %v3096, 1.442695
      %v3127 = vpow.pop %v3126
      %v3128 = vmul.f32 %v3097, 1.442695
      %v3129 = vpow.pop %v3128
      %3130 = vadd.xlane.f32.xlu0 %v3099
      %v3131 = vpop.xlane.xlu0 %3130
      %3132 = vadd.xlane.f32.xlu0 %v3101
      %v3133 = vpop.xlane.xlu0 %3132
      %3134 = vadd.xlane.f32.xlu0 %v3103
      %v3135 = vpop.xlane.xlu0 %3134
      %3136 = vadd.xlane.f32.xlu0 %v3105
      %v3137 = vpop.xlane.xlu0 %3136
      %3138 = vadd.xlane.f32.xlu0 %v3107
      %v3139 = vpop.xlane.xlu0 %3138
      %3140 = vadd.xlane.f32.xlu0 %v3109
      %v3141 = vpop.xlane.xlu0 %3140
      %3142 = vadd.xlane.f32.xlu0 %v3111
      %v3143 = vpop.xlane.xlu0 %3142
      %3144 = vadd.xlane.f32.xlu0 %v3113
      %v3145 = vpop.xlane.xlu0 %3144
      %3146 = vadd.xlane.f32.xlu0 %v3115
      %v3147 = vpop.xlane.xlu0 %3146
      %3148 = vadd.xlane.f32.xlu0 %v3117
      %v3149 = vpop.xlane.xlu0 %3148
      %3150 = vadd.xlane.f32.xlu0 %v3119
      %v3151 = vpop.xlane.xlu0 %3150
      %3152 = vadd.xlane.f32.xlu0 %v3121
      %v3153 = vpop.xlane.xlu0 %3152
      %3154 = vadd.xlane.f32.xlu0 %v3123
      %v3155 = vpop.xlane.xlu0 %3154
      %3156 = vadd.xlane.f32.xlu0 %v3125
      %v3157 = vpop.xlane.xlu0 %3156
      %3158 = vadd.xlane.f32.xlu0 %v3127
      %v3159 = vpop.xlane.xlu0 %3158
      %3160 = vadd.xlane.f32.xlu0 %v3129
      %v3161 = vpop.xlane.xlu0 %3160
      %v3162 = vrcp.pop %v3131
      %v3163 = vrcp.pop %v3133
      %v3164 = vrcp.pop %v3135
      %v3165 = vrcp.pop %v3137
      %v3166 = vrcp.pop %v3139
      %v3167 = vrcp.pop %v3141
      %v3168 = vrcp.pop %v3143
      %v3169 = vrcp.pop %v3145
      %v3170 = vrcp.pop %v3147
      %v3171 = vrcp.pop %v3149
      %v3172 = vrcp.pop %v3151
      %v3173 = vrcp.pop %v3153
      %v3174 = vrcp.pop %v3155
      %v3175 = vrcp.pop %v3157
      %v3176 = vrcp.pop %v3159
      %v3177 = vrcp.pop %v3161
      %v3178 = vmul.f32 %v3099, %v3162
      %v3179 = vmul.f32 %v3101, %v3163
      %v3180 = vmul.f32 %v3103, %v3164
      %v3181 = vmul.f32 %v3105, %v3165
      %v3182 = vmul.f32 %v3107, %v3166
      %v3183 = vmul.f32 %v3109, %v3167
      %v3184 = vmul.f32 %v3111, %v3168
      %v3185 = vmul.f32 %v3113, %v3169
      %v3186 = vmul.f32 %v3115, %v3170
      %v3187 = vmul.f32 %v3117, %v3171
      %v3188 = vmul.f32 %v3119, %v3172
      %v3189 = vmul.f32 %v3121, %v3173
      %v3190 = vmul.f32 %v3123, %v3174
      %v3191 = vmul.f32 %v3125, %v3175
      %v3192 = vmul.f32 %v3127, %v3176
      %v3193 = vmul.f32 %v3129, %v3177
      %v3194 = vpack.c.bf16 %v3179, %v3178
      %v3195 = vpack.c.bf16 %v3181, %v3180
      %v3196 = vpack.c.bf16 %v3183, %v3182
      %v3197 = vpack.c.bf16 %v3185, %v3184
      %v3198 = vpack.c.bf16 %v3187, %v3186
      %v3199 = vpack.c.bf16 %v3189, %v3188
      %v3200 = vpack.c.bf16 %v3191, %v3190
      %v3201 = vpack.c.bf16 %v3193, %v3192
      %3202 = vrot.lane.b32.xlu0 %v1540, 32
      %v3203 = vpop.permute.xlu0 %3202
      %3204 = vrot.lane.b32.xlu0 %v1541, 32
      %v3205 = vpop.permute.xlu0 %3204
      %3206 = vrot.lane.b32.xlu0 %v1542, 32
      %v3207 = vpop.permute.xlu0 %3206
      %3208 = vrot.lane.b32.xlu0 %v1543, 32
      %v3209 = vpop.permute.xlu0 %3208
      %3210 = vrot.lane.b32.xlu0 %v1544, 32
      %v3211 = vpop.permute.xlu0 %3210
      %3212 = vrot.lane.b32.xlu0 %v1545, 32
      %v3213 = vpop.permute.xlu0 %3212
      %3214 = vrot.lane.b32.xlu0 %v1546, 32
      %v3215 = vpop.permute.xlu0 %3214
      %3216 = vrot.lane.b32.xlu0 %v1547, 32
      %v3217 = vpop.permute.xlu0 %3216
      %3226 = vmatprep.subr.bf16.mxu0 0
      %3227 = vmatpush1.bf16.msra.mxu0 %v3203
      %3228 = vmatprep.subr.bf16.mxu0 0
      %3229 = vmatpush1.bf16.msra.mxu0 %v3205
      %3230 = vmatprep.subr.bf16.mxu0 0
      %3231 = vmatpush1.bf16.msra.mxu0 %v3207
      %3232 = vmatprep.subr.bf16.mxu0 0
      %3233 = vmatpush1.bf16.msra.mxu0 %v3209
      %3234 = vmatprep.subr.bf16.mxu0 0
      %3235 = vmatpush1.bf16.msra.mxu0 %v3211
      %3236 = vmatprep.subr.bf16.mxu0 0
      %3237 = vmatpush1.bf16.msra.mxu0 %v3213
      %3238 = vmatprep.subr.bf16.mxu0 0
      %3239 = vmatpush1.bf16.msra.mxu0 %v3215
      %3240 = vmatprep.subr.bf16.mxu0 0
      %3241 = vmatpush1.bf16.msra.mxu0 %v3217
      %3242 = vmatprep.subr.bf16.mxu0 0
      %3243 = vmatpush1.bf16.msra.mxu0 0
      %3244 = vmatprep.subr.bf16.mxu0 0
      %3245 = vmatpush1.bf16.msra.mxu0 0
      %3246 = vmatprep.subr.bf16.mxu0 0
      %3247 = vmatpush1.bf16.msra.mxu0 0
      %3248 = vmatprep.subr.bf16.mxu0 0
      %3249 = vmatpush1.bf16.msra.mxu0 0
      %3250 = vmatprep.subr.bf16.mxu0 0
      %3251 = vmatpush1.bf16.msra.mxu0 0
      %3252 = vmatprep.subr.bf16.mxu0 0
      %3253 = vmatpush1.bf16.msra.mxu0 0
      %3254 = vmatprep.subr.bf16.mxu0 0
      %3255 = vmatpush1.bf16.msra.mxu0 0
      %3256 = vmatprep.subr.bf16.mxu0 0
      %3257 = vmatpush1.bf16.msra.mxu0 0
      %3258 = vmatprep.mubr.bf16.mxu0 0
      %3259 = vmatmul.mubr.bf16.gmra.mrb[0].mxu0 %v3194
      %v3260 = vpop.f32.mrb[0].mxu0
      %v3261 = vadd.f32 0.0, %v3260
      %v3262 = vpop.f32.mrb[0].mxu0
      %v3263 = vpop.f32.mrb[0].mxu0
      %v3264 = vadd.f32 0.0, %v3263
      %v3265 = vpop.f32.mrb[0].mxu0
      %3266 = vmatprep.mubr.bf16.mxu0 0
      %3267 = vmatmul.mubr.bf16.gmra.mrb[0].mxu0 %v3195
      %v3268 = vpop.f32.mrb[0].mxu0
      %v3269 = vadd.f32 0.0, %v3268
      %v3270 = vpop.f32.mrb[0].mxu0
      %v3271 = vpop.f32.mrb[0].mxu0
      %v3272 = vadd.f32 0.0, %v3271
      %v3273 = vpop.f32.mrb[0].mxu0
      %3274 = vmatprep.mubr.bf16.mxu0 0
      %3275 = vmatmul.mubr.bf16.gmra.mrb[0].mxu0 %v3196
      %v3276 = vpop.f32.mrb[0].mxu0
      %v3277 = vadd.f32 0.0, %v3276
      %v3278 = vpop.f32.mrb[0].mxu0
      %v3279 = vpop.f32.mrb[0].mxu0
      %v3280 = vadd.f32 0.0, %v3279
      %v3281 = vpop.f32.mrb[0].mxu0
      %3282 = vmatprep.mubr.bf16.mxu0 0
      %3283 = vmatmul.mubr.bf16.gmra.mrb[0].mxu0 %v3197
      %v3284 = vpop.f32.mrb[0].mxu0
      %v3285 = vadd.f32 0.0, %v3284
      %v3286 = vpop.f32.mrb[0].mxu0
      %v3287 = vpop.f32.mrb[0].mxu0
      %v3288 = vadd.f32 0.0, %v3287
      %v3289 = vpop.f32.mrb[0].mxu0
      %3290 = vmatprep.mubr.bf16.mxu0 0
      %3291 = vmatmul.mubr.bf16.gmra.mrb[0].mxu0 %v3198
      %v3292 = vpop.f32.mrb[0].mxu0
      %v3293 = vadd.f32 0.0, %v3292
      %v3294 = vpop.f32.mrb[0].mxu0
      %v3295 = vpop.f32.mrb[0].mxu0
      %v3296 = vadd.f32 0.0, %v3295
      %v3297 = vpop.f32.mrb[0].mxu0
      %3298 = vmatprep.mubr.bf16.mxu0 0
      %3299 = vmatmul.mubr.bf16.gmra.mrb[0].mxu0 %v3199
      %v3300 = vpop.f32.mrb[0].mxu0
      %v3301 = vadd.f32 0.0, %v3300
      %v3302 = vpop.f32.mrb[0].mxu0
      %v3303 = vpop.f32.mrb[0].mxu0
      %v3304 = vadd.f32 0.0, %v3303
      %v3305 = vpop.f32.mrb[0].mxu0
      %3306 = vmatprep.mubr.bf16.mxu0 0
      %3307 = vmatmul.mubr.bf16.gmra.mrb[0].mxu0 %v3200
      %v3308 = vpop.f32.mrb[0].mxu0
      %v3309 = vadd.f32 0.0, %v3308
      %v3310 = vpop.f32.mrb[0].mxu0
      %v3311 = vpop.f32.mrb[0].mxu0
      %v3312 = vadd.f32 0.0, %v3311
      %v3313 = vpop.f32.mrb[0].mxu0
      %3314 = vmatprep.mubr.bf16.mxu0 0
      %3315 = vmatmul.mubr.bf16.gmra.mrb[0].mxu0 %v3201
      %v3316 = vpop.f32.mrb[0].mxu0
      %v3317 = vadd.f32 0.0, %v3316
      %v3318 = vpop.f32.mrb[0].mxu0
      %v3319 = vpop.f32.mrb[0].mxu0
      %v3320 = vadd.f32 0.0, %v3319
      %v3321 = vpop.f32.mrb[0].mxu0
      %3322 = vdwg.mxu0
      %3339 = vrot.lane.b32.xlu0 %v2361, 32
      %v3340 = vpop.permute.xlu0 %3339
      %3341 = vrot.lane.b32.xlu0 %v2364, 32
      %v3342 = vpop.permute.xlu0 %3341
      %3343 = vrot.lane.b32.xlu0 %v2369, 32
      %v3344 = vpop.permute.xlu0 %3343
      %3345 = vrot.lane.b32.xlu0 %v2372, 32
      %v3346 = vpop.permute.xlu0 %3345
      %3347 = vrot.lane.b32.xlu0 %v2377, 32
      %v3348 = vpop.permute.xlu0 %3347
      %3349 = vrot.lane.b32.xlu0 %v2380, 32
      %v3350 = vpop.permute.xlu0 %3349
      %3351 = vrot.lane.b32.xlu0 %v2385, 32
      %v3352 = vpop.permute.xlu0 %3351
      %3353 = vrot.lane.b32.xlu0 %v2388, 32
      %v3354 = vpop.permute.xlu0 %3353
      %3355 = vrot.lane.b32.xlu0 %v2393, 32
      %v3356 = vpop.permute.xlu0 %3355
      %3357 = vrot.lane.b32.xlu0 %v2396, 32
      %v3358 = vpop.permute.xlu0 %3357
      %3359 = vrot.lane.b32.xlu0 %v2401, 32
      %v3360 = vpop.permute.xlu0 %3359
      %3361 = vrot.lane.b32.xlu0 %v2404, 32
      %v3362 = vpop.permute.xlu0 %3361
      %3363 = vrot.lane.b32.xlu0 %v2409, 32
      %v3364 = vpop.permute.xlu0 %3363
      %3365 = vrot.lane.b32.xlu0 %v2412, 32
      %v3366 = vpop.permute.xlu0 %3365
      %3367 = vrot.lane.b32.xlu0 %v2417, 32
      %v3368 = vpop.permute.xlu0 %3367
      %3369 = vrot.lane.b32.xlu0 %v2420, 32
      %v3370 = vpop.permute.xlu0 %3369
      %3403 = vrot.lane.b32.xlu0 %v2811, 64
      %v3404 = vpop.permute.xlu0 %3403
      %3405 = vrot.lane.b32.xlu0 %v2814, 64
      %v3406 = vpop.permute.xlu0 %3405
      %3407 = vrot.lane.b32.xlu0 %v2819, 64
      %v3408 = vpop.permute.xlu0 %3407
      %3409 = vrot.lane.b32.xlu0 %v2822, 64
      %v3410 = vpop.permute.xlu0 %3409
      %3411 = vrot.lane.b32.xlu0 %v2827, 64
      %v3412 = vpop.permute.xlu0 %3411
      %3413 = vrot.lane.b32.xlu0 %v2830, 64
      %v3414 = vpop.permute.xlu0 %3413
      %3415 = vrot.lane.b32.xlu0 %v2835, 64
      %v3416 = vpop.permute.xlu0 %3415
      %3417 = vrot.lane.b32.xlu0 %v2838, 64
      %v3418 = vpop.permute.xlu0 %3417
      %3419 = vrot.lane.b32.xlu0 %v2843, 64
      %v3420 = vpop.permute.xlu0 %3419
      %3421 = vrot.lane.b32.xlu0 %v2846, 64
      %v3422 = vpop.permute.xlu0 %3421
      %3423 = vrot.lane.b32.xlu0 %v2851, 64
      %v3424 = vpop.permute.xlu0 %3423
      %3425 = vrot.lane.b32.xlu0 %v2854, 64
      %v3426 = vpop.permute.xlu0 %3425
      %3427 = vrot.lane.b32.xlu0 %v2859, 64
      %v3428 = vpop.permute.xlu0 %3427
      %3429 = vrot.lane.b32.xlu0 %v2862, 64
      %v3430 = vpop.permute.xlu0 %3429
      %3431 = vrot.lane.b32.xlu0 %v2867, 64
      %v3432 = vpop.permute.xlu0 %3431
      %3433 = vrot.lane.b32.xlu0 %v2870, 64
      %v3434 = vpop.permute.xlu0 %3433
      %3467 = vrot.lane.b32.xlu0 %v3261, 96
      %v3468 = vpop.permute.xlu0 %3467
      %3469 = vrot.lane.b32.xlu0 %v3264, 96
      %v3470 = vpop.permute.xlu0 %3469
      %3471 = vrot.lane.b32.xlu0 %v3269, 96
      %v3472 = vpop.permute.xlu0 %3471
      %3473 = vrot.lane.b32.xlu0 %v3272, 96
      %v3474 = vpop.permute.xlu0 %3473
      %3475 = vrot.lane.b32.xlu0 %v3277, 96
      %v3476 = vpop.permute.xlu0 %3475
      %3477 = vrot.lane.b32.xlu0 %v3280, 96
      %v3478 = vpop.permute.xlu0 %3477
      %3479 = vrot.lane.b32.xlu0 %v3285, 96
      %v3480 = vpop.permute.xlu0 %3479
      %3481 = vrot.lane.b32.xlu0 %v3288, 96
      %v3482 = vpop.permute.xlu0 %3481
      %3483 = vrot.lane.b32.xlu0 %v3293, 96
      %v3484 = vpop.permute.xlu0 %3483
      %3485 = vrot.lane.b32.xlu0 %v3296, 96
      %v3486 = vpop.permute.xlu0 %3485
      %3487 = vrot.lane.b32.xlu0 %v3301, 96
      %v3488 = vpop.permute.xlu0 %3487
      %3489 = vrot.lane.b32.xlu0 %v3304, 96
      %v3490 = vpop.permute.xlu0 %3489
      %3491 = vrot.lane.b32.xlu0 %v3309, 96
      %v3492 = vpop.permute.xlu0 %3491
      %3493 = vrot.lane.b32.xlu0 %v3312, 96
      %v3494 = vpop.permute.xlu0 %3493
      %3495 = vrot.lane.b32.xlu0 %v3317, 96
      %v3496 = vpop.permute.xlu0 %3495
      %3497 = vrot.lane.b32.xlu0 %v3320, 96
      %v3498 = vpop.permute.xlu0 %3497
      %v3515 = vsel %vm1554, %v1887, %v3340
      %v3516 = vsel %vm1554, %v1890, %v3342
      %v3517 = vsel %vm1554, %v1895, %v3344
      %v3518 = vsel %vm1554, %v1898, %v3346
      %v3519 = vsel %vm1554, %v1903, %v3348
      %v3520 = vsel %vm1554, %v1906, %v3350
      %v3521 = vsel %vm1554, %v1911, %v3352
      %v3522 = vsel %vm1554, %v1914, %v3354
      %v3523 = vsel %vm1554, %v1919, %v3356
      %v3524 = vsel %vm1554, %v1922, %v3358
      %v3525 = vsel %vm1554, %v1927, %v3360
      %v3526 = vsel %vm1554, %v1930, %v3362
      %v3527 = vsel %vm1554, %v1935, %v3364
      %v3528 = vsel %vm1554, %v1938, %v3366
      %v3529 = vsel %vm1554, %v1943, %v3368
      %v3530 = vsel %vm1554, %v1946, %v3370
      %vm3531 = vcmask 523264
      %v3532 = vsel %vm3531, %v3515, %v3404
      %v3533 = vsel %vm3531, %v3516, %v3406
      %v3534 = vsel %vm3531, %v3517, %v3408
      %v3535 = vsel %vm3531, %v3518, %v3410
      %v3536 = vsel %vm3531, %v3519, %v3412
      %v3537 = vsel %vm3531, %v3520, %v3414
      %v3538 = vsel %vm3531, %v3521, %v3416
      %v3539 = vsel %vm3531, %v3522, %v3418
      %v3540 = vsel %vm3531, %v3523, %v3420
      %v3541 = vsel %vm3531, %v3524, %v3422
      %v3542 = vsel %vm3531, %v3525, %v3424
      %v3543 = vsel %vm3531, %v3526, %v3426
      %v3544 = vsel %vm3531, %v3527, %v3428
      %v3545 = vsel %vm3531, %v3528, %v3430
      %v3546 = vsel %vm3531, %v3529, %v3432
      %v3547 = vsel %vm3531, %v3530, %v3434
      %vm3548 = vcmask 785408
      %v3549 = vsel %vm3548, %v3532, %v3468
      %v3550 = vsel %vm3548, %v3533, %v3470
      %v3551 = vsel %vm3548, %v3534, %v3472
      %v3552 = vsel %vm3548, %v3535, %v3474
      %v3553 = vsel %vm3548, %v3536, %v3476
      %v3554 = vsel %vm3548, %v3537, %v3478
      %v3555 = vsel %vm3548, %v3538, %v3480
      %v3556 = vsel %vm3548, %v3539, %v3482
      %v3557 = vsel %vm3548, %v3540, %v3484
      %v3558 = vsel %vm3548, %v3541, %v3486
      %v3559 = vsel %vm3548, %v3542, %v3488
      %v3560 = vsel %vm3548, %v3543, %v3490
      %v3561 = vsel %vm3548, %v3544, %v3492
      %v3562 = vsel %vm3548, %v3545, %v3494
      %v3563 = vsel %vm3548, %v3546, %v3496
      %v3564 = vsel %vm3548, %v3547, %v3498
      %v3565 = vpack.c.bf16 %v3550, %v3549
      %v3566 = vpack.c.bf16 %v3552, %v3551
      %v3567 = vpack.c.bf16 %v3554, %v3553
      %v3568 = vpack.c.bf16 %v3556, %v3555
      %v3569 = vpack.c.bf16 %v3558, %v3557
      %v3570 = vpack.c.bf16 %v3560, %v3559
      %v3571 = vpack.c.bf16 %v3562, %v3561
      %v3572 = vpack.c.bf16 %v3564, %v3563
      %v3573 = vld [vmem:[%s816] sm:$0xf]
      %v3574 = vld [vmem:[%s816 + $0x4] sm:$0xf]
      %v3575 = vld [vmem:[%s816 + $0x8] sm:$0xf]
      %v3576 = vld [vmem:[%s816 + $0xc] sm:$0xf]
      %v3577 = vld [vmem:[%s816 + $0x10] sm:$0xf]
      %v3578 = vld [vmem:[%s816 + $0x14] sm:$0xf]
      %v3579 = vld [vmem:[%s816 + $0x18] sm:$0xf]
      %v3580 = vld [vmem:[%s816 + $0x1c] sm:$0xf]
      %v3581 = vld [vmem:[%s816 + $0x20] sm:$0xf]
      %v3582 = vld [vmem:[%s816 + $0x24] sm:$0xf]
      %v3583 = vld [vmem:[%s816 + $0x28] sm:$0xf]
      %v3584 = vld [vmem:[%s816 + $0x2c] sm:$0xf]
      %v3585 = vld [vmem:[%s816 + $0x30] sm:$0xf]
      %v3586 = vld [vmem:[%s816 + $0x34] sm:$0xf]
      %v3587 = vld [vmem:[%s816 + $0x38] sm:$0xf]
      %v3588 = vld [vmem:[%s816 + $0x3c] sm:$0xf]
      %v3589 = vld [vmem:[%s819] sm:$0x1]
      %v3591 = vlaneseq
      %v3592 = vshrl.u32 %v3591, 7
      %v3593 = vsub.s32 0, %v3592
      %v3594 = vrot.slane %v3589, %v3593
      %v3612 = vunpack.c.l.b16 %v3573
      %v3613 = vunpack.c.l.b16 %v3574
      %v3614 = vunpack.c.l.b16 %v3575
      %v3615 = vunpack.c.l.b16 %v3576
      %v3616 = vunpack.c.l.b16 %v3577
      %v3617 = vunpack.c.l.b16 %v3578
      %v3618 = vunpack.c.l.b16 %v3579
      %v3619 = vunpack.c.l.b16 %v3580
      %v3620 = vunpack.c.l.b16 %v3581
      %v3621 = vunpack.c.l.b16 %v3582
      %v3622 = vunpack.c.l.b16 %v3583
      %v3623 = vunpack.c.l.b16 %v3584
      %v3624 = vunpack.c.l.b16 %v3585
      %v3625 = vunpack.c.l.b16 %v3586
      %v3626 = vunpack.c.l.b16 %v3587
      %v3627 = vunpack.c.l.b16 %v3588
      %v3628 = vpack.c.b16 %v3613, %v3612
      %v3629 = vpack.c.b16 %v3615, %v3614
      %v3630 = vpack.c.b16 %v3617, %v3616
      %v3631 = vpack.c.b16 %v3619, %v3618
      %v3632 = vpack.c.b16 %v3621, %v3620
      %v3633 = vpack.c.b16 %v3623, %v3622
      %v3634 = vpack.c.b16 %v3625, %v3624
      %v3635 = vpack.c.b16 %v3627, %v3626
      %3644 = vmatprep.subr.bf16.mxu0 0
      %3645 = vmatpush1.bf16.msra.mxu0 %v3628
      %3646 = vmatprep.subr.bf16.mxu0 0
      %3647 = vmatpush1.bf16.msra.mxu0 %v3629
      %3648 = vmatprep.subr.bf16.mxu0 0
      %3649 = vmatpush1.bf16.msra.mxu0 %v3630
      %3650 = vmatprep.subr.bf16.mxu0 0
      %3651 = vmatpush1.bf16.msra.mxu0 %v3631
      %3652 = vmatprep.subr.bf16.mxu0 0
      %3653 = vmatpush1.bf16.msra.mxu0 %v3632
      %3654 = vmatprep.subr.bf16.mxu0 0
      %3655 = vmatpush1.bf16.msra.mxu0 %v3633
      %3656 = vmatprep.subr.bf16.mxu0 0
      %3657 = vmatpush1.bf16.msra.mxu0 %v3634
      %3658 = vmatprep.subr.bf16.mxu0 0
      %3659 = vmatpush1.bf16.msra.mxu0 %v3635
      %3660 = vmatprep.subr.bf16.mxu0 0
      %3661 = vmatpush1.bf16.msra.mxu0 0
      %3662 = vmatprep.subr.bf16.mxu0 0
      %3663 = vmatpush1.bf16.msra.mxu0 0
      %3664 = vmatprep.subr.bf16.mxu0 0
      %3665 = vmatpush1.bf16.msra.mxu0 0
      %3666 = vmatprep.subr.bf16.mxu0 0
      %3667 = vmatpush1.bf16.msra.mxu0 0
      %3668 = vmatprep.subr.bf16.mxu0 0
      %3669 = vmatpush1.bf16.msra.mxu0 0
      %3670 = vmatprep.subr.bf16.mxu0 0
      %3671 = vmatpush1.bf16.msra.mxu0 0
      %3672 = vmatprep.subr.bf16.mxu0 0
      %3673 = vmatpush1.bf16.msra.mxu0 0
      %3674 = vmatprep.subr.bf16.mxu0 0
      %3675 = vmatpush1.bf16.msra.mxu0 0
      %3676 = vmatprep.mubr.bf16.mxu0 0
      %3677 = vmatmul.mubr.bf16.gmra.mrb[0].mxu0 %v3565
      %v3678 = vpop.f32.mrb[0].mxu0
      %v3679 = vadd.f32 %v3594, %v3678
      %v3680 = vpop.f32.mrb[0].mxu0
      %v3681 = vpop.f32.mrb[0].mxu0
      %v3682 = vadd.f32 %v3594, %v3681
      %v3683 = vpop.f32.mrb[0].mxu0
      %3684 = vmatprep.mubr.bf16.mxu0 0
      %3685 = vmatmul.mubr.bf16.gmra.mrb[0].mxu0 %v3566
      %v3686 = vpop.f32.mrb[0].mxu0
      %v3687 = vadd.f32 %v3594, %v3686
      %v3688 = vpop.f32.mrb[0].mxu0
      %v3689 = vpop.f32.mrb[0].mxu0
      %v3690 = vadd.f32 %v3594, %v3689
      %v3691 = vpop.f32.mrb[0].mxu0
      %3692 = vmatprep.mubr.bf16.mxu0 0
      %3693 = vmatmul.mubr.bf16.gmra.mrb[0].mxu0 %v3567
      %v3694 = vpop.f32.mrb[0].mxu0
      %v3695 = vadd.f32 %v3594, %v3694
      %v3696 = vpop.f32.mrb[0].mxu0
      %v3697 = vpop.f32.mrb[0].mxu0
      %v3698 = vadd.f32 %v3594, %v3697
      %v3699 = vpop.f32.mrb[0].mxu0
      %3700 = vmatprep.mubr.bf16.mxu0 0
      %3701 = vmatmul.mubr.bf16.gmra.mrb[0].mxu0 %v3568
      %v3702 = vpop.f32.mrb[0].mxu0
      %v3703 = vadd.f32 %v3594, %v3702
      %v3704 = vpop.f32.mrb[0].mxu0
      %v3705 = vpop.f32.mrb[0].mxu0
      %v3706 = vadd.f32 %v3594, %v3705
      %v3707 = vpop.f32.mrb[0].mxu0
      %3708 = vmatprep.mubr.bf16.mxu0 0
      %3709 = vmatmul.mubr.bf16.gmra.mrb[0].mxu0 %v3569
      %v3710 = vpop.f32.mrb[0].mxu0
      %v3711 = vadd.f32 %v3594, %v3710
      %v3712 = vpop.f32.mrb[0].mxu0
      %v3713 = vpop.f32.mrb[0].mxu0
      %v3714 = vadd.f32 %v3594, %v3713
      %v3715 = vpop.f32.mrb[0].mxu0
      %3716 = vmatprep.mubr.bf16.mxu0 0
      %3717 = vmatmul.mubr.bf16.gmra.mrb[0].mxu0 %v3570
      %v3718 = vpop.f32.mrb[0].mxu0
      %v3719 = vadd.f32 %v3594, %v3718
      %v3720 = vpop.f32.mrb[0].mxu0
      %v3721 = vpop.f32.mrb[0].mxu0
      %v3722 = vadd.f32 %v3594, %v3721
      %v3723 = vpop.f32.mrb[0].mxu0
      %3724 = vmatprep.mubr.bf16.mxu0 0
      %3725 = vmatmul.mubr.bf16.gmra.mrb[0].mxu0 %v3571
      %v3726 = vpop.f32.mrb[0].mxu0
      %v3727 = vadd.f32 %v3594, %v3726
      %v3728 = vpop.f32.mrb[0].mxu0
      %v3729 = vpop.f32.mrb[0].mxu0
      %v3730 = vadd.f32 %v3594, %v3729
      %v3731 = vpop.f32.mrb[0].mxu0
      %3732 = vmatprep.mubr.bf16.mxu0 0
      %3733 = vmatmul.mubr.bf16.gmra.mrb[0].mxu0 %v3572
      %v3734 = vpop.f32.mrb[0].mxu0
      %v3735 = vadd.f32 %v3594, %v3734
      %v3736 = vpop.f32.mrb[0].mxu0
      %v3737 = vpop.f32.mrb[0].mxu0
      %v3738 = vadd.f32 %v3594, %v3737
      %v3739 = vpop.f32.mrb[0].mxu0
      %3740 = vdwg.mxu0
      %v3741 = vadd.f32 %v1112, %v3679
      %v3742 = vadd.f32 %v1113, %v3682
      %v3743 = vadd.f32 %v1114, %v3687
      %v3744 = vadd.f32 %v1115, %v3690
      %v3745 = vadd.f32 %v1116, %v3695
      %v3746 = vadd.f32 %v1117, %v3698
      %v3747 = vadd.f32 %v1118, %v3703
      %v3748 = vadd.f32 %v1119, %v3706
      %v3749 = vadd.f32 %v1120, %v3711
      %v3750 = vadd.f32 %v1121, %v3714
      %v3751 = vadd.f32 %v1122, %v3719
      %v3752 = vadd.f32 %v1123, %v3722
      %v3753 = vadd.f32 %v1124, %v3727
      %v3754 = vadd.f32 %v1125, %v3730
      %v3755 = vadd.f32 %v1126, %v3735
      %v3756 = vadd.f32 %v1127, %v3738
      %v3757 = vld [vmem:[%s822] sm:$0x1]
      %v3758 = vld [vmem:[%s825] sm:$0x1]
      %3759 = vadd.xlane.f32.xlu0 %v3741
      %v3760 = vpop.xlane.xlu0 %3759
      %3761 = vadd.xlane.f32.xlu0 %v3742
      %v3762 = vpop.xlane.xlu0 %3761
      %3763 = vadd.xlane.f32.xlu0 %v3743
      %v3764 = vpop.xlane.xlu0 %3763
      %3765 = vadd.xlane.f32.xlu0 %v3744
      %v3766 = vpop.xlane.xlu0 %3765
      %3767 = vadd.xlane.f32.xlu0 %v3745
      %v3768 = vpop.xlane.xlu0 %3767
      %3769 = vadd.xlane.f32.xlu0 %v3746
      %v3770 = vpop.xlane.xlu0 %3769
      %3771 = vadd.xlane.f32.xlu0 %v3747
      %v3772 = vpop.xlane.xlu0 %3771
      %3773 = vadd.xlane.f32.xlu0 %v3748
      %v3774 = vpop.xlane.xlu0 %3773
      %3775 = vadd.xlane.f32.xlu0 %v3749
      %v3776 = vpop.xlane.xlu0 %3775
      %3777 = vadd.xlane.f32.xlu0 %v3750
      %v3778 = vpop.xlane.xlu0 %3777
      %3779 = vadd.xlane.f32.xlu0 %v3751
      %v3780 = vpop.xlane.xlu0 %3779
      %3781 = vadd.xlane.f32.xlu0 %v3752
      %v3782 = vpop.xlane.xlu0 %3781
      %3783 = vadd.xlane.f32.xlu0 %v3753
      %v3784 = vpop.xlane.xlu0 %3783
      %3785 = vadd.xlane.f32.xlu0 %v3754
      %v3786 = vpop.xlane.xlu0 %3785
      %3787 = vadd.xlane.f32.xlu0 %v3755
      %v3788 = vpop.xlane.xlu0 %3787
      %3789 = vadd.xlane.f32.xlu0 %v3756
      %v3790 = vpop.xlane.xlu0 %3789
      %v3791 = vrcp.pop 128.0
      %v3792 = vmul.f32 %v3760, %v3791
      %v3793 = vmul.f32 %v3762, %v3791
      %v3794 = vmul.f32 %v3764, %v3791
      %v3795 = vmul.f32 %v3766, %v3791
      %v3796 = vmul.f32 %v3768, %v3791
      %v3797 = vmul.f32 %v3770, %v3791
      %v3798 = vmul.f32 %v3772, %v3791
      %v3799 = vmul.f32 %v3774, %v3791
      %v3800 = vmul.f32 %v3776, %v3791
      %v3801 = vmul.f32 %v3778, %v3791
      %v3802 = vmul.f32 %v3780, %v3791
      %v3803 = vmul.f32 %v3782, %v3791
      %v3804 = vmul.f32 %v3784, %v3791
      %v3805 = vmul.f32 %v3786, %v3791
      %v3806 = vmul.f32 %v3788, %v3791
      %v3807 = vmul.f32 %v3790, %v3791
      %v3808 = vsub.f32 %v3741, %v3792
      %v3809 = vsub.f32 %v3742, %v3793
      %v3810 = vsub.f32 %v3743, %v3794
      %v3811 = vsub.f32 %v3744, %v3795
      %v3812 = vsub.f32 %v3745, %v3796
      %v3813 = vsub.f32 %v3746, %v3797
      %v3814 = vsub.f32 %v3747, %v3798
      %v3815 = vsub.f32 %v3748, %v3799
      %v3816 = vsub.f32 %v3749, %v3800
      %v3817 = vsub.f32 %v3750, %v3801
      %v3818 = vsub.f32 %v3751, %v3802
      %v3819 = vsub.f32 %v3752, %v3803
      %v3820 = vsub.f32 %v3753, %v3804
      %v3821 = vsub.f32 %v3754, %v3805
      %v3822 = vsub.f32 %v3755, %v3806
      %v3823 = vsub.f32 %v3756, %v3807
      %v3824 = vmul.f32 %v3808, %v3808
      %v3825 = vmul.f32 %v3809, %v3809
      %v3826 = vmul.f32 %v3810, %v3810
      %v3827 = vmul.f32 %v3811, %v3811
      %v3828 = vmul.f32 %v3812, %v3812
      %v3829 = vmul.f32 %v3813, %v3813
      %v3830 = vmul.f32 %v3814, %v3814
      %v3831 = vmul.f32 %v3815, %v3815
      %v3832 = vmul.f32 %v3816, %v3816
      %v3833 = vmul.f32 %v3817, %v3817
      %v3834 = vmul.f32 %v3818, %v3818
      %v3835 = vmul.f32 %v3819, %v3819
      %v3836 = vmul.f32 %v3820, %v3820
      %v3837 = vmul.f32 %v3821, %v3821
      %v3838 = vmul.f32 %v3822, %v3822
      %v3839 = vmul.f32 %v3823, %v3823
      %3840 = vadd.xlane.f32.xlu0 %v3824
      %v3841 = vpop.xlane.xlu0 %3840
      %3842 = vadd.xlane.f32.xlu0 %v3825
      %v3843 = vpop.xlane.xlu0 %3842
      %3844 = vadd.xlane.f32.xlu0 %v3826
      %v3845 = vpop.xlane.xlu0 %3844
      %3846 = vadd.xlane.f32.xlu0 %v3827
      %v3847 = vpop.xlane.xlu0 %3846
      %3848 = vadd.xlane.f32.xlu0 %v3828
      %v3849 = vpop.xlane.xlu0 %3848
      %3850 = vadd.xlane.f32.xlu0 %v3829
      %v3851 = vpop.xlane.xlu0 %3850
      %3852 = vadd.xlane.f32.xlu0 %v3830
      %v3853 = vpop.xlane.xlu0 %3852
      %3854 = vadd.xlane.f32.xlu0 %v3831
      %v3855 = vpop.xlane.xlu0 %3854
      %3856 = vadd.xlane.f32.xlu0 %v3832
      %v3857 = vpop.xlane.xlu0 %3856
      %3858 = vadd.xlane.f32.xlu0 %v3833
      %v3859 = vpop.xlane.xlu0 %3858
      %3860 = vadd.xlane.f32.xlu0 %v3834
      %v3861 = vpop.xlane.xlu0 %3860
      %3862 = vadd.xlane.f32.xlu0 %v3835
      %v3863 = vpop.xlane.xlu0 %3862
      %3864 = vadd.xlane.f32.xlu0 %v3836
      %v3865 = vpop.xlane.xlu0 %3864
      %3866 = vadd.xlane.f32.xlu0 %v3837
      %v3867 = vpop.xlane.xlu0 %3866
      %3868 = vadd.xlane.f32.xlu0 %v3838
      %v3869 = vpop.xlane.xlu0 %3868
      %3870 = vadd.xlane.f32.xlu0 %v3839
      %v3871 = vpop.xlane.xlu0 %3870
      %v3872 = vmul.f32 %v3841, %v3791
      %v3873 = vmul.f32 %v3843, %v3791
      %v3874 = vmul.f32 %v3845, %v3791
      %v3875 = vmul.f32 %v3847, %v3791
      %v3876 = vmul.f32 %v3849, %v3791
      %v3877 = vmul.f32 %v3851, %v3791
      %v3878 = vmul.f32 %v3853, %v3791
      %v3879 = vmul.f32 %v3855, %v3791
      %v3880 = vmul.f32 %v3857, %v3791
      %v3881 = vmul.f32 %v3859, %v3791
      %v3882 = vmul.f32 %v3861, %v3791
      %v3883 = vmul.f32 %v3863, %v3791
      %v3884 = vmul.f32 %v3865, %v3791
      %v3885 = vmul.f32 %v3867, %v3791
      %v3886 = vmul.f32 %v3869, %v3791
      %v3887 = vmul.f32 %v3871, %v3791
      %v3888 = vadd.f32 %v3872, 1e-12
      %v3889 = vadd.f32 %v3873, 1e-12
      %v3890 = vadd.f32 %v3874, 1e-12
      %v3891 = vadd.f32 %v3875, 1e-12
      %v3892 = vadd.f32 %v3876, 1e-12
      %v3893 = vadd.f32 %v3877, 1e-12
      %v3894 = vadd.f32 %v3878, 1e-12
      %v3895 = vadd.f32 %v3879, 1e-12
      %v3896 = vadd.f32 %v3880, 1e-12
      %v3897 = vadd.f32 %v3881, 1e-12
      %v3898 = vadd.f32 %v3882, 1e-12
      %v3899 = vadd.f32 %v3883, 1e-12
      %v3900 = vadd.f32 %v3884, 1e-12
      %v3901 = vadd.f32 %v3885, 1e-12
      %v3902 = vadd.f32 %v3886, 1e-12
      %v3903 = vadd.f32 %v3887, 1e-12
      %v3904 = vrsqrt.pop %v3888
      %v3905 = vrsqrt.pop %v3889
      %v3906 = vrsqrt.pop %v3890
      %v3907 = vrsqrt.pop %v3891
      %v3908 = vrsqrt.pop %v3892
      %v3909 = vrsqrt.pop %v3893
      %v3910 = vrsqrt.pop %v3894
      %v3911 = vrsqrt.pop %v3895
      %v3912 = vrsqrt.pop %v3896
      %v3913 = vrsqrt.pop %v3897
      %v3914 = vrsqrt.pop %v3898
      %v3915 = vrsqrt.pop %v3899
      %v3916 = vrsqrt.pop %v3900
      %v3917 = vrsqrt.pop %v3901
      %v3918 = vrsqrt.pop %v3902
      %v3919 = vrsqrt.pop %v3903
      %v3920 = vmul.f32 %v3808, %v3904
      %v3921 = vmul.f32 %v3809, %v3905
      %v3922 = vmul.f32 %v3810, %v3906
      %v3923 = vmul.f32 %v3811, %v3907
      %v3924 = vmul.f32 %v3812, %v3908
      %v3925 = vmul.f32 %v3813, %v3909
      %v3926 = vmul.f32 %v3814, %v3910
      %v3927 = vmul.f32 %v3815, %v3911
      %v3928 = vmul.f32 %v3816, %v3912
      %v3929 = vmul.f32 %v3817, %v3913
      %v3930 = vmul.f32 %v3818, %v3914
      %v3931 = vmul.f32 %v3819, %v3915
      %v3932 = vmul.f32 %v3820, %v3916
      %v3933 = vmul.f32 %v3821, %v3917
      %v3934 = vmul.f32 %v3822, %v3918
      %v3935 = vmul.f32 %v3823, %v3919
      %v3937 = vlaneseq
      %v3938 = vshrl.u32 %v3937, 7
      %v3939 = vsub.s32 0, %v3938
      %v3940 = vrot.slane %v3757, %v3939
      %v3942 = vmul.f32 %v3920, %v3940
      %v3943 = vmul.f32 %v3921, %v3940
      %v3944 = vmul.f32 %v3922, %v3940
      %v3945 = vmul.f32 %v3923, %v3940
      %v3946 = vmul.f32 %v3924, %v3940
      %v3947 = vmul.f32 %v3925, %v3940
      %v3948 = vmul.f32 %v3926, %v3940
      %v3949 = vmul.f32 %v3927, %v3940
      %v3950 = vmul.f32 %v3928, %v3940
      %v3951 = vmul.f32 %v3929, %v3940
      %v3952 = vmul.f32 %v3930, %v3940
      %v3953 = vmul.f32 %v3931, %v3940
      %v3954 = vmul.f32 %v3932, %v3940
      %v3955 = vmul.f32 %v3933, %v3940
      %v3956 = vmul.f32 %v3934, %v3940
      %v3957 = vmul.f32 %v3935, %v3940
      %v3959 = vlaneseq
      %v3960 = vshrl.u32 %v3959, 7
      %v3961 = vsub.s32 0, %v3960
      %v3962 = vrot.slane %v3758, %v3961
      %v3964 = vadd.f32 %v3942, %v3962
      %v3965 = vadd.f32 %v3943, %v3962
      %v3966 = vadd.f32 %v3944, %v3962
      %v3967 = vadd.f32 %v3945, %v3962
      %v3968 = vadd.f32 %v3946, %v3962
      %v3969 = vadd.f32 %v3947, %v3962
      %v3970 = vadd.f32 %v3948, %v3962
      %v3971 = vadd.f32 %v3949, %v3962
      %v3972 = vadd.f32 %v3950, %v3962
      %v3973 = vadd.f32 %v3951, %v3962
      %v3974 = vadd.f32 %v3952, %v3962
      %v3975 = vadd.f32 %v3953, %v3962
      %v3976 = vadd.f32 %v3954, %v3962
      %v3977 = vadd.f32 %v3955, %v3962
      %v3978 = vadd.f32 %v3956, %v3962
      %v3979 = vadd.f32 %v3957, %v3962
      %v3980 = vpack.c.bf16 %v3965, %v3964
      %v3981 = vpack.c.bf16 %v3967, %v3966
      %v3982 = vpack.c.bf16 %v3969, %v3968
      %v3983 = vpack.c.bf16 %v3971, %v3970
      %v3984 = vpack.c.bf16 %v3973, %v3972
      %v3985 = vpack.c.bf16 %v3975, %v3974
      %v3986 = vpack.c.bf16 %v3977, %v3976
      %v3987 = vpack.c.bf16 %v3979, %v3978
      %v3988 = vld [vmem:[%s830] sm:$0xff]
      %v3989 = vld [vmem:[%s830 + $0x10] sm:$0xff]
      %v3990 = vld [vmem:[%s830 + $0x20] sm:$0xff]
      %v3991 = vld [vmem:[%s830 + $0x30] sm:$0xff]
      %v3992 = vld [vmem:[%s830 + $0x40] sm:$0xff]
      %v3993 = vld [vmem:[%s830 + $0x50] sm:$0xff]
      %v3994 = vld [vmem:[%s830 + $0x60] sm:$0xff]
      %v3995 = vld [vmem:[%s830 + $0x70] sm:$0xff]
      %v3996 = vld [vmem:[%s830 + $0x80] sm:$0xff]
      %v3997 = vld [vmem:[%s830 + $0x90] sm:$0xff]
      %v3998 = vld [vmem:[%s830 + $0xa0] sm:$0xff]
      %v3999 = vld [vmem:[%s830 + $0xb0] sm:$0xff]
      %v4000 = vld [vmem:[%s830 + $0xc0] sm:$0xff]
      %v4001 = vld [vmem:[%s830 + $0xd0] sm:$0xff]
      %v4002 = vld [vmem:[%s830 + $0xe0] sm:$0xff]
      %v4003 = vld [vmem:[%s830 + $0xf0] sm:$0xff]
      %v4004 = vld [vmem:[%s834] sm:$0x3]
      %v4006 = vlaneseq
      %v4007 = vshrl.u32 %v4006, 7
      %v4008 = vsub.s32 0, %v4007
      %v4009 = vrot.slane %v4004, %v4008
      %v4010 = vlaneseq
      %v4011 = vshrl.u32 %v4010, 7
      %v4012 = vsub.s32 1, %v4011
      %v4013 = vrot.slane %v4004, %v4012
      %v4032 = vunpack.c.l.b16 %v3988
      %v4033 = vunpack.c.h.b16 %v3988
      %v4034 = vunpack.c.l.b16 %v3989
      %v4035 = vunpack.c.h.b16 %v3989
      %v4036 = vunpack.c.l.b16 %v3990
      %v4037 = vunpack.c.h.b16 %v3990
      %v4038 = vunpack.c.l.b16 %v3991
      %v4039 = vunpack.c.h.b16 %v3991
      %v4040 = vunpack.c.l.b16 %v3992
      %v4041 = vunpack.c.h.b16 %v3992
      %v4042 = vunpack.c.l.b16 %v3993
      %v4043 = vunpack.c.h.b16 %v3993
      %v4044 = vunpack.c.l.b16 %v3994
      %v4045 = vunpack.c.h.b16 %v3994
      %v4046 = vunpack.c.l.b16 %v3995
      %v4047 = vunpack.c.h.b16 %v3995
      %v4048 = vunpack.c.l.b16 %v3996
      %v4049 = vunpack.c.h.b16 %v3996
      %v4050 = vunpack.c.l.b16 %v3997
      %v4051 = vunpack.c.h.b16 %v3997
      %v4052 = vunpack.c.l.b16 %v3998
      %v4053 = vunpack.c.h.b16 %v3998
      %v4054 = vunpack.c.l.b16 %v3999
      %v4055 = vunpack.c.h.b16 %v3999
      %v4056 = vunpack.c.l.b16 %v4000
      %v4057 = vunpack.c.h.b16 %v4000
      %v4058 = vunpack.c.l.b16 %v4001
      %v4059 = vunpack.c.h.b16 %v4001
      %v4060 = vunpack.c.l.b16 %v4002
      %v4061 = vunpack.c.h.b16 %v4002
      %v4062 = vunpack.c.l.b16 %v4003
      %v4063 = vunpack.c.h.b16 %v4003
      %v4064 = vpack.c.b16 %v4034, %v4032
      %v4065 = vpack.c.b16 %v4035, %v4033
      %v4066 = vpack.c.b16 %v4038, %v4036
      %v4067 = vpack.c.b16 %v4039, %v4037
      %v4068 = vpack.c.b16 %v4042, %v4040
      %v4069 = vpack.c.b16 %v4043, %v4041
      %v4070 = vpack.c.b16 %v4046, %v4044
      %v4071 = vpack.c.b16 %v4047, %v4045
      %v4072 = vpack.c.b16 %v4050, %v4048
      %v4073 = vpack.c.b16 %v4051, %v4049
      %v4074 = vpack.c.b16 %v4054, %v4052
      %v4075 = vpack.c.b16 %v4055, %v4053
      %v4076 = vpack.c.b16 %v4058, %v4056
      %v4077 = vpack.c.b16 %v4059, %v4057
      %v4078 = vpack.c.b16 %v4062, %v4060
      %v4079 = vpack.c.b16 %v4063, %v4061
      %4096 = vmatprep.subr.bf16.mxu0 %v4065
      %4097 = vmatpush1.bf16.msra.mxu0 %v4064
      %4098 = vmatprep.subr.bf16.mxu0 %v4067
      %4099 = vmatpush1.bf16.msra.mxu0 %v4066
      %4100 = vmatprep.subr.bf16.mxu0 %v4069
      %4101 = vmatpush1.bf16.msra.mxu0 %v4068
      %4102 = vmatprep.subr.bf16.mxu0 %v4071
      %4103 = vmatpush1.bf16.msra.mxu0 %v4070
      %4104 = vmatprep.subr.bf16.mxu0 %v4073
      %4105 = vmatpush1.bf16.msra.mxu0 %v4072
      %4106 = vmatprep.subr.bf16.mxu0 %v4075
      %4107 = vmatpush1.bf16.msra.mxu0 %v4074
      %4108 = vmatprep.subr.bf16.mxu0 %v4077
      %4109 = vmatpush1.bf16.msra.mxu0 %v4076
      %4110 = vmatprep.subr.bf16.mxu0 %v4079
      %4111 = vmatpush1.bf16.msra.mxu0 %v4078
      %4112 = vmatprep.subr.bf16.mxu0 0
      %4113 = vmatpush1.bf16.msra.mxu0 0
      %4114 = vmatprep.subr.bf16.mxu0 0
      %4115 = vmatpush1.bf16.msra.mxu0 0
      %4116 = vmatprep.subr.bf16.mxu0 0
      %4117 = vmatpush1.bf16.msra.mxu0 0
      %4118 = vmatprep.subr.bf16.mxu0 0
      %4119 = vmatpush1.bf16.msra.mxu0 0
      %4120 = vmatprep.subr.bf16.mxu0 0
      %4121 = vmatpush1.bf16.msra.mxu0 0
      %4122 = vmatprep.subr.bf16.mxu0 0
      %4123 = vmatpush1.bf16.msra.mxu0 0
      %4124 = vmatprep.subr.bf16.mxu0 0
      %4125 = vmatpush1.bf16.msra.mxu0 0
      %4126 = vmatprep.subr.bf16.mxu0 0
      %4127 = vmatpush1.bf16.msra.mxu0 0
      %4128 = vmatprep.mubr.bf16.mxu0 0
      %4129 = vmatmul.mubr.bf16.gmra.mrb[0].mxu0 %v3980
      %v4130 = vpop.f32.mrb[0].mxu0
      %v4131 = vadd.f32 %v4009, %v4130
      %v4132 = vpop.f32.mrb[0].mxu0
      %v4133 = vadd.f32 %v4013, %v4132
      %v4134 = vpop.f32.mrb[0].mxu0
      %v4135 = vadd.f32 %v4009, %v4134
      %v4136 = vpop.f32.mrb[0].mxu0
      %v4137 = vadd.f32 %v4013, %v4136
      %4138 = vmatprep.mubr.bf16.mxu0 0
      %4139 = vmatmul.mubr.bf16.gmra.mrb[0].mxu0 %v3981
      %v4140 = vpop.f32.mrb[0].mxu0
      %v4141 = vadd.f32 %v4009, %v4140
      %v4142 = vpop.f32.mrb[0].mxu0
      %v4143 = vadd.f32 %v4013, %v4142
      %v4144 = vpop.f32.mrb[0].mxu0
      %v4145 = vadd.f32 %v4009, %v4144
      %v4146 = vpop.f32.mrb[0].mxu0
      %v4147 = vadd.f32 %v4013, %v4146
      %4148 = vmatprep.mubr.bf16.mxu0 0
      %4149 = vmatmul.mubr.bf16.gmra.mrb[0].mxu0 %v3982
      %v4150 = vpop.f32.mrb[0].mxu0
      %v4151 = vadd.f32 %v4009, %v4150
      %v4152 = vpop.f32.mrb[0].mxu0
      %v4153 = vadd.f32 %v4013, %v4152
      %v4154 = vpop.f32.mrb[0].mxu0
      %v4155 = vadd.f32 %v4009, %v4154
      %v4156 = vpop.f32.mrb[0].mxu0
      %v4157 = vadd.f32 %v4013, %v4156
      %4158 = vmatprep.mubr.bf16.mxu0 0
      %4159 = vmatmul.mubr.bf16.gmra.mrb[0].mxu0 %v3983
      %v4160 = vpop.f32.mrb[0].mxu0
      %v4161 = vadd.f32 %v4009, %v4160
      %v4162 = vpop.f32.mrb[0].mxu0
      %v4163 = vadd.f32 %v4013, %v4162
      %v4164 = vpop.f32.mrb[0].mxu0
      %v4165 = vadd.f32 %v4009, %v4164
      %v4166 = vpop.f32.mrb[0].mxu0
      %v4167 = vadd.f32 %v4013, %v4166
      %4168 = vmatprep.mubr.bf16.mxu0 0
      %4169 = vmatmul.mubr.bf16.gmra.mrb[0].mxu0 %v3984
      %v4170 = vpop.f32.mrb[0].mxu0
      %v4171 = vadd.f32 %v4009, %v4170
      %v4172 = vpop.f32.mrb[0].mxu0
      %v4173 = vadd.f32 %v4013, %v4172
      %v4174 = vpop.f32.mrb[0].mxu0
      %v4175 = vadd.f32 %v4009, %v4174
      %v4176 = vpop.f32.mrb[0].mxu0
      %v4177 = vadd.f32 %v4013, %v4176
      %4178 = vmatprep.mubr.bf16.mxu0 0
      %4179 = vmatmul.mubr.bf16.gmra.mrb[0].mxu0 %v3985
      %v4180 = vpop.f32.mrb[0].mxu0
      %v4181 = vadd.f32 %v4009, %v4180
      %v4182 = vpop.f32.mrb[0].mxu0
      %v4183 = vadd.f32 %v4013, %v4182
      %v4184 = vpop.f32.mrb[0].mxu0
      %v4185 = vadd.f32 %v4009, %v4184
      %v4186 = vpop.f32.mrb[0].mxu0
      %v4187 = vadd.f32 %v4013, %v4186
      %4188 = vmatprep.mubr.bf16.mxu0 0
      %4189 = vmatmul.mubr.bf16.gmra.mrb[0].mxu0 %v3986
      %v4190 = vpop.f32.mrb[0].mxu0
      %v4191 = vadd.f32 %v4009, %v4190
      %v4192 = vpop.f32.mrb[0].mxu0
      %v4193 = vadd.f32 %v4013, %v4192
      %v4194 = vpop.f32.mrb[0].mxu0
      %v4195 = vadd.f32 %v4009, %v4194
      %v4196 = vpop.f32.mrb[0].mxu0
      %v4197 = vadd.f32 %v4013, %v4196
      %4198 = vmatprep.mubr.bf16.mxu0 0
      %4199 = vmatmul.mubr.bf16.gmra.mrb[0].mxu0 %v3987
      %v4200 = vpop.f32.mrb[0].mxu0
      %v4201 = vadd.f32 %v4009, %v4200
      %v4202 = vpop.f32.mrb[0].mxu0
      %v4203 = vadd.f32 %v4013, %v4202
      %v4204 = vpop.f32.mrb[0].mxu0
      %v4205 = vadd.f32 %v4009, %v4204
      %v4206 = vpop.f32.mrb[0].mxu0
      %v4207 = vadd.f32 %v4013, %v4206
      %4208 = vdwg.mxu0
      %v4209 = vmul.f32 %v4131, %v4131
      %v4210 = vmul.f32 %v4133, %v4133
      %v4211 = vmul.f32 %v4135, %v4135
      %v4212 = vmul.f32 %v4137, %v4137
      %v4213 = vmul.f32 %v4141, %v4141
      %v4214 = vmul.f32 %v4143, %v4143
      %v4215 = vmul.f32 %v4145, %v4145
      %v4216 = vmul.f32 %v4147, %v4147
      %v4217 = vmul.f32 %v4151, %v4151
      %v4218 = vmul.f32 %v4153, %v4153
      %v4219 = vmul.f32 %v4155, %v4155
      %v4220 = vmul.f32 %v4157, %v4157
      %v4221 = vmul.f32 %v4161, %v4161
      %v4222 = vmul.f32 %v4163, %v4163
      %v4223 = vmul.f32 %v4165, %v4165
      %v4224 = vmul.f32 %v4167, %v4167
      %v4225 = vmul.f32 %v4171, %v4171
      %v4226 = vmul.f32 %v4173, %v4173
      %v4227 = vmul.f32 %v4175, %v4175
      %v4228 = vmul.f32 %v4177, %v4177
      %v4229 = vmul.f32 %v4181, %v4181
      %v4230 = vmul.f32 %v4183, %v4183
      %v4231 = vmul.f32 %v4185, %v4185
      %v4232 = vmul.f32 %v4187, %v4187
      %v4233 = vmul.f32 %v4191, %v4191
      %v4234 = vmul.f32 %v4193, %v4193
      %v4235 = vmul.f32 %v4195, %v4195
      %v4236 = vmul.f32 %v4197, %v4197
      %v4237 = vmul.f32 %v4201, %v4201
      %v4238 = vmul.f32 %v4203, %v4203
      %v4239 = vmul.f32 %v4205, %v4205
      %v4240 = vmul.f32 %v4207, %v4207
      %v4241 = vmul.f32 %v4131, %v4209
      %v4242 = vmul.f32 %v4133, %v4210
      %v4243 = vmul.f32 %v4135, %v4211
      %v4244 = vmul.f32 %v4137, %v4212
      %v4245 = vmul.f32 %v4141, %v4213
      %v4246 = vmul.f32 %v4143, %v4214
      %v4247 = vmul.f32 %v4145, %v4215
      %v4248 = vmul.f32 %v4147, %v4216
      %v4249 = vmul.f32 %v4151, %v4217
      %v4250 = vmul.f32 %v4153, %v4218
      %v4251 = vmul.f32 %v4155, %v4219
      %v4252 = vmul.f32 %v4157, %v4220
      %v4253 = vmul.f32 %v4161, %v4221
      %v4254 = vmul.f32 %v4163, %v4222
      %v4255 = vmul.f32 %v4165, %v4223
      %v4256 = vmul.f32 %v4167, %v4224
      %v4257 = vmul.f32 %v4171, %v4225
      %v4258 = vmul.f32 %v4173, %v4226
      %v4259 = vmul.f32 %v4175, %v4227
      %v4260 = vmul.f32 %v4177, %v4228
      %v4261 = vmul.f32 %v4181, %v4229
      %v4262 = vmul.f32 %v4183, %v4230
      %v4263 = vmul.f32 %v4185, %v4231
      %v4264 = vmul.f32 %v4187, %v4232
      %v4265 = vmul.f32 %v4191, %v4233
      %v4266 = vmul.f32 %v4193, %v4234
      %v4267 = vmul.f32 %v4195, %v4235
      %v4268 = vmul.f32 %v4197, %v4236
      %v4269 = vmul.f32 %v4201, %v4237
      %v4270 = vmul.f32 %v4203, %v4238
      %v4271 = vmul.f32 %v4205, %v4239
      %v4272 = vmul.f32 %v4207, %v4240
      %v4273 = vmul.f32 %v4241, 0.044715
      %v4274 = vmul.f32 %v4242, 0.044715
      %v4275 = vmul.f32 %v4243, 0.044715
      %v4276 = vmul.f32 %v4244, 0.044715
      %v4277 = vmul.f32 %v4245, 0.044715
      %v4278 = vmul.f32 %v4246, 0.044715
      %v4279 = vmul.f32 %v4247, 0.044715
      %v4280 = vmul.f32 %v4248, 0.044715
      %v4281 = vmul.f32 %v4249, 0.044715
      %v4282 = vmul.f32 %v4250, 0.044715
      %v4283 = vmul.f32 %v4251, 0.044715
      %v4284 = vmul.f32 %v4252, 0.044715
      %v4285 = vmul.f32 %v4253, 0.044715
      %v4286 = vmul.f32 %v4254, 0.044715
      %v4287 = vmul.f32 %v4255, 0.044715
      %v4288 = vmul.f32 %v4256, 0.044715
      %v4289 = vmul.f32 %v4257, 0.044715
      %v4290 = vmul.f32 %v4258, 0.044715
      %v4291 = vmul.f32 %v4259, 0.044715
      %v4292 = vmul.f32 %v4260, 0.044715
      %v4293 = vmul.f32 %v4261, 0.044715
      %v4294 = vmul.f32 %v4262, 0.044715
      %v4295 = vmul.f32 %v4263, 0.044715
      %v4296 = vmul.f32 %v4264, 0.044715
      %v4297 = vmul.f32 %v4265, 0.044715
      %v4298 = vmul.f32 %v4266, 0.044715
      %v4299 = vmul.f32 %v4267, 0.044715
      %v4300 = vmul.f32 %v4268, 0.044715
      %v4301 = vmul.f32 %v4269, 0.044715
      %v4302 = vmul.f32 %v4270, 0.044715
      %v4303 = vmul.f32 %v4271, 0.044715
      %v4304 = vmul.f32 %v4272, 0.044715
      %v4305 = vadd.f32 %v4131, %v4273
      %v4306 = vadd.f32 %v4133, %v4274
      %v4307 = vadd.f32 %v4135, %v4275
      %v4308 = vadd.f32 %v4137, %v4276
      %v4309 = vadd.f32 %v4141, %v4277
      %v4310 = vadd.f32 %v4143, %v4278
      %v4311 = vadd.f32 %v4145, %v4279
      %v4312 = vadd.f32 %v4147, %v4280
      %v4313 = vadd.f32 %v4151, %v4281
      %v4314 = vadd.f32 %v4153, %v4282
      %v4315 = vadd.f32 %v4155, %v4283
      %v4316 = vadd.f32 %v4157, %v4284
      %v4317 = vadd.f32 %v4161, %v4285
      %v4318 = vadd.f32 %v4163, %v4286
      %v4319 = vadd.f32 %v4165, %v4287
      %v4320 = vadd.f32 %v4167, %v4288
      %v4321 = vadd.f32 %v4171, %v4289
      %v4322 = vadd.f32 %v4173, %v4290
      %v4323 = vadd.f32 %v4175, %v4291
      %v4324 = vadd.f32 %v4177, %v4292
      %v4325 = vadd.f32 %v4181, %v4293
      %v4326 = vadd.f32 %v4183, %v4294
      %v4327 = vadd.f32 %v4185, %v4295
      %v4328 = vadd.f32 %v4187, %v4296
      %v4329 = vadd.f32 %v4191, %v4297
      %v4330 = vadd.f32 %v4193, %v4298
      %v4331 = vadd.f32 %v4195, %v4299
      %v4332 = vadd.f32 %v4197, %v4300
      %v4333 = vadd.f32 %v4201, %v4301
      %v4334 = vadd.f32 %v4203, %v4302
      %v4335 = vadd.f32 %v4205, %v4303
      %v4336 = vadd.f32 %v4207, %v4304
      %v4337 = vmul.f32 %v4305, 0.7978846
      %v4338 = vmul.f32 %v4306, 0.7978846
      %v4339 = vmul.f32 %v4307, 0.7978846
      %v4340 = vmul.f32 %v4308, 0.7978846
      %v4341 = vmul.f32 %v4309, 0.7978846
      %v4342 = vmul.f32 %v4310, 0.7978846
      %v4343 = vmul.f32 %v4311, 0.7978846
      %v4344 = vmul.f32 %v4312, 0.7978846
      %v4345 = vmul.f32 %v4313, 0.7978846
      %v4346 = vmul.f32 %v4314, 0.7978846
      %v4347 = vmul.f32 %v4315, 0.7978846
      %v4348 = vmul.f32 %v4316, 0.7978846
      %v4349 = vmul.f32 %v4317, 0.7978846
      %v4350 = vmul.f32 %v4318, 0.7978846
      %v4351 = vmul.f32 %v4319, 0.7978846
      %v4352 = vmul.f32 %v4320, 0.7978846
      %v4353 = vmul.f32 %v4321, 0.7978846
      %v4354 = vmul.f32 %v4322, 0.7978846
      %v4355 = vmul.f32 %v4323, 0.7978846
      %v4356 = vmul.f32 %v4324, 0.7978846
      %v4357 = vmul.f32 %v4325, 0.7978846
      %v4358 = vmul.f32 %v4326, 0.7978846
      %v4359 = vmul.f32 %v4327, 0.7978846
      %v4360 = vmul.f32 %v4328, 0.7978846
      %v4361 = vmul.f32 %v4329, 0.7978846
      %v4362 = vmul.f32 %v4330, 0.7978846
      %v4363 = vmul.f32 %v4331, 0.7978846
      %v4364 = vmul.f32 %v4332, 0.7978846
      %v4365 = vmul.f32 %v4333, 0.7978846
      %v4366 = vmul.f32 %v4334, 0.7978846
      %v4367 = vmul.f32 %v4335, 0.7978846
      %v4368 = vmul.f32 %v4336, 0.7978846
      %v4369 = vtanh.pop %v4337
      %v4370 = vtanh.pop %v4338
      %v4371 = vtanh.pop %v4339
      %v4372 = vtanh.pop %v4340
      %v4373 = vtanh.pop %v4341
      %v4374 = vtanh.pop %v4342
      %v4375 = vtanh.pop %v4343
      %v4376 = vtanh.pop %v4344
      %v4377 = vtanh.pop %v4345
      %v4378 = vtanh.pop %v4346
      %v4379 = vtanh.pop %v4347
      %v4380 = vtanh.pop %v4348
      %v4381 = vtanh.pop %v4349
      %v4382 = vtanh.pop %v4350
      %v4383 = vtanh.pop %v4351
      %v4384 = vtanh.pop %v4352
      %v4385 = vtanh.pop %v4353
      %v4386 = vtanh.pop %v4354
      %v4387 = vtanh.pop %v4355
      %v4388 = vtanh.pop %v4356
      %v4389 = vtanh.pop %v4357
      %v4390 = vtanh.pop %v4358
      %v4391 = vtanh.pop %v4359
      %v4392 = vtanh.pop %v4360
      %v4393 = vtanh.pop %v4361
      %v4394 = vtanh.pop %v4362
      %v4395 = vtanh.pop %v4363
      %v4396 = vtanh.pop %v4364
      %v4397 = vtanh.pop %v4365
      %v4398 = vtanh.pop %v4366
      %v4399 = vtanh.pop %v4367
      %v4400 = vtanh.pop %v4368
      %v4401 = vadd.f32 %v4369, 1.0
      %v4402 = vadd.f32 %v4370, 1.0
      %v4403 = vadd.f32 %v4371, 1.0
      %v4404 = vadd.f32 %v4372, 1.0
      %v4405 = vadd.f32 %v4373, 1.0
      %v4406 = vadd.f32 %v4374, 1.0
      %v4407 = vadd.f32 %v4375, 1.0
      %v4408 = vadd.f32 %v4376, 1.0
      %v4409 = vadd.f32 %v4377, 1.0
      %v4410 = vadd.f32 %v4378, 1.0
      %v4411 = vadd.f32 %v4379, 1.0
      %v4412 = vadd.f32 %v4380, 1.0
      %v4413 = vadd.f32 %v4381, 1.0
      %v4414 = vadd.f32 %v4382, 1.0
      %v4415 = vadd.f32 %v4383, 1.0
      %v4416 = vadd.f32 %v4384, 1.0
      %v4417 = vadd.f32 %v4385, 1.0
      %v4418 = vadd.f32 %v4386, 1.0
      %v4419 = vadd.f32 %v4387, 1.0
      %v4420 = vadd.f32 %v4388, 1.0
      %v4421 = vadd.f32 %v4389, 1.0
      %v4422 = vadd.f32 %v4390, 1.0
      %v4423 = vadd.f32 %v4391, 1.0
      %v4424 = vadd.f32 %v4392, 1.0
      %v4425 = vadd.f32 %v4393, 1.0
      %v4426 = vadd.f32 %v4394, 1.0
      %v4427 = vadd.f32 %v4395, 1.0
      %v4428 = vadd.f32 %v4396, 1.0
      %v4429 = vadd.f32 %v4397, 1.0
      %v4430 = vadd.f32 %v4398, 1.0
      %v4431 = vadd.f32 %v4399, 1.0
      %v4432 = vadd.f32 %v4400, 1.0
      %v4433 = vmul.f32 %v4401, 0.5
      %v4434 = vmul.f32 %v4402, 0.5
      %v4435 = vmul.f32 %v4403, 0.5
      %v4436 = vmul.f32 %v4404, 0.5
      %v4437 = vmul.f32 %v4405, 0.5
      %v4438 = vmul.f32 %v4406, 0.5
      %v4439 = vmul.f32 %v4407, 0.5
      %v4440 = vmul.f32 %v4408, 0.5
      %v4441 = vmul.f32 %v4409, 0.5
      %v4442 = vmul.f32 %v4410, 0.5
      %v4443 = vmul.f32 %v4411, 0.5
      %v4444 = vmul.f32 %v4412, 0.5
      %v4445 = vmul.f32 %v4413, 0.5
      %v4446 = vmul.f32 %v4414, 0.5
      %v4447 = vmul.f32 %v4415, 0.5
      %v4448 = vmul.f32 %v4416, 0.5
      %v4449 = vmul.f32 %v4417, 0.5
      %v4450 = vmul.f32 %v4418, 0.5
      %v4451 = vmul.f32 %v4419, 0.5
      %v4452 = vmul.f32 %v4420, 0.5
      %v4453 = vmul.f32 %v4421, 0.5
      %v4454 = vmul.f32 %v4422, 0.5
      %v4455 = vmul.f32 %v4423, 0.5
      %v4456 = vmul.f32 %v4424, 0.5
      %v4457 = vmul.f32 %v4425, 0.5
      %v4458 = vmul.f32 %v4426, 0.5
      %v4459 = vmul.f32 %v4427, 0.5
      %v4460 = vmul.f32 %v4428, 0.5
      %v4461 = vmul.f32 %v4429, 0.5
      %v4462 = vmul.f32 %v4430, 0.5
      %v4463 = vmul.f32 %v4431, 0.5
      %v4464 = vmul.f32 %v4432, 0.5
      %v4465 = vmul.f32 %v4131, %v4433
      %v4466 = vmul.f32 %v4133, %v4434
      %v4467 = vmul.f32 %v4135, %v4435
      %v4468 = vmul.f32 %v4137, %v4436
      %v4469 = vmul.f32 %v4141, %v4437
      %v4470 = vmul.f32 %v4143, %v4438
      %v4471 = vmul.f32 %v4145, %v4439
      %v4472 = vmul.f32 %v4147, %v4440
      %v4473 = vmul.f32 %v4151, %v4441
      %v4474 = vmul.f32 %v4153, %v4442
      %v4475 = vmul.f32 %v4155, %v4443
      %v4476 = vmul.f32 %v4157, %v4444
      %v4477 = vmul.f32 %v4161, %v4445
      %v4478 = vmul.f32 %v4163, %v4446
      %v4479 = vmul.f32 %v4165, %v4447
      %v4480 = vmul.f32 %v4167, %v4448
      %v4481 = vmul.f32 %v4171, %v4449
      %v4482 = vmul.f32 %v4173, %v4450
      %v4483 = vmul.f32 %v4175, %v4451
      %v4484 = vmul.f32 %v4177, %v4452
      %v4485 = vmul.f32 %v4181, %v4453
      %v4486 = vmul.f32 %v4183, %v4454
      %v4487 = vmul.f32 %v4185, %v4455
      %v4488 = vmul.f32 %v4187, %v4456
      %v4489 = vmul.f32 %v4191, %v4457
      %v4490 = vmul.f32 %v4193, %v4458
      %v4491 = vmul.f32 %v4195, %v4459
      %v4492 = vmul.f32 %v4197, %v4460
      %v4493 = vmul.f32 %v4201, %v4461
      %v4494 = vmul.f32 %v4203, %v4462
      %v4495 = vmul.f32 %v4205, %v4463
      %v4496 = vmul.f32 %v4207, %v4464
      %v4497 = vpack.c.bf16 %v4467, %v4465
      %v4498 = vpack.c.bf16 %v4468, %v4466
      %v4499 = vpack.c.bf16 %v4471, %v4469
      %v4500 = vpack.c.bf16 %v4472, %v4470
      %v4501 = vpack.c.bf16 %v4475, %v4473
      %v4502 = vpack.c.bf16 %v4476, %v4474
      %v4503 = vpack.c.bf16 %v4479, %v4477
      %v4504 = vpack.c.bf16 %v4480, %v4478
      %v4505 = vpack.c.bf16 %v4483, %v4481
      %v4506 = vpack.c.bf16 %v4484, %v4482
      %v4507 = vpack.c.bf16 %v4487, %v4485
      %v4508 = vpack.c.bf16 %v4488, %v4486
      %v4509 = vpack.c.bf16 %v4491, %v4489
      %v4510 = vpack.c.bf16 %v4492, %v4490
      %v4511 = vpack.c.bf16 %v4495, %v4493
      %v4512 = vpack.c.bf16 %v4496, %v4494
      %v4513 = vld [vmem:[%s839] sm:$0xf]
      %v4514 = vld [vmem:[%s839 + $0x4] sm:$0xf]
      %v4515 = vld [vmem:[%s839 + $0x8] sm:$0xf]
      %v4516 = vld [vmem:[%s839 + $0xc] sm:$0xf]
      %v4517 = vld [vmem:[%s839 + $0x10] sm:$0xf]
      %v4518 = vld [vmem:[%s839 + $0x14] sm:$0xf]
      %v4519 = vld [vmem:[%s839 + $0x18] sm:$0xf]
      %v4520 = vld [vmem:[%s839 + $0x1c] sm:$0xf]
      %v4521 = vld [vmem:[%s839 + $0x20] sm:$0xf]
      %v4522 = vld [vmem:[%s839 + $0x24] sm:$0xf]
      %v4523 = vld [vmem:[%s839 + $0x28] sm:$0xf]
      %v4524 = vld [vmem:[%s839 + $0x2c] sm:$0xf]
      %v4525 = vld [vmem:[%s839 + $0x30] sm:$0xf]
      %v4526 = vld [vmem:[%s839 + $0x34] sm:$0xf]
      %v4527 = vld [vmem:[%s839 + $0x38] sm:$0xf]
      %v4528 = vld [vmem:[%s839 + $0x3c] sm:$0xf]
      %v4529 = vld [vmem:[%s839 + $0x40] sm:$0xf]
      %v4530 = vld [vmem:[%s839 + $0x44] sm:$0xf]
      %v4531 = vld [vmem:[%s839 + $0x48] sm:$0xf]
      %v4532 = vld [vmem:[%s839 + $0x4c] sm:$0xf]
      %v4533 = vld [vmem:[%s839 + $0x50] sm:$0xf]
      %v4534 = vld [vmem:[%s839 + $0x54] sm:$0xf]
      %v4535 = vld [vmem:[%s839 + $0x58] sm:$0xf]
      %v4536 = vld [vmem:[%s839 + $0x5c] sm:$0xf]
      %v4537 = vld [vmem:[%s839 + $0x60] sm:$0xf]
      %v4538 = vld [vmem:[%s839 + $0x64] sm:$0xf]
      %v4539 = vld [vmem:[%s839 + $0x68] sm:$0xf]
      %v4540 = vld [vmem:[%s839 + $0x6c] sm:$0xf]
      %v4541 = vld [vmem:[%s839 + $0x70] sm:$0xf]
      %v4542 = vld [vmem:[%s839 + $0x74] sm:$0xf]
      %v4543 = vld [vmem:[%s839 + $0x78] sm:$0xf]
      %v4544 = vld [vmem:[%s839 + $0x7c] sm:$0xf]
      %v4545 = vld [vmem:[%s830 + $0x8] sm:$0xff]
      %v4546 = vld [vmem:[%s830 + $0x18] sm:$0xff]
      %v4547 = vld [vmem:[%s830 + $0x28] sm:$0xff]
      %v4548 = vld [vmem:[%s830 + $0x38] sm:$0xff]
      %v4549 = vld [vmem:[%s830 + $0x48] sm:$0xff]
      %v4550 = vld [vmem:[%s830 + $0x58] sm:$0xff]
      %v4551 = vld [vmem:[%s830 + $0x68] sm:$0xff]
      %v4552 = vld [vmem:[%s830 + $0x78] sm:$0xff]
      %v4553 = vld [vmem:[%s830 + $0x88] sm:$0xff]
      %v4554 = vld [vmem:[%s830 + $0x98] sm:$0xff]
      %v4555 = vld [vmem:[%s830 + $0xa8] sm:$0xff]
      %v4556 = vld [vmem:[%s830 + $0xb8] sm:$0xff]
      %v4557 = vld [vmem:[%s830 + $0xc8] sm:$0xff]
      %v4558 = vld [vmem:[%s830 + $0xd8] sm:$0xff]
      %v4559 = vld [vmem:[%s830 + $0xe8] sm:$0xff]
      %v4560 = vld [vmem:[%s830 + $0xf8] sm:$0xff]
      %v4561 = vld [vmem:[%s834 + $0x2] sm:$0x3]
      %v4563 = vlaneseq
      %v4564 = vshrl.u32 %v4563, 7
      %v4565 = vsub.s32 0, %v4564
      %v4566 = vrot.slane %v4561, %v4565
      %v4567 = vlaneseq
      %v4568 = vshrl.u32 %v4567, 7
      %v4569 = vsub.s32 1, %v4568
      %v4570 = vrot.slane %v4561, %v4569
      %v4589 = vunpack.c.l.b16 %v4545
      %v4590 = vunpack.c.h.b16 %v4545
      %v4591 = vunpack.c.l.b16 %v4546
      %v4592 = vunpack.c.h.b16 %v4546
      %v4593 = vunpack.c.l.b16 %v4547
      %v4594 = vunpack.c.h.b16 %v4547
      %v4595 = vunpack.c.l.b16 %v4548
      %v4596 = vunpack.c.h.b16 %v4548
      %v4597 = vunpack.c.l.b16 %v4549
      %v4598 = vunpack.c.h.b16 %v4549
      %v4599 = vunpack.c.l.b16 %v4550
      %v4600 = vunpack.c.h.b16 %v4550
      %v4601 = vunpack.c.l.b16 %v4551
      %v4602 = vunpack.c.h.b16 %v4551
      %v4603 = vunpack.c.l.b16 %v4552
      %v4604 = vunpack.c.h.b16 %v4552
      %v4605 = vunpack.c.l.b16 %v4553
      %v4606 = vunpack.c.h.b16 %v4553
      %v4607 = vunpack.c.l.b16 %v4554
      %v4608 = vunpack.c.h.b16 %v4554
      %v4609 = vunpack.c.l.b16 %v4555
      %v4610 = vunpack.c.h.b16 %v4555
      %v4611 = vunpack.c.l.b16 %v4556
      %v4612 = vunpack.c.h.b16 %v4556
      %v4613 = vunpack.c.l.b16 %v4557
      %v4614 = vunpack.c.h.b16 %v4557
      %v4615 = vunpack.c.l.b16 %v4558
      %v4616 = vunpack.c.h.b16 %v4558
      %v4617 = vunpack.c.l.b16 %v4559
      %v4618 = vunpack.c.h.b16 %v4559
      %v4619 = vunpack.c.l.b16 %v4560
      %v4620 = vunpack.c.h.b16 %v4560
      %v4621 = vpack.c.b16 %v4591, %v4589
      %v4622 = vpack.c.b16 %v4592, %v4590
      %v4623 = vpack.c.b16 %v4595, %v4593
      %v4624 = vpack.c.b16 %v4596, %v4594
      %v4625 = vpack.c.b16 %v4599, %v4597
      %v4626 = vpack.c.b16 %v4600, %v4598
      %v4627 = vpack.c.b16 %v4603, %v4601
      %v4628 = vpack.c.b16 %v4604, %v4602
      %v4629 = vpack.c.b16 %v4607, %v4605
      %v4630 = vpack.c.b16 %v4608, %v4606
      %v4631 = vpack.c.b16 %v4611, %v4609
      %v4632 = vpack.c.b16 %v4612, %v4610
      %v4633 = vpack.c.b16 %v4615, %v4613
      %v4634 = vpack.c.b16 %v4616, %v4614
      %v4635 = vpack.c.b16 %v4619, %v4617
      %v4636 = vpack.c.b16 %v4620, %v4618
      %4653 = vmatprep.subr.bf16.mxu0 %v4622
      %4654 = vmatpush1.bf16.msra.mxu0 %v4621
      %4655 = vmatprep.subr.bf16.mxu0 %v4624
      %4656 = vmatpush1.bf16.msra.mxu0 %v4623
      %4657 = vmatprep.subr.bf16.mxu0 %v4626
      %4658 = vmatpush1.bf16.msra.mxu0 %v4625
      %4659 = vmatprep.subr.bf16.mxu0 %v4628
      %4660 = vmatpush1.bf16.msra.mxu0 %v4627
      %4661 = vmatprep.subr.bf16.mxu0 %v4630
      %4662 = vmatpush1.bf16.msra.mxu0 %v4629
      %4663 = vmatprep.subr.bf16.mxu0 %v4632
      %4664 = vmatpush1.bf16.msra.mxu0 %v4631
      %4665 = vmatprep.subr.bf16.mxu0 %v4634
      %4666 = vmatpush1.bf16.msra.mxu0 %v4633
      %4667 = vmatprep.subr.bf16.mxu0 %v4636
      %4668 = vmatpush1.bf16.msra.mxu0 %v4635
      %4669 = vmatprep.subr.bf16.mxu0 0
      %4670 = vmatpush1.bf16.msra.mxu0 0
      %4671 = vmatprep.subr.bf16.mxu0 0
      %4672 = vmatpush1.bf16.msra.mxu0 0
      %4673 = vmatprep.subr.bf16.mxu0 0
      %4674 = vmatpush1.bf16.msra.mxu0 0
      %4675 = vmatprep.subr.bf16.mxu0 0
      %4676 = vmatpush1.bf16.msra.mxu0 0
      %4677 = vmatprep.subr.bf16.mxu0 0
      %4678 = vmatpush1.bf16.msra.mxu0 0
      %4679 = vmatprep.subr.bf16.mxu0 0
      %4680 = vmatpush1.bf16.msra.mxu0 0
      %4681 = vmatprep.subr.bf16.mxu0 0
      %4682 = vmatpush1.bf16.msra.mxu0 0
      %4683 = vmatprep.subr.bf16.mxu0 0
      %4684 = vmatpush1.bf16.msra.mxu0 0
      %4685 = vmatprep.mubr.bf16.mxu0 0
      %4686 = vmatmul.mubr.bf16.gmra.mrb[0].mxu0 %v3980
      %v4687 = vpop.f32.mrb[0].mxu0
      %v4688 = vadd.f32 %v4566, %v4687
      %v4689 = vpop.f32.mrb[0].mxu0
      %v4690 = vadd.f32 %v4570, %v4689
      %v4691 = vpop.f32.mrb[0].mxu0
      %v4692 = vadd.f32 %v4566, %v4691
      %v4693 = vpop.f32.mrb[0].mxu0
      %v4694 = vadd.f32 %v4570, %v4693
      %4695 = vmatprep.mubr.bf16.mxu0 0
      %4696 = vmatmul.mubr.bf16.gmra.mrb[0].mxu0 %v3981
      %v4697 = vpop.f32.mrb[0].mxu0
      %v4698 = vadd.f32 %v4566, %v4697
      %v4699 = vpop.f32.mrb[0].mxu0
      %v4700 = vadd.f32 %v4570, %v4699
      %v4701 = vpop.f32.mrb[0].mxu0
      %v4702 = vadd.f32 %v4566, %v4701
      %v4703 = vpop.f32.mrb[0].mxu0
      %v4704 = vadd.f32 %v4570, %v4703
      %4705 = vmatprep.mubr.bf16.mxu0 0
      %4706 = vmatmul.mubr.bf16.gmra.mrb[0].mxu0 %v3982
      %v4707 = vpop.f32.mrb[0].mxu0
      %v4708 = vadd.f32 %v4566, %v4707
      %v4709 = vpop.f32.mrb[0].mxu0
      %v4710 = vadd.f32 %v4570, %v4709
      %v4711 = vpop.f32.mrb[0].mxu0
      %v4712 = vadd.f32 %v4566, %v4711
      %v4713 = vpop.f32.mrb[0].mxu0
      %v4714 = vadd.f32 %v4570, %v4713
      %4715 = vmatprep.mubr.bf16.mxu0 0
      %4716 = vmatmul.mubr.bf16.gmra.mrb[0].mxu0 %v3983
      %v4717 = vpop.f32.mrb[0].mxu0
      %v4718 = vadd.f32 %v4566, %v4717
      %v4719 = vpop.f32.mrb[0].mxu0
      %v4720 = vadd.f32 %v4570, %v4719
      %v4721 = vpop.f32.mrb[0].mxu0
      %v4722 = vadd.f32 %v4566, %v4721
      %v4723 = vpop.f32.mrb[0].mxu0
      %v4724 = vadd.f32 %v4570, %v4723
      %4725 = vmatprep.mubr.bf16.mxu0 0
      %4726 = vmatmul.mubr.bf16.gmra.mrb[0].mxu0 %v3984
      %v4727 = vpop.f32.mrb[0].mxu0
      %v4728 = vadd.f32 %v4566, %v4727
      %v4729 = vpop.f32.mrb[0].mxu0
      %v4730 = vadd.f32 %v4570, %v4729
      %v4731 = vpop.f32.mrb[0].mxu0
      %v4732 = vadd.f32 %v4566, %v4731
      %v4733 = vpop.f32.mrb[0].mxu0
      %v4734 = vadd.f32 %v4570, %v4733
      %4735 = vmatprep.mubr.bf16.mxu0 0
      %4736 = vmatmul.mubr.bf16.gmra.mrb[0].mxu0 %v3985
      %v4737 = vpop.f32.mrb[0].mxu0
      %v4738 = vadd.f32 %v4566, %v4737
      %v4739 = vpop.f32.mrb[0].mxu0
      %v4740 = vadd.f32 %v4570, %v4739
      %v4741 = vpop.f32.mrb[0].mxu0
      %v4742 = vadd.f32 %v4566, %v4741
      %v4743 = vpop.f32.mrb[0].mxu0
      %v4744 = vadd.f32 %v4570, %v4743
      %4745 = vmatprep.mubr.bf16.mxu0 0
      %4746 = vmatmul.mubr.bf16.gmra.mrb[0].mxu0 %v3986
      %v4747 = vpop.f32.mrb[0].mxu0
      %v4748 = vadd.f32 %v4566, %v4747
      %v4749 = vpop.f32.mrb[0].mxu0
      %v4750 = vadd.f32 %v4570, %v4749
      %v4751 = vpop.f32.mrb[0].mxu0
      %v4752 = vadd.f32 %v4566, %v4751
      %v4753 = vpop.f32.mrb[0].mxu0
      %v4754 = vadd.f32 %v4570, %v4753
      %4755 = vmatprep.mubr.bf16.mxu0 0
      %4756 = vmatmul.mubr.bf16.gmra.mrb[0].mxu0 %v3987
      %v4757 = vpop.f32.mrb[0].mxu0
      %v4758 = vadd.f32 %v4566, %v4757
      %v4759 = vpop.f32.mrb[0].mxu0
      %v4760 = vadd.f32 %v4570, %v4759
      %v4761 = vpop.f32.mrb[0].mxu0
      %v4762 = vadd.f32 %v4566, %v4761
      %v4763 = vpop.f32.mrb[0].mxu0
      %v4764 = vadd.f32 %v4570, %v4763
      %4765 = vdwg.mxu0
      %v4766 = vmul.f32 %v4688, %v4688
      %v4767 = vmul.f32 %v4690, %v4690
      %v4768 = vmul.f32 %v4692, %v4692
      %v4769 = vmul.f32 %v4694, %v4694
      %v4770 = vmul.f32 %v4698, %v4698
      %v4771 = vmul.f32 %v4700, %v4700
      %v4772 = vmul.f32 %v4702, %v4702
      %v4773 = vmul.f32 %v4704, %v4704
      %v4774 = vmul.f32 %v4708, %v4708
      %v4775 = vmul.f32 %v4710, %v4710
      %v4776 = vmul.f32 %v4712, %v4712
      %v4777 = vmul.f32 %v4714, %v4714
      %v4778 = vmul.f32 %v4718, %v4718
      %v4779 = vmul.f32 %v4720, %v4720
      %v4780 = vmul.f32 %v4722, %v4722
      %v4781 = vmul.f32 %v4724, %v4724
      %v4782 = vmul.f32 %v4728, %v4728
      %v4783 = vmul.f32 %v4730, %v4730
      %v4784 = vmul.f32 %v4732, %v4732
      %v4785 = vmul.f32 %v4734, %v4734
      %v4786 = vmul.f32 %v4738, %v4738
      %v4787 = vmul.f32 %v4740, %v4740
      %v4788 = vmul.f32 %v4742, %v4742
      %v4789 = vmul.f32 %v4744, %v4744
      %v4790 = vmul.f32 %v4748, %v4748
      %v4791 = vmul.f32 %v4750, %v4750
      %v4792 = vmul.f32 %v4752, %v4752
      %v4793 = vmul.f32 %v4754, %v4754
      %v4794 = vmul.f32 %v4758, %v4758
      %v4795 = vmul.f32 %v4760, %v4760
      %v4796 = vmul.f32 %v4762, %v4762
      %v4797 = vmul.f32 %v4764, %v4764
      %v4798 = vmul.f32 %v4688, %v4766
      %v4799 = vmul.f32 %v4690, %v4767
      %v4800 = vmul.f32 %v4692, %v4768
      %v4801 = vmul.f32 %v4694, %v4769
      %v4802 = vmul.f32 %v4698, %v4770
      %v4803 = vmul.f32 %v4700, %v4771
      %v4804 = vmul.f32 %v4702, %v4772
      %v4805 = vmul.f32 %v4704, %v4773
      %v4806 = vmul.f32 %v4708, %v4774
      %v4807 = vmul.f32 %v4710, %v4775
      %v4808 = vmul.f32 %v4712, %v4776
      %v4809 = vmul.f32 %v4714, %v4777
      %v4810 = vmul.f32 %v4718, %v4778
      %v4811 = vmul.f32 %v4720, %v4779
      %v4812 = vmul.f32 %v4722, %v4780
      %v4813 = vmul.f32 %v4724, %v4781
      %v4814 = vmul.f32 %v4728, %v4782
      %v4815 = vmul.f32 %v4730, %v4783
      %v4816 = vmul.f32 %v4732, %v4784
      %v4817 = vmul.f32 %v4734, %v4785
      %v4818 = vmul.f32 %v4738, %v4786
      %v4819 = vmul.f32 %v4740, %v4787
      %v4820 = vmul.f32 %v4742, %v4788
      %v4821 = vmul.f32 %v4744, %v4789
      %v4822 = vmul.f32 %v4748, %v4790
      %v4823 = vmul.f32 %v4750, %v4791
      %v4824 = vmul.f32 %v4752, %v4792
      %v4825 = vmul.f32 %v4754, %v4793
      %v4826 = vmul.f32 %v4758, %v4794
      %v4827 = vmul.f32 %v4760, %v4795
      %v4828 = vmul.f32 %v4762, %v4796
      %v4829 = vmul.f32 %v4764, %v4797
      %v4830 = vmul.f32 %v4798, 0.044715
      %v4831 = vmul.f32 %v4799, 0.044715
      %v4832 = vmul.f32 %v4800, 0.044715
      %v4833 = vmul.f32 %v4801, 0.044715
      %v4834 = vmul.f32 %v4802, 0.044715
      %v4835 = vmul.f32 %v4803, 0.044715
      %v4836 = vmul.f32 %v4804, 0.044715
      %v4837 = vmul.f32 %v4805, 0.044715
      %v4838 = vmul.f32 %v4806, 0.044715
      %v4839 = vmul.f32 %v4807, 0.044715
      %v4840 = vmul.f32 %v4808, 0.044715
      %v4841 = vmul.f32 %v4809, 0.044715
      %v4842 = vmul.f32 %v4810, 0.044715
      %v4843 = vmul.f32 %v4811, 0.044715
      %v4844 = vmul.f32 %v4812, 0.044715
      %v4845 = vmul.f32 %v4813, 0.044715
      %v4846 = vmul.f32 %v4814, 0.044715
      %v4847 = vmul.f32 %v4815, 0.044715
      %v4848 = vmul.f32 %v4816, 0.044715
      %v4849 = vmul.f32 %v4817, 0.044715
      %v4850 = vmul.f32 %v4818, 0.044715
      %v4851 = vmul.f32 %v4819, 0.044715
      %v4852 = vmul.f32 %v4820, 0.044715
      %v4853 = vmul.f32 %v4821, 0.044715
      %v4854 = vmul.f32 %v4822, 0.044715
      %v4855 = vmul.f32 %v4823, 0.044715
      %v4856 = vmul.f32 %v4824, 0.044715
      %v4857 = vmul.f32 %v4825, 0.044715
      %v4858 = vmul.f32 %v4826, 0.044715
      %v4859 = vmul.f32 %v4827, 0.044715
      %v4860 = vmul.f32 %v4828, 0.044715
      %v4861 = vmul.f32 %v4829, 0.044715
      %v4862 = vadd.f32 %v4688, %v4830
      %v4863 = vadd.f32 %v4690, %v4831
      %v4864 = vadd.f32 %v4692, %v4832
      %v4865 = vadd.f32 %v4694, %v4833
      %v4866 = vadd.f32 %v4698, %v4834
      %v4867 = vadd.f32 %v4700, %v4835
      %v4868 = vadd.f32 %v4702, %v4836
      %v4869 = vadd.f32 %v4704, %v4837
      %v4870 = vadd.f32 %v4708, %v4838
      %v4871 = vadd.f32 %v4710, %v4839
      %v4872 = vadd.f32 %v4712, %v4840
      %v4873 = vadd.f32 %v4714, %v4841
      %v4874 = vadd.f32 %v4718, %v4842
      %v4875 = vadd.f32 %v4720, %v4843
      %v4876 = vadd.f32 %v4722, %v4844
      %v4877 = vadd.f32 %v4724, %v4845
      %v4878 = vadd.f32 %v4728, %v4846
      %v4879 = vadd.f32 %v4730, %v4847
      %v4880 = vadd.f32 %v4732, %v4848
      %v4881 = vadd.f32 %v4734, %v4849
      %v4882 = vadd.f32 %v4738, %v4850
      %v4883 = vadd.f32 %v4740, %v4851
      %v4884 = vadd.f32 %v4742, %v4852
      %v4885 = vadd.f32 %v4744, %v4853
      %v4886 = vadd.f32 %v4748, %v4854
      %v4887 = vadd.f32 %v4750, %v4855
      %v4888 = vadd.f32 %v4752, %v4856
      %v4889 = vadd.f32 %v4754, %v4857
      %v4890 = vadd.f32 %v4758, %v4858
      %v4891 = vadd.f32 %v4760, %v4859
      %v4892 = vadd.f32 %v4762, %v4860
      %v4893 = vadd.f32 %v4764, %v4861
      %v4894 = vmul.f32 %v4862, 0.7978846
      %v4895 = vmul.f32 %v4863, 0.7978846
      %v4896 = vmul.f32 %v4864, 0.7978846
      %v4897 = vmul.f32 %v4865, 0.7978846
      %v4898 = vmul.f32 %v4866, 0.7978846
      %v4899 = vmul.f32 %v4867, 0.7978846
      %v4900 = vmul.f32 %v4868, 0.7978846
      %v4901 = vmul.f32 %v4869, 0.7978846
      %v4902 = vmul.f32 %v4870, 0.7978846
      %v4903 = vmul.f32 %v4871, 0.7978846
      %v4904 = vmul.f32 %v4872, 0.7978846
      %v4905 = vmul.f32 %v4873, 0.7978846
      %v4906 = vmul.f32 %v4874, 0.7978846
      %v4907 = vmul.f32 %v4875, 0.7978846
      %v4908 = vmul.f32 %v4876, 0.7978846
      %v4909 = vmul.f32 %v4877, 0.7978846
      %v4910 = vmul.f32 %v4878, 0.7978846
      %v4911 = vmul.f32 %v4879, 0.7978846
      %v4912 = vmul.f32 %v4880, 0.7978846
      %v4913 = vmul.f32 %v4881, 0.7978846
      %v4914 = vmul.f32 %v4882, 0.7978846
      %v4915 = vmul.f32 %v4883, 0.7978846
      %v4916 = vmul.f32 %v4884, 0.7978846
      %v4917 = vmul.f32 %v4885, 0.7978846
      %v4918 = vmul.f32 %v4886, 0.7978846
      %v4919 = vmul.f32 %v4887, 0.7978846
      %v4920 = vmul.f32 %v4888, 0.7978846
      %v4921 = vmul.f32 %v4889, 0.7978846
      %v4922 = vmul.f32 %v4890, 0.7978846
      %v4923 = vmul.f32 %v4891, 0.7978846
      %v4924 = vmul.f32 %v4892, 0.7978846
      %v4925 = vmul.f32 %v4893, 0.7978846
      %v4926 = vtanh.pop %v4894
      %v4927 = vtanh.pop %v4895
      %v4928 = vtanh.pop %v4896
      %v4929 = vtanh.pop %v4897
      %v4930 = vtanh.pop %v4898
      %v4931 = vtanh.pop %v4899
      %v4932 = vtanh.pop %v4900
      %v4933 = vtanh.pop %v4901
      %v4934 = vtanh.pop %v4902
      %v4935 = vtanh.pop %v4903
      %v4936 = vtanh.pop %v4904
      %v4937 = vtanh.pop %v4905
      %v4938 = vtanh.pop %v4906
      %v4939 = vtanh.pop %v4907
      %v4940 = vtanh.pop %v4908
      %v4941 = vtanh.pop %v4909
      %v4942 = vtanh.pop %v4910
      %v4943 = vtanh.pop %v4911
      %v4944 = vtanh.pop %v4912
      %v4945 = vtanh.pop %v4913
      %v4946 = vtanh.pop %v4914
      %v4947 = vtanh.pop %v4915
      %v4948 = vtanh.pop %v4916
      %v4949 = vtanh.pop %v4917
      %v4950 = vtanh.pop %v4918
      %v4951 = vtanh.pop %v4919
      %v4952 = vtanh.pop %v4920
      %v4953 = vtanh.pop %v4921
      %v4954 = vtanh.pop %v4922
      %v4955 = vtanh.pop %v4923
      %v4956 = vtanh.pop %v4924
      %v4957 = vtanh.pop %v4925
      %v4958 = vadd.f32 %v4926, 1.0
      %v4959 = vadd.f32 %v4927, 1.0
      %v4960 = vadd.f32 %v4928, 1.0
      %v4961 = vadd.f32 %v4929, 1.0
      %v4962 = vadd.f32 %v4930, 1.0
      %v4963 = vadd.f32 %v4931, 1.0
      %v4964 = vadd.f32 %v4932, 1.0
      %v4965 = vadd.f32 %v4933, 1.0
      %v4966 = vadd.f32 %v4934, 1.0
      %v4967 = vadd.f32 %v4935, 1.0
      %v4968 = vadd.f32 %v4936, 1.0
      %v4969 = vadd.f32 %v4937, 1.0
      %v4970 = vadd.f32 %v4938, 1.0
      %v4971 = vadd.f32 %v4939, 1.0
      %v4972 = vadd.f32 %v4940, 1.0
      %v4973 = vadd.f32 %v4941, 1.0
      %v4974 = vadd.f32 %v4942, 1.0
      %v4975 = vadd.f32 %v4943, 1.0
      %v4976 = vadd.f32 %v4944, 1.0
      %v4977 = vadd.f32 %v4945, 1.0
      %v4978 = vadd.f32 %v4946, 1.0
      %v4979 = vadd.f32 %v4947, 1.0
      %v4980 = vadd.f32 %v4948, 1.0
      %v4981 = vadd.f32 %v4949, 1.0
      %v4982 = vadd.f32 %v4950, 1.0
      %v4983 = vadd.f32 %v4951, 1.0
      %v4984 = vadd.f32 %v4952, 1.0
      %v4985 = vadd.f32 %v4953, 1.0
      %v4986 = vadd.f32 %v4954, 1.0
      %v4987 = vadd.f32 %v4955, 1.0
      %v4988 = vadd.f32 %v4956, 1.0
      %v4989 = vadd.f32 %v4957, 1.0
      %v4990 = vmul.f32 %v4958, 0.5
      %v4991 = vmul.f32 %v4959, 0.5
      %v4992 = vmul.f32 %v4960, 0.5
      %v4993 = vmul.f32 %v4961, 0.5
      %v4994 = vmul.f32 %v4962, 0.5
      %v4995 = vmul.f32 %v4963, 0.5
      %v4996 = vmul.f32 %v4964, 0.5
      %v4997 = vmul.f32 %v4965, 0.5
      %v4998 = vmul.f32 %v4966, 0.5
      %v4999 = vmul.f32 %v4967, 0.5
      %v5000 = vmul.f32 %v4968, 0.5
      %v5001 = vmul.f32 %v4969, 0.5
      %v5002 = vmul.f32 %v4970, 0.5
      %v5003 = vmul.f32 %v4971, 0.5
      %v5004 = vmul.f32 %v4972, 0.5
      %v5005 = vmul.f32 %v4973, 0.5
      %v5006 = vmul.f32 %v4974, 0.5
      %v5007 = vmul.f32 %v4975, 0.5
      %v5008 = vmul.f32 %v4976, 0.5
      %v5009 = vmul.f32 %v4977, 0.5
      %v5010 = vmul.f32 %v4978, 0.5
      %v5011 = vmul.f32 %v4979, 0.5
      %v5012 = vmul.f32 %v4980, 0.5
      %v5013 = vmul.f32 %v4981, 0.5
      %v5014 = vmul.f32 %v4982, 0.5
      %v5015 = vmul.f32 %v4983, 0.5
      %v5016 = vmul.f32 %v4984, 0.5
      %v5017 = vmul.f32 %v4985, 0.5
      %v5018 = vmul.f32 %v4986, 0.5
      %v5019 = vmul.f32 %v4987, 0.5
      %v5020 = vmul.f32 %v4988, 0.5
      %v5021 = vmul.f32 %v4989, 0.5
      %v5022 = vmul.f32 %v4688, %v4990
      %v5023 = vmul.f32 %v4690, %v4991
      %v5024 = vmul.f32 %v4692, %v4992
      %v5025 = vmul.f32 %v4694, %v4993
      %v5026 = vmul.f32 %v4698, %v4994
      %v5027 = vmul.f32 %v4700, %v4995
      %v5028 = vmul.f32 %v4702, %v4996
      %v5029 = vmul.f32 %v4704, %v4997
      %v5030 = vmul.f32 %v4708, %v4998
      %v5031 = vmul.f32 %v4710, %v4999
      %v5032 = vmul.f32 %v4712, %v5000
      %v5033 = vmul.f32 %v4714, %v5001
      %v5034 = vmul.f32 %v4718, %v5002
      %v5035 = vmul.f32 %v4720, %v5003
      %v5036 = vmul.f32 %v4722, %v5004
      %v5037 = vmul.f32 %v4724, %v5005
      %v5038 = vmul.f32 %v4728, %v5006
      %v5039 = vmul.f32 %v4730, %v5007
      %v5040 = vmul.f32 %v4732, %v5008
      %v5041 = vmul.f32 %v4734, %v5009
      %v5042 = vmul.f32 %v4738, %v5010
      %v5043 = vmul.f32 %v4740, %v5011
      %v5044 = vmul.f32 %v4742, %v5012
      %v5045 = vmul.f32 %v4744, %v5013
      %v5046 = vmul.f32 %v4748, %v5014
      %v5047 = vmul.f32 %v4750, %v5015
      %v5048 = vmul.f32 %v4752, %v5016
      %v5049 = vmul.f32 %v4754, %v5017
      %v5050 = vmul.f32 %v4758, %v5018
      %v5051 = vmul.f32 %v4760, %v5019
      %v5052 = vmul.f32 %v4762, %v5020
      %v5053 = vmul.f32 %v4764, %v5021
      %v5054 = vpack.c.bf16 %v5024, %v5022
      %v5055 = vpack.c.bf16 %v5025, %v5023
      %v5056 = vpack.c.bf16 %v5028, %v5026
      %v5057 = vpack.c.bf16 %v5029, %v5027
      %v5058 = vpack.c.bf16 %v5032, %v5030
      %v5059 = vpack.c.bf16 %v5033, %v5031
      %v5060 = vpack.c.bf16 %v5036, %v5034
      %v5061 = vpack.c.bf16 %v5037, %v5035
      %v5062 = vpack.c.bf16 %v5040, %v5038
      %v5063 = vpack.c.bf16 %v5041, %v5039
      %v5064 = vpack.c.bf16 %v5044, %v5042
      %v5065 = vpack.c.bf16 %v5045, %v5043
      %v5066 = vpack.c.bf16 %v5048, %v5046
      %v5067 = vpack.c.bf16 %v5049, %v5047
      %v5068 = vpack.c.bf16 %v5052, %v5050
      %v5069 = vpack.c.bf16 %v5053, %v5051
      %v5070 = vld [vmem:[%s839 + $0x80] sm:$0xf]
      %v5071 = vld [vmem:[%s839 + $0x84] sm:$0xf]
      %v5072 = vld [vmem:[%s839 + $0x88] sm:$0xf]
      %v5073 = vld [vmem:[%s839 + $0x8c] sm:$0xf]
      %v5074 = vld [vmem:[%s839 + $0x90] sm:$0xf]
      %v5075 = vld [vmem:[%s839 + $0x94] sm:$0xf]
      %v5076 = vld [vmem:[%s839 + $0x98] sm:$0xf]
      %v5077 = vld [vmem:[%s839 + $0x9c] sm:$0xf]
      %v5078 = vld [vmem:[%s839 + $0xa0] sm:$0xf]
      %v5079 = vld [vmem:[%s839 + $0xa4] sm:$0xf]
      %v5080 = vld [vmem:[%s839 + $0xa8] sm:$0xf]
      %v5081 = vld [vmem:[%s839 + $0xac] sm:$0xf]
      %v5082 = vld [vmem:[%s839 + $0xb0] sm:$0xf]
      %v5083 = vld [vmem:[%s839 + $0xb4] sm:$0xf]
      %v5084 = vld [vmem:[%s839 + $0xb8] sm:$0xf]
      %v5085 = vld [vmem:[%s839 + $0xbc] sm:$0xf]
      %v5086 = vld [vmem:[%s839 + $0xc0] sm:$0xf]
      %v5087 = vld [vmem:[%s839 + $0xc4] sm:$0xf]
      %v5088 = vld [vmem:[%s839 + $0xc8] sm:$0xf]
      %v5089 = vld [vmem:[%s839 + $0xcc] sm:$0xf]
      %v5090 = vld [vmem:[%s839 + $0xd0] sm:$0xf]
      %v5091 = vld [vmem:[%s839 + $0xd4] sm:$0xf]
      %v5092 = vld [vmem:[%s839 + $0xd8] sm:$0xf]
      %v5093 = vld [vmem:[%s839 + $0xdc] sm:$0xf]
      %v5094 = vld [vmem:[%s839 + $0xe0] sm:$0xf]
      %v5095 = vld [vmem:[%s839 + $0xe4] sm:$0xf]
      %v5096 = vld [vmem:[%s839 + $0xe8] sm:$0xf]
      %v5097 = vld [vmem:[%s839 + $0xec] sm:$0xf]
      %v5098 = vld [vmem:[%s839 + $0xf0] sm:$0xf]
      %v5099 = vld [vmem:[%s839 + $0xf4] sm:$0xf]
      %v5100 = vld [vmem:[%s839 + $0xf8] sm:$0xf]
      %v5101 = vld [vmem:[%s839 + $0xfc] sm:$0xf]
      %v5134 = vunpack.c.l.b16 %v5070
      %v5135 = vunpack.c.l.b16 %v5071
      %v5136 = vunpack.c.l.b16 %v5072
      %v5137 = vunpack.c.l.b16 %v5073
      %v5138 = vunpack.c.l.b16 %v5074
      %v5139 = vunpack.c.l.b16 %v5075
      %v5140 = vunpack.c.l.b16 %v5076
      %v5141 = vunpack.c.l.b16 %v5077
      %v5142 = vunpack.c.l.b16 %v5078
      %v5143 = vunpack.c.l.b16 %v5079
      %v5144 = vunpack.c.l.b16 %v5080
      %v5145 = vunpack.c.l.b16 %v5081
      %v5146 = vunpack.c.l.b16 %v5082
      %v5147 = vunpack.c.l.b16 %v5083
      %v5148 = vunpack.c.l.b16 %v5084
      %v5149 = vunpack.c.l.b16 %v5085
      %v5150 = vunpack.c.l.b16 %v5086
      %v5151 = vunpack.c.l.b16 %v5087
      %v5152 = vunpack.c.l.b16 %v5088
      %v5153 = vunpack.c.l.b16 %v5089
      %v5154 = vunpack.c.l.b16 %v5090
      %v5155 = vunpack.c.l.b16 %v5091
      %v5156 = vunpack.c.l.b16 %v5092
      %v5157 = vunpack.c.l.b16 %v5093
      %v5158 = vunpack.c.l.b16 %v5094
      %v5159 = vunpack.c.l.b16 %v5095
      %v5160 = vunpack.c.l.b16 %v5096
      %v5161 = vunpack.c.l.b16 %v5097
      %v5162 = vunpack.c.l.b16 %v5098
      %v5163 = vunpack.c.l.b16 %v5099
      %v5164 = vunpack.c.l.b16 %v5100
      %v5165 = vunpack.c.l.b16 %v5101
      %v5166 = vpack.c.b16 %v5135, %v5134
      %v5167 = vpack.c.b16 %v5137, %v5136
      %v5168 = vpack.c.b16 %v5139, %v5138
      %v5169 = vpack.c.b16 %v5141, %v5140
      %v5170 = vpack.c.b16 %v5143, %v5142
      %v5171 = vpack.c.b16 %v5145, %v5144
      %v5172 = vpack.c.b16 %v5147, %v5146
      %v5173 = vpack.c.b16 %v5149, %v5148
      %v5174 = vpack.c.b16 %v5151, %v5150
      %v5175 = vpack.c.b16 %v5153, %v5152
      %v5176 = vpack.c.b16 %v5155, %v5154
      %v5177 = vpack.c.b16 %v5157, %v5156
      %v5178 = vpack.c.b16 %v5159, %v5158
      %v5179 = vpack.c.b16 %v5161, %v5160
      %v5180 = vpack.c.b16 %v5163, %v5162
      %v5181 = vpack.c.b16 %v5165, %v5164
      %5198 = vmatprep.subr.bf16.mxu0 0
      %5199 = vmatpush1.bf16.msra.mxu0 %v5166
      %5200 = vmatprep.subr.bf16.mxu0 0
      %5201 = vmatpush1.bf16.msra.mxu0 %v5167
      %5202 = vmatprep.subr.bf16.mxu0 0
      %5203 = vmatpush1.bf16.msra.mxu0 %v5168
      %5204 = vmatprep.subr.bf16.mxu0 0
      %5205 = vmatpush1.bf16.msra.mxu0 %v5169
      %5206 = vmatprep.subr.bf16.mxu0 0
      %5207 = vmatpush1.bf16.msra.mxu0 %v5170
      %5208 = vmatprep.subr.bf16.mxu0 0
      %5209 = vmatpush1.bf16.msra.mxu0 %v5171
      %5210 = vmatprep.subr.bf16.mxu0 0
      %5211 = vmatpush1.bf16.msra.mxu0 %v5172
      %5212 = vmatprep.subr.bf16.mxu0 0
      %5213 = vmatpush1.bf16.msra.mxu0 %v5173
      %5214 = vmatprep.subr.bf16.mxu0 0
      %5215 = vmatpush1.bf16.msra.mxu0 %v5174
      %5216 = vmatprep.subr.bf16.mxu0 0
      %5217 = vmatpush1.bf16.msra.mxu0 %v5175
      %5218 = vmatprep.subr.bf16.mxu0 0
      %5219 = vmatpush1.bf16.msra.mxu0 %v5176
      %5220 = vmatprep.subr.bf16.mxu0 0
      %5221 = vmatpush1.bf16.msra.mxu0 %v5177
      %5222 = vmatprep.subr.bf16.mxu0 0
      %5223 = vmatpush1.bf16.msra.mxu0 %v5178
      %5224 = vmatprep.subr.bf16.mxu0 0
      %5225 = vmatpush1.bf16.msra.mxu0 %v5179
      %5226 = vmatprep.subr.bf16.mxu0 0
      %5227 = vmatpush1.bf16.msra.mxu0 %v5180
      %5228 = vmatprep.subr.bf16.mxu0 0
      %5229 = vmatpush1.bf16.msra.mxu0 %v5181
      %5230 = vmatprep.mubr.bf16.mxu0 %v5055
      %5231 = vmatmul.mubr.bf16.gmra.mrb[0].mxu0 %v5054
      %v5232 = vpop.f32.mrb[0].mxu0
      %v5233 = vadd.f32 0.0, %v5232
      %v5234 = vpop.f32.mrb[0].mxu0
      %v5235 = vpop.f32.mrb[0].mxu0
      %v5236 = vadd.f32 0.0, %v5235
      %v5237 = vpop.f32.mrb[0].mxu0
      %5238 = vmatprep.mubr.bf16.mxu0 %v5057
      %5239 = vmatmul.mubr.bf16.gmra.mrb[0].mxu0 %v5056
      %v5240 = vpop.f32.mrb[0].mxu0
      %v5241 = vadd.f32 0.0, %v5240
      %v5242 = vpop.f32.mrb[0].mxu0
      %v5243 = vpop.f32.mrb[0].mxu0
      %v5244 = vadd.f32 0.0, %v5243
      %v5245 = vpop.f32.mrb[0].mxu0
      %5246 = vmatprep.mubr.bf16.mxu0 %v5059
      %5247 = vmatmul.mubr.bf16.gmra.mrb[0].mxu0 %v5058
      %v5248 = vpop.f32.mrb[0].mxu0
      %v5249 = vadd.f32 0.0, %v5248
      %v5250 = vpop.f32.mrb[0].mxu0
      %v5251 = vpop.f32.mrb[0].mxu0
      %v5252 = vadd.f32 0.0, %v5251
      %v5253 = vpop.f32.mrb[0].mxu0
      %5254 = vmatprep.mubr.bf16.mxu0 %v5061
      %5255 = vmatmul.mubr.bf16.gmra.mrb[0].mxu0 %v5060
      %v5256 = vpop.f32.mrb[0].mxu0
      %v5257 = vadd.f32 0.0, %v5256
      %v5258 = vpop.f32.mrb[0].mxu0
      %v5259 = vpop.f32.mrb[0].mxu0
      %v5260 = vadd.f32 0.0, %v5259
      %v5261 = vpop.f32.mrb[0].mxu0
      %5262 = vmatprep.mubr.bf16.mxu0 %v5063
      %5263 = vmatmul.mubr.bf16.gmra.mrb[0].mxu0 %v5062
      %v5264 = vpop.f32.mrb[0].mxu0
      %v5265 = vadd.f32 0.0, %v5264
      %v5266 = vpop.f32.mrb[0].mxu0
      %v5267 = vpop.f32.mrb[0].mxu0
      %v5268 = vadd.f32 0.0, %v5267
      %v5269 = vpop.f32.mrb[0].mxu0
      %5270 = vmatprep.mubr.bf16.mxu0 %v5065
      %5271 = vmatmul.mubr.bf16.gmra.mrb[0].mxu0 %v5064
      %v5272 = vpop.f32.mrb[0].mxu0
      %v5273 = vadd.f32 0.0, %v5272
      %v5274 = vpop.f32.mrb[0].mxu0
      %v5275 = vpop.f32.mrb[0].mxu0
      %v5276 = vadd.f32 0.0, %v5275
      %v5277 = vpop.f32.mrb[0].mxu0
      %5278 = vmatprep.mubr.bf16.mxu0 %v5067
      %5279 = vmatmul.mubr.bf16.gmra.mrb[0].mxu0 %v5066
      %v5280 = vpop.f32.mrb[0].mxu0
      %v5281 = vadd.f32 0.0, %v5280
      %v5282 = vpop.f32.mrb[0].mxu0
      %v5283 = vpop.f32.mrb[0].mxu0
      %v5284 = vadd.f32 0.0, %v5283
      %v5285 = vpop.f32.mrb[0].mxu0
      %5286 = vmatprep.mubr.bf16.mxu0 %v5069
      %5287 = vmatmul.mubr.bf16.gmra.mrb[0].mxu0 %v5068
      %v5288 = vpop.f32.mrb[0].mxu0
      %v5289 = vadd.f32 0.0, %v5288
      %v5290 = vpop.f32.mrb[0].mxu0
      %v5291 = vpop.f32.mrb[0].mxu0
      %v5292 = vadd.f32 0.0, %v5291
      %v5293 = vpop.f32.mrb[0].mxu0
      %5294 = vdwg.mxu0
      %v5327 = vunpack.c.l.b16 %v4513
      %v5328 = vunpack.c.l.b16 %v4514
      %v5329 = vunpack.c.l.b16 %v4515
      %v5330 = vunpack.c.l.b16 %v4516
      %v5331 = vunpack.c.l.b16 %v4517
      %v5332 = vunpack.c.l.b16 %v4518
      %v5333 = vunpack.c.l.b16 %v4519
      %v5334 = vunpack.c.l.b16 %v4520
      %v5335 = vunpack.c.l.b16 %v4521
      %v5336 = vunpack.c.l.b16 %v4522
      %v5337 = vunpack.c.l.b16 %v4523
      %v5338 = vunpack.c.l.b16 %v4524
      %v5339 = vunpack.c.l.b16 %v4525
      %v5340 = vunpack.c.l.b16 %v4526
      %v5341 = vunpack.c.l.b16 %v4527
      %v5342 = vunpack.c.l.b16 %v4528
      %v5343 = vunpack.c.l.b16 %v4529
      %v5344 = vunpack.c.l.b16 %v4530
      %v5345 = vunpack.c.l.b16 %v4531
      %v5346 = vunpack.c.l.b16 %v4532
      %v5347 = vunpack.c.l.b16 %v4533
      %v5348 = vunpack.c.l.b16 %v4534
      %v5349 = vunpack.c.l.b16 %v4535
      %v5350 = vunpack.c.l.b16 %v4536
      %v5351 = vunpack.c.l.b16 %v4537
      %v5352 = vunpack.c.l.b16 %v4538
      %v5353 = vunpack.c.l.b16 %v4539
      %v5354 = vunpack.c.l.b16 %v4540
      %v5355 = vunpack.c.l.b16 %v4541
      %v5356 = vunpack.c.l.b16 %v4542
      %v5357 = vunpack.c.l.b16 %v4543
      %v5358 = vunpack.c.l.b16 %v4544
      %v5359 = vpack.c.b16 %v5328, %v5327
      %v5360 = vpack.c.b16 %v5330, %v5329
      %v5361 = vpack.c.b16 %v5332, %v5331
      %v5362 = vpack.c.b16 %v5334, %v5333
      %v5363 = vpack.c.b16 %v5336, %v5335
      %v5364 = vpack.c.b16 %v5338, %v5337
      %v5365 = vpack.c.b16 %v5340, %v5339
      %v5366 = vpack.c.b16 %v5342, %v5341
      %v5367 = vpack.c.b16 %v5344, %v5343
      %v5368 = vpack.c.b16 %v5346, %v5345
      %v5369 = vpack.c.b16 %v5348, %v5347
      %v5370 = vpack.c.b16 %v5350, %v5349
      %v5371 = vpack.c.b16 %v5352, %v5351
      %v5372 = vpack.c.b16 %v5354, %v5353
      %v5373 = vpack.c.b16 %v5356, %v5355
      %v5374 = vpack.c.b16 %v5358, %v5357
      %5391 = vmatprep.subr.bf16.mxu0 0
      %5392 = vmatpush1.bf16.msra.mxu0 %v5359
      %5393 = vmatprep.subr.bf16.mxu0 0
      %5394 = vmatpush1.bf16.msra.mxu0 %v5360
      %5395 = vmatprep.subr.bf16.mxu0 0
      %5396 = vmatpush1.bf16.msra.mxu0 %v5361
      %5397 = vmatprep.subr.bf16.mxu0 0
      %5398 = vmatpush1.bf16.msra.mxu0 %v5362
      %5399 = vmatprep.subr.bf16.mxu0 0
      %5400 = vmatpush1.bf16.msra.mxu0 %v5363
      %5401 = vmatprep.subr.bf16.mxu0 0
      %5402 = vmatpush1.bf16.msra.mxu0 %v5364
      %5403 = vmatprep.subr.bf16.mxu0 0
      %5404 = vmatpush1.bf16.msra.mxu0 %v5365
      %5405 = vmatprep.subr.bf16.mxu0 0
      %5406 = vmatpush1.bf16.msra.mxu0 %v5366
      %5407 = vmatprep.subr.bf16.mxu0 0
      %5408 = vmatpush1.bf16.msra.mxu0 %v5367
      %5409 = vmatprep.subr.bf16.mxu0 0
      %5410 = vmatpush1.bf16.msra.mxu0 %v5368
      %5411 = vmatprep.subr.bf16.mxu0 0
      %5412 = vmatpush1.bf16.msra.mxu0 %v5369
      %5413 = vmatprep.subr.bf16.mxu0 0
      %5414 = vmatpush1.bf16.msra.mxu0 %v5370
      %5415 = vmatprep.subr.bf16.mxu0 0
      %5416 = vmatpush1.bf16.msra.mxu0 %v5371
      %5417 = vmatprep.subr.bf16.mxu0 0
      %5418 = vmatpush1.bf16.msra.mxu0 %v5372
      %5419 = vmatprep.subr.bf16.mxu0 0
      %5420 = vmatpush1.bf16.msra.mxu0 %v5373
      %5421 = vmatprep.subr.bf16.mxu0 0
      %5422 = vmatpush1.bf16.msra.mxu0 %v5374
      %5423 = vmatprep.mubr.bf16.mxu0 %v4498
      %5424 = vmatmul.mubr.bf16.gmra.mrb[0].mxu0 %v4497
      %v5425 = vpop.f32.mrb[0].mxu0
      %v5426 = vadd.f32 %v5233, %v5425
      %v5427 = vpop.f32.mrb[0].mxu0
      %v5428 = vpop.f32.mrb[0].mxu0
      %v5429 = vadd.f32 %v5236, %v5428
      %v5430 = vpop.f32.mrb[0].mxu0
      %5431 = vmatprep.mubr.bf16.mxu0 %v4500
      %5432 = vmatmul.mubr.bf16.gmra.mrb[0].mxu0 %v4499
      %v5433 = vpop.f32.mrb[0].mxu0
      %v5434 = vadd.f32 %v5241, %v5433
      %v5435 = vpop.f32.mrb[0].mxu0
      %v5436 = vpop.f32.mrb[0].mxu0
      %v5437 = vadd.f32 %v5244, %v5436
      %v5438 = vpop.f32.mrb[0].mxu0
      %5439 = vmatprep.mubr.bf16.mxu0 %v4502
      %5440 = vmatmul.mubr.bf16.gmra.mrb[0].mxu0 %v4501
      %v5441 = vpop.f32.mrb[0].mxu0
      %v5442 = vadd.f32 %v5249, %v5441
      %v5443 = vpop.f32.mrb[0].mxu0
      %v5444 = vpop.f32.mrb[0].mxu0
      %v5445 = vadd.f32 %v5252, %v5444
      %v5446 = vpop.f32.mrb[0].mxu0
      %5447 = vmatprep.mubr.bf16.mxu0 %v4504
      %5448 = vmatmul.mubr.bf16.gmra.mrb[0].mxu0 %v4503
      %v5449 = vpop.f32.mrb[0].mxu0
      %v5450 = vadd.f32 %v5257, %v5449
      %v5451 = vpop.f32.mrb[0].mxu0
      %v5452 = vpop.f32.mrb[0].mxu0
      %v5453 = vadd.f32 %v5260, %v5452
      %v5454 = vpop.f32.mrb[0].mxu0
      %5455 = vmatprep.mubr.bf16.mxu0 %v4506
      %5456 = vmatmul.mubr.bf16.gmra.mrb[0].mxu0 %v4505
      %v5457 = vpop.f32.mrb[0].mxu0
      %v5458 = vadd.f32 %v5265, %v5457
      %v5459 = vpop.f32.mrb[0].mxu0
      %v5460 = vpop.f32.mrb[0].mxu0
      %v5461 = vadd.f32 %v5268, %v5460
      %v5462 = vpop.f32.mrb[0].mxu0
      %5463 = vmatprep.mubr.bf16.mxu0 %v4508
      %5464 = vmatmul.mubr.bf16.gmra.mrb[0].mxu0 %v4507
      %v5465 = vpop.f32.mrb[0].mxu0
      %v5466 = vadd.f32 %v5273, %v5465
      %v5467 = vpop.f32.mrb[0].mxu0
      %v5468 = vpop.f32.mrb[0].mxu0
      %v5469 = vadd.f32 %v5276, %v5468
      %v5470 = vpop.f32.mrb[0].mxu0
      %5471 = vmatprep.mubr.bf16.mxu0 %v4510
      %5472 = vmatmul.mubr.bf16.gmra.mrb[0].mxu0 %v4509
      %v5473 = vpop.f32.mrb[0].mxu0
      %v5474 = vadd.f32 %v5281, %v5473
      %v5475 = vpop.f32.mrb[0].mxu0
      %v5476 = vpop.f32.mrb[0].mxu0
      %v5477 = vadd.f32 %v5284, %v5476
      %v5478 = vpop.f32.mrb[0].mxu0
      %5479 = vmatprep.mubr.bf16.mxu0 %v4512
      %5480 = vmatmul.mubr.bf16.gmra.mrb[0].mxu0 %v4511
      %v5481 = vpop.f32.mrb[0].mxu0
      %v5482 = vadd.f32 %v5289, %v5481
      %v5483 = vpop.f32.mrb[0].mxu0
      %v5484 = vpop.f32.mrb[0].mxu0
      %v5485 = vadd.f32 %v5292, %v5484
      %v5486 = vpop.f32.mrb[0].mxu0
      %5487 = vdwg.mxu0
      %v5488 = vld [vmem:[%s842] sm:$0x1]
      %v5490 = vlaneseq
      %v5491 = vshrl.u32 %v5490, 7
      %v5492 = vsub.s32 0, %v5491
      %v5493 = vrot.slane %v5488, %v5492
      %v5495 = vadd.f32 %v5426, %v5493
      %v5496 = vadd.f32 %v5429, %v5493
      %v5497 = vadd.f32 %v5434, %v5493
      %v5498 = vadd.f32 %v5437, %v5493
      %v5499 = vadd.f32 %v5442, %v5493
      %v5500 = vadd.f32 %v5445, %v5493
      %v5501 = vadd.f32 %v5450, %v5493
      %v5502 = vadd.f32 %v5453, %v5493
      %v5503 = vadd.f32 %v5458, %v5493
      %v5504 = vadd.f32 %v5461, %v5493
      %v5505 = vadd.f32 %v5466, %v5493
      %v5506 = vadd.f32 %v5469, %v5493
      %v5507 = vadd.f32 %v5474, %v5493
      %v5508 = vadd.f32 %v5477, %v5493
      %v5509 = vadd.f32 %v5482, %v5493
      %v5510 = vadd.f32 %v5485, %v5493
      %v5511 = vadd.f32 %v3964, %v5495
      %v5512 = vadd.f32 %v3965, %v5496
      %v5513 = vadd.f32 %v3966, %v5497
      %v5514 = vadd.f32 %v3967, %v5498
      %v5515 = vadd.f32 %v3968, %v5499
      %v5516 = vadd.f32 %v3969, %v5500
      %v5517 = vadd.f32 %v3970, %v5501
      %v5518 = vadd.f32 %v3971, %v5502
      %v5519 = vadd.f32 %v3972, %v5503
      %v5520 = vadd.f32 %v3973, %v5504
      %v5521 = vadd.f32 %v3974, %v5505
      %v5522 = vadd.f32 %v3975, %v5506
      %v5523 = vadd.f32 %v3976, %v5507
      %v5524 = vadd.f32 %v3977, %v5508
      %v5525 = vadd.f32 %v3978, %v5509
      %v5526 = vadd.f32 %v3979, %v5510
      %v5527 = vld [vmem:[%s845] sm:$0x1]
      %v5528 = vld [vmem:[%s848] sm:$0x1]
      %5529 = vadd.xlane.f32.xlu0 %v5511
      %v5530 = vpop.xlane.xlu0 %5529
      %5531 = vadd.xlane.f32.xlu0 %v5512
      %v5532 = vpop.xlane.xlu0 %5531
      %5533 = vadd.xlane.f32.xlu0 %v5513
      %v5534 = vpop.xlane.xlu0 %5533
      %5535 = vadd.xlane.f32.xlu0 %v5514
      %v5536 = vpop.xlane.xlu0 %5535
      %5537 = vadd.xlane.f32.xlu0 %v5515
      %v5538 = vpop.xlane.xlu0 %5537
      %5539 = vadd.xlane.f32.xlu0 %v5516
      %v5540 = vpop.xlane.xlu0 %5539
      %5541 = vadd.xlane.f32.xlu0 %v5517
      %v5542 = vpop.xlane.xlu0 %5541
      %5543 = vadd.xlane.f32.xlu0 %v5518
      %v5544 = vpop.xlane.xlu0 %5543
      %5545 = vadd.xlane.f32.xlu0 %v5519
      %v5546 = vpop.xlane.xlu0 %5545
      %5547 = vadd.xlane.f32.xlu0 %v5520
      %v5548 = vpop.xlane.xlu0 %5547
      %5549 = vadd.xlane.f32.xlu0 %v5521
      %v5550 = vpop.xlane.xlu0 %5549
      %5551 = vadd.xlane.f32.xlu0 %v5522
      %v5552 = vpop.xlane.xlu0 %5551
      %5553 = vadd.xlane.f32.xlu0 %v5523
      %v5554 = vpop.xlane.xlu0 %5553
      %5555 = vadd.xlane.f32.xlu0 %v5524
      %v5556 = vpop.xlane.xlu0 %5555
      %5557 = vadd.xlane.f32.xlu0 %v5525
      %v5558 = vpop.xlane.xlu0 %5557
      %5559 = vadd.xlane.f32.xlu0 %v5526
      %v5560 = vpop.xlane.xlu0 %5559
      %v5561 = vmul.f32 %v5530, %v3791
      %v5562 = vmul.f32 %v5532, %v3791
      %v5563 = vmul.f32 %v5534, %v3791
      %v5564 = vmul.f32 %v5536, %v3791
      %v5565 = vmul.f32 %v5538, %v3791
      %v5566 = vmul.f32 %v5540, %v3791
      %v5567 = vmul.f32 %v5542, %v3791
      %v5568 = vmul.f32 %v5544, %v3791
      %v5569 = vmul.f32 %v5546, %v3791
      %v5570 = vmul.f32 %v5548, %v3791
      %v5571 = vmul.f32 %v5550, %v3791
      %v5572 = vmul.f32 %v5552, %v3791
      %v5573 = vmul.f32 %v5554, %v3791
      %v5574 = vmul.f32 %v5556, %v3791
      %v5575 = vmul.f32 %v5558, %v3791
      %v5576 = vmul.f32 %v5560, %v3791
      %v5577 = vsub.f32 %v5511, %v5561
      %v5578 = vsub.f32 %v5512, %v5562
      %v5579 = vsub.f32 %v5513, %v5563
      %v5580 = vsub.f32 %v5514, %v5564
      %v5581 = vsub.f32 %v5515, %v5565
      %v5582 = vsub.f32 %v5516, %v5566
      %v5583 = vsub.f32 %v5517, %v5567
      %v5584 = vsub.f32 %v5518, %v5568
      %v5585 = vsub.f32 %v5519, %v5569
      %v5586 = vsub.f32 %v5520, %v5570
      %v5587 = vsub.f32 %v5521, %v5571
      %v5588 = vsub.f32 %v5522, %v5572
      %v5589 = vsub.f32 %v5523, %v5573
      %v5590 = vsub.f32 %v5524, %v5574
      %v5591 = vsub.f32 %v5525, %v5575
      %v5592 = vsub.f32 %v5526, %v5576
      %v5593 = vmul.f32 %v5577, %v5577
      %v5594 = vmul.f32 %v5578, %v5578
      %v5595 = vmul.f32 %v5579, %v5579
      %v5596 = vmul.f32 %v5580, %v5580
      %v5597 = vmul.f32 %v5581, %v5581
      %v5598 = vmul.f32 %v5582, %v5582
      %v5599 = vmul.f32 %v5583, %v5583
      %v5600 = vmul.f32 %v5584, %v5584
      %v5601 = vmul.f32 %v5585, %v5585
      %v5602 = vmul.f32 %v5586, %v5586
      %v5603 = vmul.f32 %v5587, %v5587
      %v5604 = vmul.f32 %v5588, %v5588
      %v5605 = vmul.f32 %v5589, %v5589
      %v5606 = vmul.f32 %v5590, %v5590
      %v5607 = vmul.f32 %v5591, %v5591
      %v5608 = vmul.f32 %v5592, %v5592
      %5609 = vadd.xlane.f32.xlu0 %v5593
      %v5610 = vpop.xlane.xlu0 %5609
      %5611 = vadd.xlane.f32.xlu0 %v5594
      %v5612 = vpop.xlane.xlu0 %5611
      %5613 = vadd.xlane.f32.xlu0 %v5595
      %v5614 = vpop.xlane.xlu0 %5613
      %5615 = vadd.xlane.f32.xlu0 %v5596
      %v5616 = vpop.xlane.xlu0 %5615
      %5617 = vadd.xlane.f32.xlu0 %v5597
      %v5618 = vpop.xlane.xlu0 %5617
      %5619 = vadd.xlane.f32.xlu0 %v5598
      %v5620 = vpop.xlane.xlu0 %5619
      %5621 = vadd.xlane.f32.xlu0 %v5599
      %v5622 = vpop.xlane.xlu0 %5621
      %5623 = vadd.xlane.f32.xlu0 %v5600
      %v5624 = vpop.xlane.xlu0 %5623
      %5625 = vadd.xlane.f32.xlu0 %v5601
      %v5626 = vpop.xlane.xlu0 %5625
      %5627 = vadd.xlane.f32.xlu0 %v5602
      %v5628 = vpop.xlane.xlu0 %5627
      %5629 = vadd.xlane.f32.xlu0 %v5603
      %v5630 = vpop.xlane.xlu0 %5629
      %5631 = vadd.xlane.f32.xlu0 %v5604
      %v5632 = vpop.xlane.xlu0 %5631
      %5633 = vadd.xlane.f32.xlu0 %v5605
      %v5634 = vpop.xlane.xlu0 %5633
      %5635 = vadd.xlane.f32.xlu0 %v5606
      %v5636 = vpop.xlane.xlu0 %5635
      %5637 = vadd.xlane.f32.xlu0 %v5607
      %v5638 = vpop.xlane.xlu0 %5637
      %5639 = vadd.xlane.f32.xlu0 %v5608
      %v5640 = vpop.xlane.xlu0 %5639
      %v5641 = vmul.f32 %v5610, %v3791
      %v5642 = vmul.f32 %v5612, %v3791
      %v5643 = vmul.f32 %v5614, %v3791
      %v5644 = vmul.f32 %v5616, %v3791
      %v5645 = vmul.f32 %v5618, %v3791
      %v5646 = vmul.f32 %v5620, %v3791
      %v5647 = vmul.f32 %v5622, %v3791
      %v5648 = vmul.f32 %v5624, %v3791
      %v5649 = vmul.f32 %v5626, %v3791
      %v5650 = vmul.f32 %v5628, %v3791
      %v5651 = vmul.f32 %v5630, %v3791
      %v5652 = vmul.f32 %v5632, %v3791
      %v5653 = vmul.f32 %v5634, %v3791
      %v5654 = vmul.f32 %v5636, %v3791
      %v5655 = vmul.f32 %v5638, %v3791
      %v5656 = vmul.f32 %v5640, %v3791
      %v5657 = vadd.f32 %v5641, 1e-12
      %v5658 = vadd.f32 %v5642, 1e-12
      %v5659 = vadd.f32 %v5643, 1e-12
      %v5660 = vadd.f32 %v5644, 1e-12
      %v5661 = vadd.f32 %v5645, 1e-12
      %v5662 = vadd.f32 %v5646, 1e-12
      %v5663 = vadd.f32 %v5647, 1e-12
      %v5664 = vadd.f32 %v5648, 1e-12
      %v5665 = vadd.f32 %v5649, 1e-12
      %v5666 = vadd.f32 %v5650, 1e-12
      %v5667 = vadd.f32 %v5651, 1e-12
      %v5668 = vadd.f32 %v5652, 1e-12
      %v5669 = vadd.f32 %v5653, 1e-12
      %v5670 = vadd.f32 %v5654, 1e-12
      %v5671 = vadd.f32 %v5655, 1e-12
      %v5672 = vadd.f32 %v5656, 1e-12
      %v5673 = vrsqrt.pop %v5657
      %v5674 = vrsqrt.pop %v5658
      %v5675 = vrsqrt.pop %v5659
      %v5676 = vrsqrt.pop %v5660
      %v5677 = vrsqrt.pop %v5661
      %v5678 = vrsqrt.pop %v5662
      %v5679 = vrsqrt.pop %v5663
      %v5680 = vrsqrt.pop %v5664
      %v5681 = vrsqrt.pop %v5665
      %v5682 = vrsqrt.pop %v5666
      %v5683 = vrsqrt.pop %v5667
      %v5684 = vrsqrt.pop %v5668
      %v5685 = vrsqrt.pop %v5669
      %v5686 = vrsqrt.pop %v5670
      %v5687 = vrsqrt.pop %v5671
      %v5688 = vrsqrt.pop %v5672
      %v5689 = vmul.f32 %v5577, %v5673
      %v5690 = vmul.f32 %v5578, %v5674
      %v5691 = vmul.f32 %v5579, %v5675
      %v5692 = vmul.f32 %v5580, %v5676
      %v5693 = vmul.f32 %v5581, %v5677
      %v5694 = vmul.f32 %v5582, %v5678
      %v5695 = vmul.f32 %v5583, %v5679
      %v5696 = vmul.f32 %v5584, %v5680
      %v5697 = vmul.f32 %v5585, %v5681
      %v5698 = vmul.f32 %v5586, %v5682
      %v5699 = vmul.f32 %v5587, %v5683
      %v5700 = vmul.f32 %v5588, %v5684
      %v5701 = vmul.f32 %v5589, %v5685
      %v5702 = vmul.f32 %v5590, %v5686
      %v5703 = vmul.f32 %v5591, %v5687
      %v5704 = vmul.f32 %v5592, %v5688
      %v5706 = vlaneseq
      %v5707 = vshrl.u32 %v5706, 7
      %v5708 = vsub.s32 0, %v5707
      %v5709 = vrot.slane %v5527, %v5708
      %v5711 = vmul.f32 %v5689, %v5709
      %v5712 = vmul.f32 %v5690, %v5709
      %v5713 = vmul.f32 %v5691, %v5709
      %v5714 = vmul.f32 %v5692, %v5709
      %v5715 = vmul.f32 %v5693, %v5709
      %v5716 = vmul.f32 %v5694, %v5709
      %v5717 = vmul.f32 %v5695, %v5709
      %v5718 = vmul.f32 %v5696, %v5709
      %v5719 = vmul.f32 %v5697, %v5709
      %v5720 = vmul.f32 %v5698, %v5709
      %v5721 = vmul.f32 %v5699, %v5709
      %v5722 = vmul.f32 %v5700, %v5709
      %v5723 = vmul.f32 %v5701, %v5709
      %v5724 = vmul.f32 %v5702, %v5709
      %v5725 = vmul.f32 %v5703, %v5709
      %v5726 = vmul.f32 %v5704, %v5709
      %v5728 = vlaneseq
      %v5729 = vshrl.u32 %v5728, 7
      %v5730 = vsub.s32 0, %v5729
      %v5731 = vrot.slane %v5528, %v5730
      %v5733 = vadd.f32 %v5711, %v5731
      %v5734 = vadd.f32 %v5712, %v5731
      %v5735 = vadd.f32 %v5713, %v5731
      %v5736 = vadd.f32 %v5714, %v5731
      %v5737 = vadd.f32 %v5715, %v5731
      %v5738 = vadd.f32 %v5716, %v5731
      %v5739 = vadd.f32 %v5717, %v5731
      %v5740 = vadd.f32 %v5718, %v5731
      %v5741 = vadd.f32 %v5719, %v5731
      %v5742 = vadd.f32 %v5720, %v5731
      %v5743 = vadd.f32 %v5721, %v5731
      %v5744 = vadd.f32 %v5722, %v5731
      %v5745 = vadd.f32 %v5723, %v5731
      %v5746 = vadd.f32 %v5724, %v5731
      %v5747 = vadd.f32 %v5725, %v5731
      %v5748 = vadd.f32 %v5726, %v5731
      %5749 = vst [vmem:[#allocation2] sm:$0xff] %v5733
      %5750 = vst [vmem:[#allocation2 + $0x8] sm:$0xff] %v5734
      %5751 = vst [vmem:[#allocation2 + $0x10] sm:$0xff] %v5735
      %5752 = vst [vmem:[#allocation2 + $0x18] sm:$0xff] %v5736
      %5753 = vst [vmem:[#allocation2 + $0x20] sm:$0xff] %v5737
      %5754 = vst [vmem:[#allocation2 + $0x28] sm:$0xff] %v5738
      %5755 = vst [vmem:[#allocation2 + $0x30] sm:$0xff] %v5739
      %5756 = vst [vmem:[#allocation2 + $0x38] sm:$0xff] %v5740
      %5757 = vst [vmem:[#allocation2 + $0x40] sm:$0xff] %v5741
      %5758 = vst [vmem:[#allocation2 + $0x48] sm:$0xff] %v5742
      %5759 = vst [vmem:[#allocation2 + $0x50] sm:$0xff] %v5743
      %5760 = vst [vmem:[#allocation2 + $0x58] sm:$0xff] %v5744
      %5761 = vst [vmem:[#allocation2 + $0x60] sm:$0xff] %v5745
      %5762 = vst [vmem:[#allocation2 + $0x68] sm:$0xff] %v5746
      %5763 = vst [vmem:[#allocation2 + $0x70] sm:$0xff] %v5747
      %5764 = vst [vmem:[#allocation2 + $0x78] sm:$0xff] %v5748
      %p5765 = scmp.eq.s32.totalorder %s38, 1
      // Predicated region
      $region105: #{bert_classifier_forward.1} parent=99 // pred_check
        %p5766 = pneg %p5765
      $region106: #{bert_classifier_forward.1} parent=99 // pred_check_branch
        %5768 = sbr.rel (%p5766) target = $region108
      $region107: #{bert_classifier_forward.1} parent=99 // pred_region
        %v5769 = vpack.c.bf16 %v5733, %v5733
        %v5770 = vld [vmem:[%s16] sm:$0xf]
        %v5771 = vld [vmem:[%s16 + $0x4] sm:$0xf]
        %v5772 = vld [vmem:[%s16 + $0x8] sm:$0xf]
        %v5773 = vld [vmem:[%s16 + $0xc] sm:$0xf]
        %v5774 = vld [vmem:[%s16 + $0x10] sm:$0xf]
        %v5775 = vld [vmem:[%s16 + $0x14] sm:$0xf]
        %v5776 = vld [vmem:[%s16 + $0x18] sm:$0xf]
        %v5777 = vld [vmem:[%s16 + $0x1c] sm:$0xf]
        %v5778 = vld [vmem:[%s16 + $0x20] sm:$0xf]
        %v5779 = vld [vmem:[%s16 + $0x24] sm:$0xf]
        %v5780 = vld [vmem:[%s16 + $0x28] sm:$0xf]
        %v5781 = vld [vmem:[%s16 + $0x2c] sm:$0xf]
        %v5782 = vld [vmem:[%s16 + $0x30] sm:$0xf]
        %v5783 = vld [vmem:[%s16 + $0x34] sm:$0xf]
        %v5784 = vld [vmem:[%s16 + $0x38] sm:$0xf]
        %v5785 = vld [vmem:[%s16 + $0x3c] sm:$0xf]
        %v5786 = vld [vmem:[%s17] sm:$0x1]
        %v5803 = vunpack.c.l.b16 %v5770
        %v5804 = vunpack.c.l.b16 %v5771
        %v5805 = vunpack.c.l.b16 %v5772
        %v5806 = vunpack.c.l.b16 %v5773
        %v5807 = vunpack.c.l.b16 %v5774
        %v5808 = vunpack.c.l.b16 %v5775
        %v5809 = vunpack.c.l.b16 %v5776
        %v5810 = vunpack.c.l.b16 %v5777
        %v5811 = vunpack.c.l.b16 %v5778
        %v5812 = vunpack.c.l.b16 %v5779
        %v5813 = vunpack.c.l.b16 %v5780
        %v5814 = vunpack.c.l.b16 %v5781
        %v5815 = vunpack.c.l.b16 %v5782
        %v5816 = vunpack.c.l.b16 %v5783
        %v5817 = vunpack.c.l.b16 %v5784
        %v5818 = vunpack.c.l.b16 %v5785
        %v5819 = vpack.c.b16 %v5804, %v5803
        %v5820 = vpack.c.b16 %v5806, %v5805
        %v5821 = vpack.c.b16 %v5808, %v5807
        %v5822 = vpack.c.b16 %v5810, %v5809
        %v5823 = vpack.c.b16 %v5812, %v5811
        %v5824 = vpack.c.b16 %v5814, %v5813
        %v5825 = vpack.c.b16 %v5816, %v5815
        %v5826 = vpack.c.b16 %v5818, %v5817
        %5835 = vmatprep.subr.bf16.mxu0 0
        %5836 = vmatpush1.bf16.msra.mxu0 %v5819
        %5837 = vmatprep.subr.bf16.mxu0 0
        %5838 = vmatpush1.bf16.msra.mxu0 %v5820
        %5839 = vmatprep.subr.bf16.mxu0 0
        %5840 = vmatpush1.bf16.msra.mxu0 %v5821
        %5841 = vmatprep.subr.bf16.mxu0 0
        %5842 = vmatpush1.bf16.msra.mxu0 %v5822
        %5843 = vmatprep.subr.bf16.mxu0 0
        %5844 = vmatpush1.bf16.msra.mxu0 %v5823
        %5845 = vmatprep.subr.bf16.mxu0 0
        %5846 = vmatpush1.bf16.msra.mxu0 %v5824
        %5847 = vmatprep.subr.bf16.mxu0 0
        %5848 = vmatpush1.bf16.msra.mxu0 %v5825
        %5849 = vmatprep.subr.bf16.mxu0 0
        %5850 = vmatpush1.bf16.msra.mxu0 %v5826
        %5851 = vmatprep.subr.bf16.mxu0 0
        %5852 = vmatpush1.bf16.msra.mxu0 0
        %5853 = vmatprep.subr.bf16.mxu0 0
        %5854 = vmatpush1.bf16.msra.mxu0 0
        %5855 = vmatprep.subr.bf16.mxu0 0
        %5856 = vmatpush1.bf16.msra.mxu0 0
        %5857 = vmatprep.subr.bf16.mxu0 0
        %5858 = vmatpush1.bf16.msra.mxu0 0
        %5859 = vmatprep.subr.bf16.mxu0 0
        %5860 = vmatpush1.bf16.msra.mxu0 0
        %5861 = vmatprep.subr.bf16.mxu0 0
        %5862 = vmatpush1.bf16.msra.mxu0 0
        %5863 = vmatprep.subr.bf16.mxu0 0
        %5864 = vmatpush1.bf16.msra.mxu0 0
        %5865 = vmatprep.subr.bf16.mxu0 0
        %5866 = vmatpush1.bf16.msra.mxu0 0
        %5867 = vmatprep.mubr.bf16.mxu0 0
        %5868 = vmatmul.mubr.bf16.gmra.mrb[0].mxu0 %v5769
        %v5869 = vpop.f32.mrb[0].mxu0
        %v5870 = vadd.f32 %v5786, %v5869
        %v5871 = vpop.f32.mrb[0].mxu0
        %v5872 = vpop.f32.mrb[0].mxu0
        %v5873 = vpop.f32.mrb[0].mxu0
        %5874 = vdwg.mxu0
        %v5875 = vtanh.pop %v5870
        %v5876 = vld [vmem:[%s18] sm:$0x1]
        %v5877 = vmul.f32 %v5875, %v5876
        %vm5878 = vcmask 1040384
        %v5879 = vsel %vm5878, %v5877, 0.0
        %5880 = vadd.xlane.f32.xlu0 %v5879
        %v5881 = vpop.xlane.xlu0 %5880
        %v5882 = vld [vmem:[#allocation3] sm:$0x1]
        %v5883 = vadd.f32 %v5881, %v5882
        %v5884 = vxor.u32 %v5883, 2147483648
        %v5885 = vmul.f32 %v5884, 1.442695
        %v5886 = vpow.pop %v5885
        %v5887 = vadd.f32 %v5886, 1.0
        %v5888 = vrcp.pop %v5887
        %v5889 = vmul.f32 1.0, %v5888
        %vm5890 = vcmask 0
        %5891 = vst.msk [vmem:[%s851] sm:$0x1] %vm5890, %v5889
      $region108: #{bert_classifier_forward.1} parent=99 // pred_fallthru
        _
      %p5892 = scmp.lt.s32.totalorder %s37, 1
      %s5893 = scalar_select %p5892, %s37, 1
      %s5894 = scalar_lea.vmem %s20, %s5893
      // Predicated region
      $region109: #{bert_classifier_forward.1} parent=99 // pred_check
        %p5895 = pneg %p553
      $region110: #{bert_classifier_forward.1} parent=99 // pred_check_branch
        %5897 = sbr.rel (%p5895) target = $region112
      $region111: #{bert_classifier_forward.1} parent=99 // pred_region
        _
      $region112: #{bert_classifier_forward.1} parent=99 // pred_fallthru
        _
    $region100: #{bert_classifier_forward.1} parent=5 // pred_fallthru
      _
    %p5898 = scmp.le.s32.totalorder 2, %s28
    // Predicated region
    $region113: #{bert_classifier_forward.1} parent=5 // pred_check
      %p5899 = pneg %p5898
    $region114: #{bert_classifier_forward.1} parent=5 // pred_check_branch
      %5901 = sbr.rel (%p5899) target = $region116
    $region115: #{bert_classifier_forward.1} parent=5 // pred_region
      %s5902 = ssub.s32 %s28, 2
      // Predicated region
      $region117: #{bert_classifier_forward.1} parent=115 // pred_check
        %p5903 = pneg %p559
      $region118: #{bert_classifier_forward.1} parent=115 // pred_check_branch
        %5905 = sbr.rel (%p5903) target = $region120
      $region119: #{bert_classifier_forward.1} parent=115 // pred_region
        %p5906 = scmp.lt.s32.totalorder %s39, 1
        %s5907 = scalar_select %p5906, %s39, 1
        %s5908 = scalar_lea.vmem %s20, %s5907
      $region120: #{bert_classifier_forward.1} parent=115 // pred_fallthru
        _
    $region116: #{bert_classifier_forward.1} parent=5 // pred_fallthru
      _
  $region6: #{bert_classifier_forward.1} parent=0 // loop_footer
    %s32 = sadd.s32 1, %s28
  $region7: #{bert_classifier_forward.1} parent=0 // loop_footer_branch
    %27 = sbr.rel target = $region3
  $region8: #{bert_classifier_forward.1} parent=0 // loop_exit
    _

</llo_original>
